<compile_context>
chip_gen: v6e
topology: v6e:2x2x1
jax: 0.10.0
libtpu: 0.0.40
codegen_flags: <defaults>
</compile_context>

<pallas_src>
import math
from functools import partial

import jax
import jax.numpy as jnp
from jax import lax
from jax.experimental import pallas as pl
from jax.experimental.pallas import tpu as pltpu


# ----------------------------------------------------------------------------------------
# shared body: multi-head attention (out-proj fused into the head loop) + add&norm + FFN
# ----------------------------------------------------------------------------------------
def _attention_ffn_body(x_f32, qp, kp, vp,
                        wo_ref, bo_ref, ln1w_ref, ln1b_ref,
                        w1_ref, b1_ref, w2_ref, b2_ref,
                        ln2w_ref, ln2b_ref, out_ref,
                        *, num_heads, head_dim, block_n, q_len, kv_len):
    H, Dh, Nb, L, S = num_heads, head_dim, block_n, q_len, kv_len
    E = H * Dh

    qp3 = qp.reshape(Nb, L, E).astype(jnp.bfloat16)
    kp3 = kp.reshape(Nb, S, E).astype(jnp.bfloat16)
    vp3 = vp.reshape(Nb, S, E).astype(jnp.bfloat16)
    wo = wo_ref[...]                                    # (E, E) bf16, loaded once

    # Multi-head attention with the output projection fused into the (static) head loop:
    # the only long-lived value is the lane-dense (Nb*L, E) f32 accumulator.
    # TODO(synk): for long kv_len, tile S with an online-softmax (flash-style) loop instead
    # of materializing the (Nb, L, S) score block.
    attn_acc = jnp.zeros((Nb * L, E), jnp.float32)
    for h in range(H):
        lo = h * Dh
        qh = qp3[:, :, lo:lo + Dh]                      # (Nb, L, Dh)
        kh = kp3[:, :, lo:lo + Dh]                      # (Nb, S, Dh)
        vh = vp3[:, :, lo:lo + Dh]                      # (Nb, S, Dh)
        s = jnp.einsum('bqd,bkd->bqk', qh, kh,
                       preferred_element_type=jnp.float32)          # (Nb, L, S) f32
        s = s - jnp.max(s, axis=-1, keepdims=True)
        p = jnp.exp(s)
        # approx reciprocal uses the EUP slot; rows sum to ~1 (fine for inference —
        # use approx=False for bit-level parity against PyTorch).
        p = p * pl.reciprocal(jnp.sum(p, axis=-1, keepdims=True), approx=True)
        oh = jnp.einsum('bqk,bkd->bqd', p.astype(jnp.bfloat16), vh,
                        preferred_element_type=jnp.float32)          # (Nb, L, Dh) f32
        # fused out-projection: contraction Dh, output width E (lane-dense), accumulate f32
        attn_acc = attn_acc + jnp.dot(
            oh.reshape(Nb * L, Dh).astype(jnp.bfloat16),
            wo[lo:lo + Dh, :],
            preferred_element_type=jnp.float32)
    attn_out = attn_acc + bo_ref[...]

    # residual + LayerNorm 1 (f32)
    y = x_f32 + attn_out
    mu = jnp.mean(y, axis=-1, keepdims=True)
    var = jnp.mean((y - mu) ** 2, axis=-1, keepdims=True)
    yn = (y - mu) * lax.rsqrt(var + 1e-5) * ln1w_ref[...] + ln1b_ref[...]

    # feed-forward: Linear(E, 4E) -> LeakyReLU(0.01) -> Linear(4E, E)
    # TODO(synk): for large E on v7x (64 MiB VMEM), tile W1/W2 over the 4E hidden dim with
    # an extra "arbitrary" grid axis instead of keeping them fully resident.
    h1 = jnp.dot(yn.astype(jnp.bfloat16), w1_ref[...],
                 preferred_element_type=jnp.float32) + b1_ref[...]
    h1 = jnp.where(h1 >= 0, h1, 0.01 * h1)
    h2 = jnp.dot(h1.astype(jnp.bfloat16), w2_ref[...],
                 preferred_element_type=jnp.float32) + b2_ref[...]

    # residual + LayerNorm 2 (f32)
    z = yn + h2
    mu2 = jnp.mean(z, axis=-1, keepdims=True)
    var2 = jnp.mean((z - mu2) ** 2, axis=-1, keepdims=True)
    out_ref[...] = ((z - mu2) * lax.rsqrt(var2 + 1e-5) * ln2w_ref[...]
                    + ln2b_ref[...]).astype(out_ref.dtype)


# ----------------------------------------------------------------------------------------
# kernels: self-attention (fused QKV projection) and general cross-attention
# ----------------------------------------------------------------------------------------
def encoder_kernel_self(x_ref, wqkv_ref, bqkv_ref, wo_ref, bo_ref,
                        ln1w_ref, ln1b_ref, w1_ref, b1_ref, w2_ref, b2_ref,
                        ln2w_ref, ln2b_ref, out_ref,
                        *, num_heads, head_dim, block_n, seq_len):
    E = num_heads * head_dim
    x_f32 = x_ref[...].astype(jnp.float32)              # exact f32 residual copy
    # fused Q/K/V projection: one lane-dense (rows, 3E) MXU call; 1/sqrt(Dh) already folded
    # into the q columns of wqkv / bqkv in the wrapper.
    qkv = jnp.dot(x_f32.astype(jnp.bfloat16), wqkv_ref[...],
                  preferred_element_type=jnp.float32) + bqkv_ref[...]
    qp = qkv[:, 0 * E:1 * E]
    kp = qkv[:, 1 * E:2 * E]
    vp = qkv[:, 2 * E:3 * E]
    _attention_ffn_body(x_f32, qp, kp, vp, wo_ref, bo_ref, ln1w_ref, ln1b_ref,
                        w1_ref, b1_ref, w2_ref, b2_ref, ln2w_ref, ln2b_ref, out_ref,
                        num_heads=num_heads, head_dim=head_dim, block_n=block_n,
                        q_len=seq_len, kv_len=seq_len)


def encoder_kernel_cross(q_ref, k_ref, v_ref,
                         wq_ref, wk_ref, wv_ref, bq_ref, bk_ref, bv_ref,
                         wo_ref, bo_ref, ln1w_ref, ln1b_ref,
                         w1_ref, b1_ref, w2_ref, b2_ref,
                         ln2w_ref, ln2b_ref, out_ref,
                         *, num_heads, head_dim, block_n, q_len, kv_len):
    x_f32 = q_ref[...].astype(jnp.float32)              # exact f32 residual copy
    qp = jnp.dot(x_f32.astype(jnp.bfloat16), wq_ref[...],
                 preferred_element_type=jnp.float32) + bq_ref[...]
    kp = jnp.dot(k_ref[...].astype(jnp.bfloat16), wk_ref[...],
                 preferred_element_type=jnp.float32) + bk_ref[...]
    vp = jnp.dot(v_ref[...].astype(jnp.bfloat16), wv_ref[...],
                 preferred_element_type=jnp.float32) + bv_ref[...]
    _attention_ffn_body(x_f32, qp, kp, vp, wo_ref, bo_ref, ln1w_ref, ln1b_ref,
                        w1_ref, b1_ref, w2_ref, b2_ref, ln2w_ref, ln2b_ref, out_ref,
                        num_heads=num_heads, head_dim=head_dim, block_n=block_n,
                        q_len=q_len, kv_len=kv_len)


# ----------------------------------------------------------------------------------------
# wrapper
# ----------------------------------------------------------------------------------------
def transformer_encoder(query, key, value, params, *, num_heads, block_n=8, key_mask=None):
    """query: (L, N, E), key/value: (S, N, E)  ->  (L, N, E)  (PyTorch MHA layout)."""
    # TODO(synk): key_padding_mask path not implemented (forward assumes key_mask=None).
    assert key_mask is None, "key_padding_mask not implemented"
    L, N, E = query.shape
    S = key.shape[0]
    H = num_heads
    Dh = E // H
    scale = 1.0 / math.sqrt(Dh)
    self_attn = (query is key) and (key is value)

    # --- batch-block size: >= 2 grid steps whenever N >= 2, 8-row-aligned blocks ---------
    nb = max(1, min(block_n, N))
    if N >= 2:
        nb = min(nb, max(1, N // 2))    # >= 2 grid steps -> feeds both v7x TensorCores
                                        # and lets the pipeline overlap DMA with compute
    def _aligned(n):
        return (n * L) % 8 == 0 and (n * S) % 8 == 0
    while nb < N and not _aligned(nb):
        nb += 1
    if not _aligned(nb):
        nb = N                           # single full block: exempt from the (8,128) rule
    n_pad = (-N) % nb
    Np = N + n_pad
    grid = (Np // nb,)

    # --- batch-major, flattened (Np*seq, E) activation slabs ------------------------------
    qb = jnp.transpose(query, (1, 0, 2))                 # (N, L, E)
    if n_pad:
        qb = jnp.pad(qb, ((0, n_pad), (0, 0), (0, 0)))
    q2 = qb.reshape(Np * L, E)
    if not self_attn:
        kb = jnp.transpose(key, (1, 0, 2))
        vb = jnp.transpose(value, (1, 0, 2))
        if n_pad:
            kb = jnp.pad(kb, ((0, n_pad), (0, 0), (0, 0)))
            vb = jnp.pad(vb, ((0, n_pad), (0, 0), (0, 0)))
        k2 = kb.reshape(Np * S, E)
        v2 = vb.reshape(Np * S, E)

    # --- weights: pre-transposed (y = x @ W.T + b), bf16 for the MXU; fold 1/sqrt(Dh) -----
    bf = jnp.bfloat16
    wq_t = (params["wq"].T * scale).astype(bf)
    wk_t = params["wk"].T.astype(bf)
    wv_t = params["wv"].T.astype(bf)
    bq_scaled = jnp.asarray(params["bq"], jnp.float32) * scale
    wo_t = params["wo"].T.astype(bf)
    w1_t = params["w1"].T.astype(bf)
    w2_t = params["w2"].T.astype(bf)
    if self_attn:
        wqkv = jnp.concatenate([wq_t, wk_t, wv_t], axis=1)                     # (E, 3E)
        bqkv = jnp.concatenate([bq_scaled,
                                jnp.asarray(params["bk"], jnp.float32),
                                jnp.asarray(params["bv"], jnp.float32)]).reshape(1, -1)

    def row(v):
        return jnp.asarray(v, jnp.float32).reshape(1, -1)

    itemsize = query.dtype.itemsize

    def _vmem_limit(single_buffer_weights):
        # weights (bf16) + bias/LN rows (f32)
        wb = 2 * (3 * E * E + E * E + 4 * E * E + 4 * E * E) + 4 * 16 * E
        wmult = 1 if single_buffer_weights else 2
        act_rows = nb * L if self_attn else nb * (L + 2 * S)
        act = 2 * act_rows * E * itemsize                 # double-buffered inputs
        outb = 2 * nb * L * E * itemsize                  # double-buffered output
        inter = 4 * (nb * L * (11 * E) + nb * L * S) + 2 * nb * (L + 2 * S) * E
        est = wmult * wb + act + outb + inter
        # 2x margin; clamp into [16 MiB, 64 MiB] (v7x physical VMEM is 64 MiB per core)
        return int(min(max(2 * est + (4 << 20), 16 << 20), 64 << 20))

    def _run(single_buffer_weights):
        def wspec(shape):
            # weights/biases have a constant index_map across the grid -> single buffer
            if single_buffer_weights:
                return pl.BlockSpec(shape, lambda b: (0,) * len(shape),
                                    pipeline_mode=pl.Buffered(1))
            return pl.BlockSpec(shape, lambda b: (0,) * len(shape))

        cparams = pltpu.CompilerParams(
            dimension_semantics=("parallel",),
            vmem_limit_bytes=_vmem_limit(single_buffer_weights))

        if self_attn:
            grid_spec = pltpu.PrefetchScalarGridSpec(
                num_scalar_prefetch=0, grid=grid,
                in_specs=[
                    pl.BlockSpec((nb * L, E), lambda b: (b, 0)),
                    wspec((E, 3 * E)), wspec((1, 3 * E)),
                    wspec((E, E)), wspec((1, E)),
                    wspec((1, E)), wspec((1, E)),
                    wspec((E, 4 * E)), wspec((1, 4 * E)),
                    wspec((4 * E, E)), wspec((1, E)),
                    wspec((1, E)), wspec((1, E)),
                ],
                out_specs=pl.BlockSpec((nb * L, E), lambda b: (b, 0)))
            return pl.pallas_call(
                partial(encoder_kernel_self, num_heads=H, head_dim=Dh,
                        block_n=nb, seq_len=L),
                out_shape=jax.ShapeDtypeStruct((Np * L, E), query.dtype),
                grid_spec=grid_spec,
                compiler_params=cparams,
            )(q2, wqkv, bqkv, wo_t, row(params["bo"]),
              row(params["ln1_w"]), row(params["ln1_b"]),
              w1_t, row(params["b1"]), w2_t, row(params["b2"]),
              row(params["ln2_w"]), row(params["ln2_b"]))
        else:
            grid_spec = pltpu.PrefetchScalarGridSpec(
                num_scalar_prefetch=0, grid=grid,
                in_specs=[
                    pl.BlockSpec((nb * L, E), lambda b: (b, 0)),
                    pl.BlockSpec((nb * S, E), lambda b: (b, 0)),
                    pl.BlockSpec((nb * S, E), lambda b: (b, 0)),
                    wspec((E, E)), wspec((E, E)), wspec((E, E)),
                    wspec((1, E)), wspec((1, E)), wspec((1, E)),
                    wspec((E, E)), wspec((1, E)),
                    wspec((1, E)), wspec((1, E)),
                    wspec((E, 4 * E)), wspec((1, 4 * E)),
                    wspec((4 * E, E)), wspec((1, E)),
                    wspec((1, E)), wspec((1, E)),
                ],
                out_specs=pl.BlockSpec((nb * L, E), lambda b: (b, 0)))
            return pl.pallas_call(
                partial(encoder_kernel_cross, num_heads=H, head_dim=Dh,
                        block_n=nb, q_len=L, kv_len=S),
                out_shape=jax.ShapeDtypeStruct((Np * L, E), query.dtype),
                grid_spec=grid_spec,
                compiler_params=cparams,
            )(q2, k2, v2, wq_t, wk_t, wv_t,
              row(bq_scaled), row(params["bk"]), row(params["bv"]),
              wo_t, row(params["bo"]),
              row(params["ln1_w"]), row(params["ln1_b"]),
              w1_t, row(params["b1"]), w2_t, row(params["b2"]),
              row(params["ln2_w"]), row(params["ln2_b"]))

    try:
        out = _run(True)
    except Exception:
        # TODO(synk): pl.Buffered(1) single-buffering not supported by this JAX build;
        # fall back to default double-buffered weight blocks.
        out = _run(False)

    out = out.reshape(Np, L, E)[:N]                      # drop batch padding
    return jnp.transpose(out, (1, 0, 2))                 # back to (L, N, E)


if __name__ == "__main__":
    embed_dim, num_heads = 32, 4
    L, S, N = 8, 8, 2

    root = jax.random.PRNGKey(0)
    ks = jax.random.split(root, 16)

    def w(k, shape):
        return 0.02 * jax.random.normal(k, shape, jnp.float32)

    params = {
        # nn.MultiheadAttention: in_proj (3E,E) split into q/k/v, out_proj (E,E)
        "wq": w(ks[0], (embed_dim, embed_dim)), "bq": w(ks[1], (embed_dim,)),
        "wk": w(ks[2], (embed_dim, embed_dim)), "bk": w(ks[3], (embed_dim,)),
        "wv": w(ks[4], (embed_dim, embed_dim)), "bv": w(ks[5], (embed_dim,)),
        "wo": w(ks[6], (embed_dim, embed_dim)), "bo": w(ks[7], (embed_dim,)),
        # LayerNorm 1 (PyTorch init: ones / zeros)
        "ln1_w": jnp.ones((embed_dim,), jnp.float32),
        "ln1_b": jnp.zeros((embed_dim,), jnp.float32),
        # feed_forward: Linear(E,4E), Linear(4E,E)
        "w1": w(ks[8], (4 * embed_dim, embed_dim)), "b1": w(ks[9], (4 * embed_dim,)),
        "w2": w(ks[10], (embed_dim, 4 * embed_dim)), "b2": w(ks[11], (embed_dim,)),
        # LayerNorm 2
        "ln2_w": jnp.ones((embed_dim,), jnp.float32),
        "ln2_b": jnp.zeros((embed_dim,), jnp.float32),
    }

    x = jax.random.normal(ks[12], (L, N, embed_dim), jnp.float32)
    key_t = jax.random.normal(ks[13], (S, N, embed_dim), jnp.float32)
    value_t = jax.random.normal(ks[14], (S, N, embed_dim), jnp.float32)

    # self-attention path (fused QKV projection) -- typical TransformerEncoder usage
    out_self = transformer_encoder(x, x, x, params, num_heads=num_heads)
    out_self = jax.block_until_ready(out_self)
    assert out_self.shape == (L, N, embed_dim)

    # cross-attention path (distinct query / key / value), matches module signature
    out_cross = transformer_encoder(x, key_t, value_t, params, num_heads=num_heads)
    out_cross = jax.block_until_ready(out_cross)
    assert out_cross.shape == (L, N, embed_dim)

    print("KERNEL_OK")
</pallas_src>

<mosaic_0001>
module attributes {stable_mosaic.version = 11 : i64} {
  func.func @encoder_kernel_self(%arg0: i32, %arg1: memref<8x32xf32, #tpu.memory_space<vmem>>, %arg2: memref<32x96xbf16, #tpu.memory_space<vmem>>, %arg3: memref<1x96xf32, #tpu.memory_space<vmem>>, %arg4: memref<32x32xbf16, #tpu.memory_space<vmem>>, %arg5: memref<1x32xf32, #tpu.memory_space<vmem>>, %arg6: memref<1x32xf32, #tpu.memory_space<vmem>>, %arg7: memref<1x32xf32, #tpu.memory_space<vmem>>, %arg8: memref<32x128xbf16, #tpu.memory_space<vmem>>, %arg9: memref<1x128xf32, #tpu.memory_space<vmem>>, %arg10: memref<128x32xbf16, #tpu.memory_space<vmem>>, %arg11: memref<1x32xf32, #tpu.memory_space<vmem>>, %arg12: memref<1x32xf32, #tpu.memory_space<vmem>>, %arg13: memref<1x32xf32, #tpu.memory_space<vmem>>, %arg14: memref<8x32xf32, #tpu.memory_space<vmem>>) attributes {dimension_semantics = [#tpu.dimension_semantics<parallel>], iteration_bounds = array<i64: 2>, scalar_prefetch = 0 : i64, scratch_operands = 0 : i64, tpu.core_type = #tpu.core_type<tc>, window_params = [{transform_indices = @transform_0, window_bounds = array<i64: 8, 32>}, {pipeline_mode = #tpu.pipeline_mode<synchronous>, transform_indices = @transform_1, window_bounds = array<i64: 32, 96>}, {pipeline_mode = #tpu.pipeline_mode<synchronous>, transform_indices = @transform_2, window_bounds = array<i64: 1, 96>}, {pipeline_mode = #tpu.pipeline_mode<synchronous>, transform_indices = @transform_3, window_bounds = array<i64: 32, 32>}, {pipeline_mode = #tpu.pipeline_mode<synchronous>, transform_indices = @transform_4, window_bounds = array<i64: 1, 32>}, {pipeline_mode = #tpu.pipeline_mode<synchronous>, transform_indices = @transform_5, window_bounds = array<i64: 1, 32>}, {pipeline_mode = #tpu.pipeline_mode<synchronous>, transform_indices = @transform_6, window_bounds = array<i64: 1, 32>}, {pipeline_mode = #tpu.pipeline_mode<synchronous>, transform_indices = @transform_7, window_bounds = array<i64: 32, 128>}, {pipeline_mode = #tpu.pipeline_mode<synchronous>, transform_indices = @transform_8, window_bounds = array<i64: 1, 128>}, {pipeline_mode = #tpu.pipeline_mode<synchronous>, transform_indices = @transform_9, window_bounds = array<i64: 128, 32>}, {pipeline_mode = #tpu.pipeline_mode<synchronous>, transform_indices = @transform_10, window_bounds = array<i64: 1, 32>}, {pipeline_mode = #tpu.pipeline_mode<synchronous>, transform_indices = @transform_11, window_bounds = array<i64: 1, 32>}, {pipeline_mode = #tpu.pipeline_mode<synchronous>, transform_indices = @transform_12, window_bounds = array<i64: 1, 32>}, {transform_indices = @transform_13, window_bounds = array<i64: 8, 32>}]} {
    %c0 = arith.constant 0 : index
    %c0_0 = arith.constant 0 : index
    %0 = vector.load %arg1[%c0, %c0_0] : memref<8x32xf32, #tpu.memory_space<vmem>>, vector<8x32xf32>
    %1 = arith.truncf %0 : vector<8x32xf32> to vector<8x32xbf16>
    %c0_1 = arith.constant 0 : index
    %c0_2 = arith.constant 0 : index
    %2 = vector.load %arg2[%c0_1, %c0_2] : memref<32x96xbf16, #tpu.memory_space<vmem>>, vector<32x96xbf16>
    %cst = arith.constant dense<0.000000e+00> : vector<8x96xf32>
    %3 = tpu.matmul %1, %2, %cst {dimension_numbers = #tpu.dot_dimension_numbers<[1], [0], [0], [1], [0, 0, 1, 1], [], []>} : vector<8x32xbf16>, vector<32x96xbf16>, vector<8x96xf32> -> vector<8x96xf32>
    %c0_3 = arith.constant 0 : index
    %c0_4 = arith.constant 0 : index
    %4 = vector.load %arg3[%c0_3, %c0_4] : memref<1x96xf32, #tpu.memory_space<vmem>>, vector<1x96xf32>
    %5 = vector.broadcast %4 : vector<1x96xf32> to vector<8x96xf32>
    %6 = arith.addf %3, %5 : vector<8x96xf32>
    %7 = vector.extract_strided_slice %6 {offsets = [0, 0], sizes = [8, 32], strides = [1, 1]} : vector<8x96xf32> to vector<8x32xf32>
    %8 = vector.extract_strided_slice %6 {offsets = [0, 32], sizes = [8, 32], strides = [1, 1]} : vector<8x96xf32> to vector<8x32xf32>
    %9 = vector.extract_strided_slice %6 {offsets = [0, 64], sizes = [8, 32], strides = [1, 1]} : vector<8x96xf32> to vector<8x32xf32>
    %10 = vector.shape_cast %7 : vector<8x32xf32> to vector<1x8x32xf32>
    %11 = arith.truncf %10 : vector<1x8x32xf32> to vector<1x8x32xbf16>
    %12 = vector.shape_cast %8 : vector<8x32xf32> to vector<1x8x32xf32>
    %13 = arith.truncf %12 : vector<1x8x32xf32> to vector<1x8x32xbf16>
    %14 = vector.shape_cast %9 : vector<8x32xf32> to vector<1x8x32xf32>
    %15 = arith.truncf %14 : vector<1x8x32xf32> to vector<1x8x32xbf16>
    %c0_5 = arith.constant 0 : index
    %c0_6 = arith.constant 0 : index
    %16 = vector.load %arg4[%c0_5, %c0_6] : memref<32x32xbf16, #tpu.memory_space<vmem>>, vector<32x32xbf16>
    %cst_7 = arith.constant 0.000000e+00 : f32
    %17 = vector.broadcast %cst_7 : f32 to vector<8x32xf32>
    %18 = vector.extract_strided_slice %11 {offsets = [0, 0, 0], sizes = [1, 8, 8], strides = [1, 1, 1]} : vector<1x8x32xbf16> to vector<1x8x8xbf16>
    %19 = vector.extract_strided_slice %13 {offsets = [0, 0, 0], sizes = [1, 8, 8], strides = [1, 1, 1]} : vector<1x8x32xbf16> to vector<1x8x8xbf16>
    %20 = vector.extract_strided_slice %15 {offsets = [0, 0, 0], sizes = [1, 8, 8], strides = [1, 1, 1]} : vector<1x8x32xbf16> to vector<1x8x8xbf16>
    "tpu.trace_start"() <{level = 10 : i32, message = "bqd,bkd->bqk"}> : () -> ()
    %cst_8 = arith.constant dense<0.000000e+00> : vector<1x8x8xf32>
    %21 = tpu.matmul %18, %19, %cst_8 {dimension_numbers = #tpu.dot_dimension_numbers<[2], [2], [1], [1], [0, 0, 0, 1, 1, 1], [0], [0]>} : vector<1x8x8xbf16>, vector<1x8x8xbf16>, vector<1x8x8xf32> -> vector<1x8x8xf32>
    "tpu.trace_stop"() : () -> ()
    %cst_9 = arith.constant dense<0xFF800000> : vector<1x8xf32>
    %22 = vector.multi_reduction <maximumf>, %21, %cst_9 [2] : vector<1x8x8xf32> to vector<1x8xf32>
    %23 = vector.shape_cast %22 : vector<1x8xf32> to vector<1x8x1xf32>
    %24 = vector.broadcast %23 : vector<1x8x1xf32> to vector<1x8x8xf32>
    %25 = arith.subf %21, %24 : vector<1x8x8xf32>
    %26 = math.exp %25 : vector<1x8x8xf32>
    %cst_10 = arith.constant dense<0.000000e+00> : vector<1x8xf32>
    %27 = vector.multi_reduction <add>, %26, %cst_10 [2] : vector<1x8x8xf32> to vector<1x8xf32>
    %28 = vector.shape_cast %27 : vector<1x8xf32> to vector<1x8x1xf32>
    %29 = tpu.reciprocal %28 {approx = true} : vector<1x8x1xf32> -> vector<1x8x1xf32>
    %30 = vector.broadcast %29 : vector<1x8x1xf32> to vector<1x8x8xf32>
    %31 = arith.mulf %26, %30 : vector<1x8x8xf32>
    %32 = arith.truncf %31 : vector<1x8x8xf32> to vector<1x8x8xbf16>
    "tpu.trace_start"() <{level = 10 : i32, message = "bqk,bkd->bqd"}> : () -> ()
    %cst_11 = arith.constant dense<0.000000e+00> : vector<1x8x8xf32>
    %33 = tpu.matmul %32, %20, %cst_11 {dimension_numbers = #tpu.dot_dimension_numbers<[2], [1], [1], [2], [0, 0, 0, 1, 1, 2], [0], [0]>} : vector<1x8x8xbf16>, vector<1x8x8xbf16>, vector<1x8x8xf32> -> vector<1x8x8xf32>
    "tpu.trace_stop"() : () -> ()
    %34 = vector.shape_cast %33 : vector<1x8x8xf32> to vector<8x8xf32>
    %35 = arith.truncf %34 : vector<8x8xf32> to vector<8x8xbf16>
    %36 = vector.extract_strided_slice %16 {offsets = [0, 0], sizes = [8, 32], strides = [1, 1]} : vector<32x32xbf16> to vector<8x32xbf16>
    %cst_12 = arith.constant dense<0.000000e+00> : vector<8x32xf32>
    %37 = tpu.matmul %35, %36, %cst_12 {dimension_numbers = #tpu.dot_dimension_numbers<[1], [0], [0], [1], [0, 0, 1, 1], [], []>} : vector<8x8xbf16>, vector<8x32xbf16>, vector<8x32xf32> -> vector<8x32xf32>
    %38 = arith.addf %17, %37 : vector<8x32xf32>
    %39 = vector.extract_strided_slice %11 {offsets = [0, 0, 8], sizes = [1, 8, 8], strides = [1, 1, 1]} : vector<1x8x32xbf16> to vector<1x8x8xbf16>
    %40 = vector.extract_strided_slice %13 {offsets = [0, 0, 8], sizes = [1, 8, 8], strides = [1, 1, 1]} : vector<1x8x32xbf16> to vector<1x8x8xbf16>
    %41 = vector.extract_strided_slice %15 {offsets = [0, 0, 8], sizes = [1, 8, 8], strides = [1, 1, 1]} : vector<1x8x32xbf16> to vector<1x8x8xbf16>
    "tpu.trace_start"() <{level = 10 : i32, message = "bqd,bkd->bqk"}> : () -> ()
    %cst_13 = arith.constant dense<0.000000e+00> : vector<1x8x8xf32>
    %42 = tpu.matmul %39, %40, %cst_13 {dimension_numbers = #tpu.dot_dimension_numbers<[2], [2], [1], [1], [0, 0, 0, 1, 1, 1], [0], [0]>} : vector<1x8x8xbf16>, vector<1x8x8xbf16>, vector<1x8x8xf32> -> vector<1x8x8xf32>
    "tpu.trace_stop"() : () -> ()
    %cst_14 = arith.constant dense<0xFF800000> : vector<1x8xf32>
    %43 = vector.multi_reduction <maximumf>, %42, %cst_14 [2] : vector<1x8x8xf32> to vector<1x8xf32>
    %44 = vector.shape_cast %43 : vector<1x8xf32> to vector<1x8x1xf32>
    %45 = vector.broadcast %44 : vector<1x8x1xf32> to vector<1x8x8xf32>
    %46 = arith.subf %42, %45 : vector<1x8x8xf32>
    %47 = math.exp %46 : vector<1x8x8xf32>
    %cst_15 = arith.constant dense<0.000000e+00> : vector<1x8xf32>
    %48 = vector.multi_reduction <add>, %47, %cst_15 [2] : vector<1x8x8xf32> to vector<1x8xf32>
    %49 = vector.shape_cast %48 : vector<1x8xf32> to vector<1x8x1xf32>
    %50 = tpu.reciprocal %49 {approx = true} : vector<1x8x1xf32> -> vector<1x8x1xf32>
    %51 = vector.broadcast %50 : vector<1x8x1xf32> to vector<1x8x8xf32>
    %52 = arith.mulf %47, %51 : vector<1x8x8xf32>
    %53 = arith.truncf %52 : vector<1x8x8xf32> to vector<1x8x8xbf16>
    "tpu.trace_start"() <{level = 10 : i32, message = "bqk,bkd->bqd"}> : () -> ()
    %cst_16 = arith.constant dense<0.000000e+00> : vector<1x8x8xf32>
    %54 = tpu.matmul %53, %41, %cst_16 {dimension_numbers = #tpu.dot_dimension_numbers<[2], [1], [1], [2], [0, 0, 0, 1, 1, 2], [0], [0]>} : vector<1x8x8xbf16>, vector<1x8x8xbf16>, vector<1x8x8xf32> -> vector<1x8x8xf32>
    "tpu.trace_stop"() : () -> ()
    %55 = vector.shape_cast %54 : vector<1x8x8xf32> to vector<8x8xf32>
    %56 = arith.truncf %55 : vector<8x8xf32> to vector<8x8xbf16>
    %57 = vector.extract_strided_slice %16 {offsets = [8, 0], sizes = [8, 32], strides = [1, 1]} : vector<32x32xbf16> to vector<8x32xbf16>
    %cst_17 = arith.constant dense<0.000000e+00> : vector<8x32xf32>
    %58 = tpu.matmul %56, %57, %cst_17 {dimension_numbers = #tpu.dot_dimension_numbers<[1], [0], [0], [1], [0, 0, 1, 1], [], []>} : vector<8x8xbf16>, vector<8x32xbf16>, vector<8x32xf32> -> vector<8x32xf32>
    %59 = arith.addf %38, %58 : vector<8x32xf32>
    %60 = vector.extract_strided_slice %11 {offsets = [0, 0, 16], sizes = [1, 8, 8], strides = [1, 1, 1]} : vector<1x8x32xbf16> to vector<1x8x8xbf16>
    %61 = vector.extract_strided_slice %13 {offsets = [0, 0, 16], sizes = [1, 8, 8], strides = [1, 1, 1]} : vector<1x8x32xbf16> to vector<1x8x8xbf16>
    %62 = vector.extract_strided_slice %15 {offsets = [0, 0, 16], sizes = [1, 8, 8], strides = [1, 1, 1]} : vector<1x8x32xbf16> to vector<1x8x8xbf16>
    "tpu.trace_start"() <{level = 10 : i32, message = "bqd,bkd->bqk"}> : () -> ()
    %cst_18 = arith.constant dense<0.000000e+00> : vector<1x8x8xf32>
    %63 = tpu.matmul %60, %61, %cst_18 {dimension_numbers = #tpu.dot_dimension_numbers<[2], [2], [1], [1], [0, 0, 0, 1, 1, 1], [0], [0]>} : vector<1x8x8xbf16>, vector<1x8x8xbf16>, vector<1x8x8xf32> -> vector<1x8x8xf32>
    "tpu.trace_stop"() : () -> ()
    %cst_19 = arith.constant dense<0xFF800000> : vector<1x8xf32>
    %64 = vector.multi_reduction <maximumf>, %63, %cst_19 [2] : vector<1x8x8xf32> to vector<1x8xf32>
    %65 = vector.shape_cast %64 : vector<1x8xf32> to vector<1x8x1xf32>
    %66 = vector.broadcast %65 : vector<1x8x1xf32> to vector<1x8x8xf32>
    %67 = arith.subf %63, %66 : vector<1x8x8xf32>
    %68 = math.exp %67 : vector<1x8x8xf32>
    %cst_20 = arith.constant dense<0.000000e+00> : vector<1x8xf32>
    %69 = vector.multi_reduction <add>, %68, %cst_20 [2] : vector<1x8x8xf32> to vector<1x8xf32>
    %70 = vector.shape_cast %69 : vector<1x8xf32> to vector<1x8x1xf32>
    %71 = tpu.reciprocal %70 {approx = true} : vector<1x8x1xf32> -> vector<1x8x1xf32>
    %72 = vector.broadcast %71 : vector<1x8x1xf32> to vector<1x8x8xf32>
    %73 = arith.mulf %68, %72 : vector<1x8x8xf32>
    %74 = arith.truncf %73 : vector<1x8x8xf32> to vector<1x8x8xbf16>
    "tpu.trace_start"() <{level = 10 : i32, message = "bqk,bkd->bqd"}> : () -> ()
    %cst_21 = arith.constant dense<0.000000e+00> : vector<1x8x8xf32>
    %75 = tpu.matmul %74, %62, %cst_21 {dimension_numbers = #tpu.dot_dimension_numbers<[2], [1], [1], [2], [0, 0, 0, 1, 1, 2], [0], [0]>} : vector<1x8x8xbf16>, vector<1x8x8xbf16>, vector<1x8x8xf32> -> vector<1x8x8xf32>
    "tpu.trace_stop"() : () -> ()
    %76 = vector.shape_cast %75 : vector<1x8x8xf32> to vector<8x8xf32>
    %77 = arith.truncf %76 : vector<8x8xf32> to vector<8x8xbf16>
    %78 = vector.extract_strided_slice %16 {offsets = [16, 0], sizes = [8, 32], strides = [1, 1]} : vector<32x32xbf16> to vector<8x32xbf16>
    %cst_22 = arith.constant dense<0.000000e+00> : vector<8x32xf32>
    %79 = tpu.matmul %77, %78, %cst_22 {dimension_numbers = #tpu.dot_dimension_numbers<[1], [0], [0], [1], [0, 0, 1, 1], [], []>} : vector<8x8xbf16>, vector<8x32xbf16>, vector<8x32xf32> -> vector<8x32xf32>
    %80 = arith.addf %59, %79 : vector<8x32xf32>
    %81 = vector.extract_strided_slice %11 {offsets = [0, 0, 24], sizes = [1, 8, 8], strides = [1, 1, 1]} : vector<1x8x32xbf16> to vector<1x8x8xbf16>
    %82 = vector.extract_strided_slice %13 {offsets = [0, 0, 24], sizes = [1, 8, 8], strides = [1, 1, 1]} : vector<1x8x32xbf16> to vector<1x8x8xbf16>
    %83 = vector.extract_strided_slice %15 {offsets = [0, 0, 24], sizes = [1, 8, 8], strides = [1, 1, 1]} : vector<1x8x32xbf16> to vector<1x8x8xbf16>
    "tpu.trace_start"() <{level = 10 : i32, message = "bqd,bkd->bqk"}> : () -> ()
    %cst_23 = arith.constant dense<0.000000e+00> : vector<1x8x8xf32>
    %84 = tpu.matmul %81, %82, %cst_23 {dimension_numbers = #tpu.dot_dimension_numbers<[2], [2], [1], [1], [0, 0, 0, 1, 1, 1], [0], [0]>} : vector<1x8x8xbf16>, vector<1x8x8xbf16>, vector<1x8x8xf32> -> vector<1x8x8xf32>
    "tpu.trace_stop"() : () -> ()
    %cst_24 = arith.constant dense<0xFF800000> : vector<1x8xf32>
    %85 = vector.multi_reduction <maximumf>, %84, %cst_24 [2] : vector<1x8x8xf32> to vector<1x8xf32>
    %86 = vector.shape_cast %85 : vector<1x8xf32> to vector<1x8x1xf32>
    %87 = vector.broadcast %86 : vector<1x8x1xf32> to vector<1x8x8xf32>
    %88 = arith.subf %84, %87 : vector<1x8x8xf32>
    %89 = math.exp %88 : vector<1x8x8xf32>
    %cst_25 = arith.constant dense<0.000000e+00> : vector<1x8xf32>
    %90 = vector.multi_reduction <add>, %89, %cst_25 [2] : vector<1x8x8xf32> to vector<1x8xf32>
    %91 = vector.shape_cast %90 : vector<1x8xf32> to vector<1x8x1xf32>
    %92 = tpu.reciprocal %91 {approx = true} : vector<1x8x1xf32> -> vector<1x8x1xf32>
    %93 = vector.broadcast %92 : vector<1x8x1xf32> to vector<1x8x8xf32>
    %94 = arith.mulf %89, %93 : vector<1x8x8xf32>
    %95 = arith.truncf %94 : vector<1x8x8xf32> to vector<1x8x8xbf16>
    "tpu.trace_start"() <{level = 10 : i32, message = "bqk,bkd->bqd"}> : () -> ()
    %cst_26 = arith.constant dense<0.000000e+00> : vector<1x8x8xf32>
    %96 = tpu.matmul %95, %83, %cst_26 {dimension_numbers = #tpu.dot_dimension_numbers<[2], [1], [1], [2], [0, 0, 0, 1, 1, 2], [0], [0]>} : vector<1x8x8xbf16>, vector<1x8x8xbf16>, vector<1x8x8xf32> -> vector<1x8x8xf32>
    "tpu.trace_stop"() : () -> ()
    %97 = vector.shape_cast %96 : vector<1x8x8xf32> to vector<8x8xf32>
    %98 = arith.truncf %97 : vector<8x8xf32> to vector<8x8xbf16>
    %99 = vector.extract_strided_slice %16 {offsets = [24, 0], sizes = [8, 32], strides = [1, 1]} : vector<32x32xbf16> to vector<8x32xbf16>
    %cst_27 = arith.constant dense<0.000000e+00> : vector<8x32xf32>
    %100 = tpu.matmul %98, %99, %cst_27 {dimension_numbers = #tpu.dot_dimension_numbers<[1], [0], [0], [1], [0, 0, 1, 1], [], []>} : vector<8x8xbf16>, vector<8x32xbf16>, vector<8x32xf32> -> vector<8x32xf32>
    %101 = arith.addf %80, %100 : vector<8x32xf32>
    %c0_28 = arith.constant 0 : index
    %c0_29 = arith.constant 0 : index
    %102 = vector.load %arg5[%c0_28, %c0_29] : memref<1x32xf32, #tpu.memory_space<vmem>>, vector<1x32xf32>
    %103 = vector.broadcast %102 : vector<1x32xf32> to vector<8x32xf32>
    %104 = arith.addf %101, %103 : vector<8x32xf32>
    %105 = arith.addf %0, %104 : vector<8x32xf32>
    %cst_30 = arith.constant dense<0.000000e+00> : vector<8xf32>
    %106 = vector.multi_reduction <add>, %105, %cst_30 [1] : vector<8x32xf32> to vector<8xf32>
    %107 = vector.shape_cast %106 : vector<8xf32> to vector<8x1xf32>
    %cst_31 = arith.constant 3.200000e+01 : f32
    %108 = vector.broadcast %cst_31 : f32 to vector<8x1xf32>
    %109 = arith.divf %107, %108 : vector<8x1xf32>
    %110 = vector.broadcast %109 : vector<8x1xf32> to vector<8x32xf32>
    %111 = arith.subf %105, %110 : vector<8x32xf32>
    %112 = arith.mulf %111, %111 : vector<8x32xf32>
    %cst_32 = arith.constant dense<0.000000e+00> : vector<8xf32>
    %113 = vector.multi_reduction <add>, %112, %cst_32 [1] : vector<8x32xf32> to vector<8xf32>
    %114 = vector.shape_cast %113 : vector<8xf32> to vector<8x1xf32>
    %cst_33 = arith.constant 3.200000e+01 : f32
    %115 = vector.broadcast %cst_33 : f32 to vector<8x1xf32>
    %116 = arith.divf %114, %115 : vector<8x1xf32>
    %117 = vector.broadcast %109 : vector<8x1xf32> to vector<8x32xf32>
    %118 = arith.subf %105, %117 : vector<8x32xf32>
    %cst_34 = arith.constant 9.99999974E-6 : f32
    %119 = vector.broadcast %cst_34 : f32 to vector<8x1xf32>
    %120 = arith.addf %116, %119 : vector<8x1xf32>
    %121 = math.rsqrt %120 : vector<8x1xf32>
    %122 = vector.broadcast %121 : vector<8x1xf32> to vector<8x32xf32>
    %123 = arith.mulf %118, %122 : vector<8x32xf32>
    %c0_35 = arith.constant 0 : index
    %c0_36 = arith.constant 0 : index
    %124 = vector.load %arg6[%c0_35, %c0_36] : memref<1x32xf32, #tpu.memory_space<vmem>>, vector<1x32xf32>
    %125 = vector.broadcast %124 : vector<1x32xf32> to vector<8x32xf32>
    %126 = arith.mulf %123, %125 : vector<8x32xf32>
    %c0_37 = arith.constant 0 : index
    %c0_38 = arith.constant 0 : index
    %127 = vector.load %arg7[%c0_37, %c0_38] : memref<1x32xf32, #tpu.memory_space<vmem>>, vector<1x32xf32>
    %128 = vector.broadcast %127 : vector<1x32xf32> to vector<8x32xf32>
    %129 = arith.addf %126, %128 : vector<8x32xf32>
    %130 = arith.truncf %129 : vector<8x32xf32> to vector<8x32xbf16>
    %c0_39 = arith.constant 0 : index
    %c0_40 = arith.constant 0 : index
    %131 = vector.load %arg8[%c0_39, %c0_40] : memref<32x128xbf16, #tpu.memory_space<vmem>>, vector<32x128xbf16>
    %cst_41 = arith.constant dense<0.000000e+00> : vector<8x128xf32>
    %132 = tpu.matmul %130, %131, %cst_41 {dimension_numbers = #tpu.dot_dimension_numbers<[1], [0], [0], [1], [0, 0, 1, 1], [], []>} : vector<8x32xbf16>, vector<32x128xbf16>, vector<8x128xf32> -> vector<8x128xf32>
    %c0_42 = arith.constant 0 : index
    %c0_43 = arith.constant 0 : index
    %133 = vector.load %arg9[%c0_42, %c0_43] : memref<1x128xf32, #tpu.memory_space<vmem>>, vector<1x128xf32>
    %134 = vector.broadcast %133 : vector<1x128xf32> to vector<8x128xf32>
    %135 = arith.addf %132, %134 : vector<8x128xf32>
    %cst_44 = arith.constant 0.000000e+00 : f32
    %136 = vector.broadcast %cst_44 : f32 to vector<8x128xf32>
    %137 = arith.cmpf oge, %135, %136 : vector<8x128xf32>
    %cst_45 = arith.constant 0.00999999977 : f32
    %138 = vector.broadcast %cst_45 : f32 to vector<8x128xf32>
    %139 = arith.mulf %138, %135 : vector<8x128xf32>
    %140 = arith.select %137, %135, %139 : vector<8x128xi1>, vector<8x128xf32>
    %141 = arith.truncf %140 : vector<8x128xf32> to vector<8x128xbf16>
    %c0_46 = arith.constant 0 : index
    %c0_47 = arith.constant 0 : index
    %142 = vector.load %arg10[%c0_46, %c0_47] : memref<128x32xbf16, #tpu.memory_space<vmem>>, vector<128x32xbf16>
    %cst_48 = arith.constant dense<0.000000e+00> : vector<8x32xf32>
    %143 = tpu.matmul %141, %142, %cst_48 {dimension_numbers = #tpu.dot_dimension_numbers<[1], [0], [0], [1], [0, 0, 1, 1], [], []>} : vector<8x128xbf16>, vector<128x32xbf16>, vector<8x32xf32> -> vector<8x32xf32>
    %c0_49 = arith.constant 0 : index
    %c0_50 = arith.constant 0 : index
    %144 = vector.load %arg11[%c0_49, %c0_50] : memref<1x32xf32, #tpu.memory_space<vmem>>, vector<1x32xf32>
    %145 = vector.broadcast %144 : vector<1x32xf32> to vector<8x32xf32>
    %146 = arith.addf %143, %145 : vector<8x32xf32>
    %147 = arith.addf %129, %146 : vector<8x32xf32>
    %cst_51 = arith.constant dense<0.000000e+00> : vector<8xf32>
    %148 = vector.multi_reduction <add>, %147, %cst_51 [1] : vector<8x32xf32> to vector<8xf32>
    %149 = vector.shape_cast %148 : vector<8xf32> to vector<8x1xf32>
    %cst_52 = arith.constant 3.200000e+01 : f32
    %150 = vector.broadcast %cst_52 : f32 to vector<8x1xf32>
    %151 = arith.divf %149, %150 : vector<8x1xf32>
    %152 = vector.broadcast %151 : vector<8x1xf32> to vector<8x32xf32>
    %153 = arith.subf %147, %152 : vector<8x32xf32>
    %154 = arith.mulf %153, %153 : vector<8x32xf32>
    %cst_53 = arith.constant dense<0.000000e+00> : vector<8xf32>
    %155 = vector.multi_reduction <add>, %154, %cst_53 [1] : vector<8x32xf32> to vector<8xf32>
    %156 = vector.shape_cast %155 : vector<8xf32> to vector<8x1xf32>
    %cst_54 = arith.constant 3.200000e+01 : f32
    %157 = vector.broadcast %cst_54 : f32 to vector<8x1xf32>
    %158 = arith.divf %156, %157 : vector<8x1xf32>
    %159 = vector.broadcast %151 : vector<8x1xf32> to vector<8x32xf32>
    %160 = arith.subf %147, %159 : vector<8x32xf32>
    %cst_55 = arith.constant 9.99999974E-6 : f32
    %161 = vector.broadcast %cst_55 : f32 to vector<8x1xf32>
    %162 = arith.addf %158, %161 : vector<8x1xf32>
    %163 = math.rsqrt %162 : vector<8x1xf32>
    %164 = vector.broadcast %163 : vector<8x1xf32> to vector<8x32xf32>
    %165 = arith.mulf %160, %164 : vector<8x32xf32>
    %c0_56 = arith.constant 0 : index
    %c0_57 = arith.constant 0 : index
    %166 = vector.load %arg12[%c0_56, %c0_57] : memref<1x32xf32, #tpu.memory_space<vmem>>, vector<1x32xf32>
    %167 = vector.broadcast %166 : vector<1x32xf32> to vector<8x32xf32>
    %168 = arith.mulf %165, %167 : vector<8x32xf32>
    %c0_58 = arith.constant 0 : index
    %c0_59 = arith.constant 0 : index
    %169 = vector.load %arg13[%c0_58, %c0_59] : memref<1x32xf32, #tpu.memory_space<vmem>>, vector<1x32xf32>
    %170 = vector.broadcast %169 : vector<1x32xf32> to vector<8x32xf32>
    %171 = arith.addf %168, %170 : vector<8x32xf32>
    %c0_60 = arith.constant 0 : index
    %c0_61 = arith.constant 0 : index
    %172 = vector.load %arg14[%c0_60, %c0_61] : memref<8x32xf32, #tpu.memory_space<vmem>>, vector<8x32xf32>
    tpu.vector_store %arg14[%c0_60, %c0_61], %171 {strides = array<i32>} : memref<8x32xf32, #tpu.memory_space<vmem>>, vector<8x32xf32>,
    return
  }
  func.func @transform_0(%arg0: i32) -> (i32, i32) {
    %c0_i32 = arith.constant 0 : i32
    %c0_i32_0 = arith.constant 0 : i32
    return %arg0, %c0_i32 : i32, i32
  }
  func.func @transform_1(%arg0: i32) -> (i32, i32) {
    %c0_i32 = arith.constant 0 : i32
    %c0_i32_0 = arith.constant 0 : i32
    %c0_i32_1 = arith.constant 0 : i32
    return %c0_i32, %c0_i32_0 : i32, i32
  }
  func.func @transform_2(%arg0: i32) -> (i32, i32) {
    %c0_i32 = arith.constant 0 : i32
    %c0_i32_0 = arith.constant 0 : i32
    %c0_i32_1 = arith.constant 0 : i32
    return %c0_i32, %c0_i32_0 : i32, i32
  }
  func.func @transform_3(%arg0: i32) -> (i32, i32) {
    %c0_i32 = arith.constant 0 : i32
    %c0_i32_0 = arith.constant 0 : i32
    %c0_i32_1 = arith.constant 0 : i32
    return %c0_i32, %c0_i32_0 : i32, i32
  }
  func.func @transform_4(%arg0: i32) -> (i32, i32) {
    %c0_i32 = arith.constant 0 : i32
    %c0_i32_0 = arith.constant 0 : i32
    %c0_i32_1 = arith.constant 0 : i32
    return %c0_i32, %c0_i32_0 : i32, i32
  }
  func.func @transform_5(%arg0: i32) -> (i32, i32) {
    %c0_i32 = arith.constant 0 : i32
    %c0_i32_0 = arith.constant 0 : i32
    %c0_i32_1 = arith.constant 0 : i32
    return %c0_i32, %c0_i32_0 : i32, i32
  }
  func.func @transform_6(%arg0: i32) -> (i32, i32) {
    %c0_i32 = arith.constant 0 : i32
    %c0_i32_0 = arith.constant 0 : i32
    %c0_i32_1 = arith.constant 0 : i32
    return %c0_i32, %c0_i32_0 : i32, i32
  }
  func.func @transform_7(%arg0: i32) -> (i32, i32) {
    %c0_i32 = arith.constant 0 : i32
    %c0_i32_0 = arith.constant 0 : i32
    %c0_i32_1 = arith.constant 0 : i32
    return %c0_i32, %c0_i32_0 : i32, i32
  }
  func.func @transform_8(%arg0: i32) -> (i32, i32) {
    %c0_i32 = arith.constant 0 : i32
    %c0_i32_0 = arith.constant 0 : i32
    %c0_i32_1 = arith.constant 0 : i32
    return %c0_i32, %c0_i32_0 : i32, i32
  }
  func.func @transform_9(%arg0: i32) -> (i32, i32) {
    %c0_i32 = arith.constant 0 : i32
    %c0_i32_0 = arith.constant 0 : i32
    %c0_i32_1 = arith.constant 0 : i32
    return %c0_i32, %c0_i32_0 : i32, i32
  }
  func.func @transform_10(%arg0: i32) -> (i32, i32) {
    %c0_i32 = arith.constant 0 : i32
    %c0_i32_0 = arith.constant 0 : i32
    %c0_i32_1 = arith.constant 0 : i32
    return %c0_i32, %c0_i32_0 : i32, i32
  }
  func.func @transform_11(%arg0: i32) -> (i32, i32) {
    %c0_i32 = arith.constant 0 : i32
    %c0_i32_0 = arith.constant 0 : i32
    %c0_i32_1 = arith.constant 0 : i32
    return %c0_i32, %c0_i32_0 : i32, i32
  }
  func.func @transform_12(%arg0: i32) -> (i32, i32) {
    %c0_i32 = arith.constant 0 : i32
    %c0_i32_0 = arith.constant 0 : i32
    %c0_i32_1 = arith.constant 0 : i32
    return %c0_i32, %c0_i32_0 : i32, i32
  }
  func.func @transform_13(%arg0: i32) -> (i32, i32) {
    %c0_i32 = arith.constant 0 : i32
    %c0_i32_0 = arith.constant 0 : i32
    return %arg0, %c0_i32 : i32, i32
  }
}

module attributes {stable_mosaic.version = 11 : i64} {
  func.func @encoder_kernel_self(%arg0: i32, %arg1: memref<8x32xf32, #tpu.memory_space<vmem>>, %arg2: memref<32x96xbf16, #tpu.memory_space<vmem>>, %arg3: memref<1x96xf32, #tpu.memory_space<vmem>>, %arg4: memref<32x32xbf16, #tpu.memory_space<vmem>>, %arg5: memref<1x32xf32, #tpu.memory_space<vmem>>, %arg6: memref<1x32xf32, #tpu.memory_space<vmem>>, %arg7: memref<1x32xf32, #tpu.memory_space<vmem>>, %arg8: memref<32x128xbf16, #tpu.memory_space<vmem>>, %arg9: memref<1x128xf32, #tpu.memory_space<vmem>>, %arg10: memref<128x32xbf16, #tpu.memory_space<vmem>>, %arg11: memref<1x32xf32, #tpu.memory_space<vmem>>, %arg12: memref<1x32xf32, #tpu.memory_space<vmem>>, %arg13: memref<1x32xf32, #tpu.memory_space<vmem>>, %arg14: memref<8x32xf32, #tpu.memory_space<vmem>>) attributes {dimension_semantics = [#tpu.dimension_semantics<parallel>], iteration_bounds = array<i64: 2>, scalar_prefetch = 0 : i64, scratch_operands = 0 : i64, tpu.core_type = #tpu.core_type<tc>, window_params = [{transform_indices = @transform_0, window_bounds = array<i64: 8, 32>}, {pipeline_mode = #tpu.pipeline_mode<synchronous>, transform_indices = @transform_1, window_bounds = array<i64: 32, 96>}, {pipeline_mode = #tpu.pipeline_mode<synchronous>, transform_indices = @transform_2, window_bounds = array<i64: 1, 96>}, {pipeline_mode = #tpu.pipeline_mode<synchronous>, transform_indices = @transform_3, window_bounds = array<i64: 32, 32>}, {pipeline_mode = #tpu.pipeline_mode<synchronous>, transform_indices = @transform_4, window_bounds = array<i64: 1, 32>}, {pipeline_mode = #tpu.pipeline_mode<synchronous>, transform_indices = @transform_5, window_bounds = array<i64: 1, 32>}, {pipeline_mode = #tpu.pipeline_mode<synchronous>, transform_indices = @transform_6, window_bounds = array<i64: 1, 32>}, {pipeline_mode = #tpu.pipeline_mode<synchronous>, transform_indices = @transform_7, window_bounds = array<i64: 32, 128>}, {pipeline_mode = #tpu.pipeline_mode<synchronous>, transform_indices = @transform_8, window_bounds = array<i64: 1, 128>}, {pipeline_mode = #tpu.pipeline_mode<synchronous>, transform_indices = @transform_9, window_bounds = array<i64: 128, 32>}, {pipeline_mode = #tpu.pipeline_mode<synchronous>, transform_indices = @transform_10, window_bounds = array<i64: 1, 32>}, {pipeline_mode = #tpu.pipeline_mode<synchronous>, transform_indices = @transform_11, window_bounds = array<i64: 1, 32>}, {pipeline_mode = #tpu.pipeline_mode<synchronous>, transform_indices = @transform_12, window_bounds = array<i64: 1, 32>}, {transform_indices = @transform_13, window_bounds = array<i64: 8, 32>}]} {
    %c0 = arith.constant 0 : index
    %c0_0 = arith.constant 0 : index
    %0 = vector.load %arg1[%c0, %c0_0] : memref<8x32xf32, #tpu.memory_space<vmem>>, vector<8x32xf32>
    %1 = arith.truncf %0 : vector<8x32xf32> to vector<8x32xbf16>
    %c0_1 = arith.constant 0 : index
    %c0_2 = arith.constant 0 : index
    %2 = vector.load %arg2[%c0_1, %c0_2] : memref<32x96xbf16, #tpu.memory_space<vmem>>, vector<32x96xbf16>
    %cst = arith.constant dense<0.000000e+00> : vector<8x96xf32>
    %3 = tpu.matmul %1, %2, %cst {dimension_numbers = #tpu.dot_dimension_numbers<[1], [0], [0], [1], [0, 0, 1, 1], [], []>} : vector<8x32xbf16>, vector<32x96xbf16>, vector<8x96xf32> -> vector<8x96xf32>
    %c0_3 = arith.constant 0 : index
    %c0_4 = arith.constant 0 : index
    %4 = vector.load %arg3[%c0_3, %c0_4] : memref<1x96xf32, #tpu.memory_space<vmem>>, vector<1x96xf32>
    %5 = vector.broadcast %4 : vector<1x96xf32> to vector<8x96xf32>
    %6 = arith.addf %3, %5 : vector<8x96xf32>
    %7 = vector.extract_strided_slice %6 {offsets = [0, 0], sizes = [8, 32], strides = [1, 1]} : vector<8x96xf32> to vector<8x32xf32>
    %8 = vector.extract_strided_slice %6 {offsets = [0, 32], sizes = [8, 32], strides = [1, 1]} : vector<8x96xf32> to vector<8x32xf32>
    %9 = vector.extract_strided_slice %6 {offsets = [0, 64], sizes = [8, 32], strides = [1, 1]} : vector<8x96xf32> to vector<8x32xf32>
    %10 = vector.shape_cast %7 : vector<8x32xf32> to vector<1x8x32xf32>
    %11 = arith.truncf %10 : vector<1x8x32xf32> to vector<1x8x32xbf16>
    %12 = vector.shape_cast %8 : vector<8x32xf32> to vector<1x8x32xf32>
    %13 = arith.truncf %12 : vector<1x8x32xf32> to vector<1x8x32xbf16>
    %14 = vector.shape_cast %9 : vector<8x32xf32> to vector<1x8x32xf32>
    %15 = arith.truncf %14 : vector<1x8x32xf32> to vector<1x8x32xbf16>
    %c0_5 = arith.constant 0 : index
    %c0_6 = arith.constant 0 : index
    %16 = vector.load %arg4[%c0_5, %c0_6] : memref<32x32xbf16, #tpu.memory_space<vmem>>, vector<32x32xbf16>
    %cst_7 = arith.constant 0.000000e+00 : f32
    %17 = vector.broadcast %cst_7 : f32 to vector<8x32xf32>
    %18 = vector.extract_strided_slice %11 {offsets = [0, 0, 0], sizes = [1, 8, 8], strides = [1, 1, 1]} : vector<1x8x32xbf16> to vector<1x8x8xbf16>
    %19 = vector.extract_strided_slice %13 {offsets = [0, 0, 0], sizes = [1, 8, 8], strides = [1, 1, 1]} : vector<1x8x32xbf16> to vector<1x8x8xbf16>
    %20 = vector.extract_strided_slice %15 {offsets = [0, 0, 0], sizes = [1, 8, 8], strides = [1, 1, 1]} : vector<1x8x32xbf16> to vector<1x8x8xbf16>
    "tpu.trace_start"() <{level = 10 : i32, message = "bqd,bkd->bqk"}> : () -> ()
    %cst_8 = arith.constant dense<0.000000e+00> : vector<1x8x8xf32>
    %21 = tpu.matmul %18, %19, %cst_8 {dimension_numbers = #tpu.dot_dimension_numbers<[2], [2], [1], [1], [0, 0, 0, 1, 1, 1], [0], [0]>} : vector<1x8x8xbf16>, vector<1x8x8xbf16>, vector<1x8x8xf32> -> vector<1x8x8xf32>
    "tpu.trace_stop"() : () -> ()
    %cst_9 = arith.constant dense<0xFF800000> : vector<1x8xf32>
    %22 = vector.multi_reduction <maximumf>, %21, %cst_9 [2] : vector<1x8x8xf32> to vector<1x8xf32>
    %23 = vector.shape_cast %22 : vector<1x8xf32> to vector<1x8x1xf32>
    %24 = vector.broadcast %23 : vector<1x8x1xf32> to vector<1x8x8xf32>
    %25 = arith.subf %21, %24 : vector<1x8x8xf32>
    %26 = math.exp %25 : vector<1x8x8xf32>
    %cst_10 = arith.constant dense<0.000000e+00> : vector<1x8xf32>
    %27 = vector.multi_reduction <add>, %26, %cst_10 [2] : vector<1x8x8xf32> to vector<1x8xf32>
    %28 = vector.shape_cast %27 : vector<1x8xf32> to vector<1x8x1xf32>
    %29 = tpu.reciprocal %28 {approx = true} : vector<1x8x1xf32> -> vector<1x8x1xf32>
    %30 = vector.broadcast %29 : vector<1x8x1xf32> to vector<1x8x8xf32>
    %31 = arith.mulf %26, %30 : vector<1x8x8xf32>
    %32 = arith.truncf %31 : vector<1x8x8xf32> to vector<1x8x8xbf16>
    "tpu.trace_start"() <{level = 10 : i32, message = "bqk,bkd->bqd"}> : () -> ()
    %cst_11 = arith.constant dense<0.000000e+00> : vector<1x8x8xf32>
    %33 = tpu.matmul %32, %20, %cst_11 {dimension_numbers = #tpu.dot_dimension_numbers<[2], [1], [1], [2], [0, 0, 0, 1, 1, 2], [0], [0]>} : vector<1x8x8xbf16>, vector<1x8x8xbf16>, vector<1x8x8xf32> -> vector<1x8x8xf32>
    "tpu.trace_stop"() : () -> ()
    %34 = vector.shape_cast %33 : vector<1x8x8xf32> to vector<8x8xf32>
    %35 = arith.truncf %34 : vector<8x8xf32> to vector<8x8xbf16>
    %36 = vector.extract_strided_slice %16 {offsets = [0, 0], sizes = [8, 32], strides = [1, 1]} : vector<32x32xbf16> to vector<8x32xbf16>
    %cst_12 = arith.constant dense<0.000000e+00> : vector<8x32xf32>
    %37 = tpu.matmul %35, %36, %cst_12 {dimension_numbers = #tpu.dot_dimension_numbers<[1], [0], [0], [1], [0, 0, 1, 1], [], []>} : vector<8x8xbf16>, vector<8x32xbf16>, vector<8x32xf32> -> vector<8x32xf32>
    %38 = arith.addf %17, %37 : vector<8x32xf32>
    %39 = vector.extract_strided_slice %11 {offsets = [0, 0, 8], sizes = [1, 8, 8], strides = [1, 1, 1]} : vector<1x8x32xbf16> to vector<1x8x8xbf16>
    %40 = vector.extract_strided_slice %13 {offsets = [0, 0, 8], sizes = [1, 8, 8], strides = [1, 1, 1]} : vector<1x8x32xbf16> to vector<1x8x8xbf16>
    %41 = vector.extract_strided_slice %15 {offsets = [0, 0, 8], sizes = [1, 8, 8], strides = [1, 1, 1]} : vector<1x8x32xbf16> to vector<1x8x8xbf16>
    "tpu.trace_start"() <{level = 10 : i32, message = "bqd,bkd->bqk"}> : () -> ()
    %cst_13 = arith.constant dense<0.000000e+00> : vector<1x8x8xf32>
    %42 = tpu.matmul %39, %40, %cst_13 {dimension_numbers = #tpu.dot_dimension_numbers<[2], [2], [1], [1], [0, 0, 0, 1, 1, 1], [0], [0]>} : vector<1x8x8xbf16>, vector<1x8x8xbf16>, vector<1x8x8xf32> -> vector<1x8x8xf32>
    "tpu.trace_stop"() : () -> ()
    %cst_14 = arith.constant dense<0xFF800000> : vector<1x8xf32>
    %43 = vector.multi_reduction <maximumf>, %42, %cst_14 [2] : vector<1x8x8xf32> to vector<1x8xf32>
    %44 = vector.shape_cast %43 : vector<1x8xf32> to vector<1x8x1xf32>
    %45 = vector.broadcast %44 : vector<1x8x1xf32> to vector<1x8x8xf32>
    %46 = arith.subf %42, %45 : vector<1x8x8xf32>
    %47 = math.exp %46 : vector<1x8x8xf32>
    %cst_15 = arith.constant dense<0.000000e+00> : vector<1x8xf32>
    %48 = vector.multi_reduction <add>, %47, %cst_15 [2] : vector<1x8x8xf32> to vector<1x8xf32>
    %49 = vector.shape_cast %48 : vector<1x8xf32> to vector<1x8x1xf32>
    %50 = tpu.reciprocal %49 {approx = true} : vector<1x8x1xf32> -> vector<1x8x1xf32>
    %51 = vector.broadcast %50 : vector<1x8x1xf32> to vector<1x8x8xf32>
    %52 = arith.mulf %47, %51 : vector<1x8x8xf32>
    %53 = arith.truncf %52 : vector<1x8x8xf32> to vector<1x8x8xbf16>
    "tpu.trace_start"() <{level = 10 : i32, message = "bqk,bkd->bqd"}> : () -> ()
    %cst_16 = arith.constant dense<0.000000e+00> : vector<1x8x8xf32>
    %54 = tpu.matmul %53, %41, %cst_16 {dimension_numbers = #tpu.dot_dimension_numbers<[2], [1], [1], [2], [0, 0, 0, 1, 1, 2], [0], [0]>} : vector<1x8x8xbf16>, vector<1x8x8xbf16>, vector<1x8x8xf32> -> vector<1x8x8xf32>
    "tpu.trace_stop"() : () -> ()
    %55 = vector.shape_cast %54 : vector<1x8x8xf32> to vector<8x8xf32>
    %56 = arith.truncf %55 : vector<8x8xf32> to vector<8x8xbf16>
    %57 = vector.extract_strided_slice %16 {offsets = [8, 0], sizes = [8, 32], strides = [1, 1]} : vector<32x32xbf16> to vector<8x32xbf16>
    %cst_17 = arith.constant dense<0.000000e+00> : vector<8x32xf32>
    %58 = tpu.matmul %56, %57, %cst_17 {dimension_numbers = #tpu.dot_dimension_numbers<[1], [0], [0], [1], [0, 0, 1, 1], [], []>} : vector<8x8xbf16>, vector<8x32xbf16>, vector<8x32xf32> -> vector<8x32xf32>
    %59 = arith.addf %38, %58 : vector<8x32xf32>
    %60 = vector.extract_strided_slice %11 {offsets = [0, 0, 16], sizes = [1, 8, 8], strides = [1, 1, 1]} : vector<1x8x32xbf16> to vector<1x8x8xbf16>
    %61 = vector.extract_strided_slice %13 {offsets = [0, 0, 16], sizes = [1, 8, 8], strides = [1, 1, 1]} : vector<1x8x32xbf16> to vector<1x8x8xbf16>
    %62 = vector.extract_strided_slice %15 {offsets = [0, 0, 16], sizes = [1, 8, 8], strides = [1, 1, 1]} : vector<1x8x32xbf16> to vector<1x8x8xbf16>
    "tpu.trace_start"() <{level = 10 : i32, message = "bqd,bkd->bqk"}> : () -> ()
    %cst_18 = arith.constant dense<0.000000e+00> : vector<1x8x8xf32>
    %63 = tpu.matmul %60, %61, %cst_18 {dimension_numbers = #tpu.dot_dimension_numbers<[2], [2], [1], [1], [0, 0, 0, 1, 1, 1], [0], [0]>} : vector<1x8x8xbf16>, vector<1x8x8xbf16>, vector<1x8x8xf32> -> vector<1x8x8xf32>
    "tpu.trace_stop"() : () -> ()
    %cst_19 = arith.constant dense<0xFF800000> : vector<1x8xf32>
    %64 = vector.multi_reduction <maximumf>, %63, %cst_19 [2] : vector<1x8x8xf32> to vector<1x8xf32>
    %65 = vector.shape_cast %64 : vector<1x8xf32> to vector<1x8x1xf32>
    %66 = vector.broadcast %65 : vector<1x8x1xf32> to vector<1x8x8xf32>
    %67 = arith.subf %63, %66 : vector<1x8x8xf32>
    %68 = math.exp %67 : vector<1x8x8xf32>
    %cst_20 = arith.constant dense<0.000000e+00> : vector<1x8xf32>
    %69 = vector.multi_reduction <add>, %68, %cst_20 [2] : vector<1x8x8xf32> to vector<1x8xf32>
    %70 = vector.shape_cast %69 : vector<1x8xf32> to vector<1x8x1xf32>
    %71 = tpu.reciprocal %70 {approx = true} : vector<1x8x1xf32> -> vector<1x8x1xf32>
    %72 = vector.broadcast %71 : vector<1x8x1xf32> to vector<1x8x8xf32>
    %73 = arith.mulf %68, %72 : vector<1x8x8xf32>
    %74 = arith.truncf %73 : vector<1x8x8xf32> to vector<1x8x8xbf16>
    "tpu.trace_start"() <{level = 10 : i32, message = "bqk,bkd->bqd"}> : () -> ()
    %cst_21 = arith.constant dense<0.000000e+00> : vector<1x8x8xf32>
    %75 = tpu.matmul %74, %62, %cst_21 {dimension_numbers = #tpu.dot_dimension_numbers<[2], [1], [1], [2], [0, 0, 0, 1, 1, 2], [0], [0]>} : vector<1x8x8xbf16>, vector<1x8x8xbf16>, vector<1x8x8xf32> -> vector<1x8x8xf32>
    "tpu.trace_stop"() : () -> ()
    %76 = vector.shape_cast %75 : vector<1x8x8xf32> to vector<8x8xf32>
    %77 = arith.truncf %76 : vector<8x8xf32> to vector<8x8xbf16>
    %78 = vector.extract_strided_slice %16 {offsets = [16, 0], sizes = [8, 32], strides = [1, 1]} : vector<32x32xbf16> to vector<8x32xbf16>
    %cst_22 = arith.constant dense<0.000000e+00> : vector<8x32xf32>
    %79 = tpu.matmul %77, %78, %cst_22 {dimension_numbers = #tpu.dot_dimension_numbers<[1], [0], [0], [1], [0, 0, 1, 1], [], []>} : vector<8x8xbf16>, vector<8x32xbf16>, vector<8x32xf32> -> vector<8x32xf32>
    %80 = arith.addf %59, %79 : vector<8x32xf32>
    %81 = vector.extract_strided_slice %11 {offsets = [0, 0, 24], sizes = [1, 8, 8], strides = [1, 1, 1]} : vector<1x8x32xbf16> to vector<1x8x8xbf16>
    %82 = vector.extract_strided_slice %13 {offsets = [0, 0, 24], sizes = [1, 8, 8], strides = [1, 1, 1]} : vector<1x8x32xbf16> to vector<1x8x8xbf16>
    %83 = vector.extract_strided_slice %15 {offsets = [0, 0, 24], sizes = [1, 8, 8], strides = [1, 1, 1]} : vector<1x8x32xbf16> to vector<1x8x8xbf16>
    "tpu.trace_start"() <{level = 10 : i32, message = "bqd,bkd->bqk"}> : () -> ()
    %cst_23 = arith.constant dense<0.000000e+00> : vector<1x8x8xf32>
    %84 = tpu.matmul %81, %82, %cst_23 {dimension_numbers = #tpu.dot_dimension_numbers<[2], [2], [1], [1], [0, 0, 0, 1, 1, 1], [0], [0]>} : vector<1x8x8xbf16>, vector<1x8x8xbf16>, vector<1x8x8xf32> -> vector<1x8x8xf32>
    "tpu.trace_stop"() : () -> ()
    %cst_24 = arith.constant dense<0xFF800000> : vector<1x8xf32>
    %85 = vector.multi_reduction <maximumf>, %84, %cst_24 [2] : vector<1x8x8xf32> to vector<1x8xf32>
    %86 = vector.shape_cast %85 : vector<1x8xf32> to vector<1x8x1xf32>
    %87 = vector.broadcast %86 : vector<1x8x1xf32> to vector<1x8x8xf32>
    %88 = arith.subf %84, %87 : vector<1x8x8xf32>
    %89 = math.exp %88 : vector<1x8x8xf32>
    %cst_25 = arith.constant dense<0.000000e+00> : vector<1x8xf32>
    %90 = vector.multi_reduction <add>, %89, %cst_25 [2] : vector<1x8x8xf32> to vector<1x8xf32>
    %91 = vector.shape_cast %90 : vector<1x8xf32> to vector<1x8x1xf32>
    %92 = tpu.reciprocal %91 {approx = true} : vector<1x8x1xf32> -> vector<1x8x1xf32>
    %93 = vector.broadcast %92 : vector<1x8x1xf32> to vector<1x8x8xf32>
    %94 = arith.mulf %89, %93 : vector<1x8x8xf32>
    %95 = arith.truncf %94 : vector<1x8x8xf32> to vector<1x8x8xbf16>
    "tpu.trace_start"() <{level = 10 : i32, message = "bqk,bkd->bqd"}> : () -> ()
    %cst_26 = arith.constant dense<0.000000e+00> : vector<1x8x8xf32>
    %96 = tpu.matmul %95, %83, %cst_26 {dimension_numbers = #tpu.dot_dimension_numbers<[2], [1], [1], [2], [0, 0, 0, 1, 1, 2], [0], [0]>} : vector<1x8x8xbf16>, vector<1x8x8xbf16>, vector<1x8x8xf32> -> vector<1x8x8xf32>
    "tpu.trace_stop"() : () -> ()
    %97 = vector.shape_cast %96 : vector<1x8x8xf32> to vector<8x8xf32>
    %98 = arith.truncf %97 : vector<8x8xf32> to vector<8x8xbf16>
    %99 = vector.extract_strided_slice %16 {offsets = [24, 0], sizes = [8, 32], strides = [1, 1]} : vector<32x32xbf16> to vector<8x32xbf16>
    %cst_27 = arith.constant dense<0.000000e+00> : vector<8x32xf32>
    %100 = tpu.matmul %98, %99, %cst_27 {dimension_numbers = #tpu.dot_dimension_numbers<[1], [0], [0], [1], [0, 0, 1, 1], [], []>} : vector<8x8xbf16>, vector<8x32xbf16>, vector<8x32xf32> -> vector<8x32xf32>
    %101 = arith.addf %80, %100 : vector<8x32xf32>
    %c0_28 = arith.constant 0 : index
    %c0_29 = arith.constant 0 : index
    %102 = vector.load %arg5[%c0_28, %c0_29] : memref<1x32xf32, #tpu.memory_space<vmem>>, vector<1x32xf32>
    %103 = vector.broadcast %102 : vector<1x32xf32> to vector<8x32xf32>
    %104 = arith.addf %101, %103 : vector<8x32xf32>
    %105 = arith.addf %0, %104 : vector<8x32xf32>
    %cst_30 = arith.constant dense<0.000000e+00> : vector<8xf32>
    %106 = vector.multi_reduction <add>, %105, %cst_30 [1] : vector<8x32xf32> to vector<8xf32>
    %107 = vector.shape_cast %106 : vector<8xf32> to vector<8x1xf32>
    %cst_31 = arith.constant 3.200000e+01 : f32
    %108 = vector.broadcast %cst_31 : f32 to vector<8x1xf32>
    %109 = arith.divf %107, %108 : vector<8x1xf32>
    %110 = vector.broadcast %109 : vector<8x1xf32> to vector<8x32xf32>
    %111 = arith.subf %105, %110 : vector<8x32xf32>
    %112 = arith.mulf %111, %111 : vector<8x32xf32>
    %cst_32 = arith.constant dense<0.000000e+00> : vector<8xf32>
    %113 = vector.multi_reduction <add>, %112, %cst_32 [1] : vector<8x32xf32> to vector<8xf32>
    %114 = vector.shape_cast %113 : vector<8xf32> to vector<8x1xf32>
    %cst_33 = arith.constant 3.200000e+01 : f32
    %115 = vector.broadcast %cst_33 : f32 to vector<8x1xf32>
    %116 = arith.divf %114, %115 : vector<8x1xf32>
    %117 = vector.broadcast %109 : vector<8x1xf32> to vector<8x32xf32>
    %118 = arith.subf %105, %117 : vector<8x32xf32>
    %cst_34 = arith.constant 9.99999974E-6 : f32
    %119 = vector.broadcast %cst_34 : f32 to vector<8x1xf32>
    %120 = arith.addf %116, %119 : vector<8x1xf32>
    %121 = math.rsqrt %120 : vector<8x1xf32>
    %122 = vector.broadcast %121 : vector<8x1xf32> to vector<8x32xf32>
    %123 = arith.mulf %118, %122 : vector<8x32xf32>
    %c0_35 = arith.constant 0 : index
    %c0_36 = arith.constant 0 : index
    %124 = vector.load %arg6[%c0_35, %c0_36] : memref<1x32xf32, #tpu.memory_space<vmem>>, vector<1x32xf32>
    %125 = vector.broadcast %124 : vector<1x32xf32> to vector<8x32xf32>
    %126 = arith.mulf %123, %125 : vector<8x32xf32>
    %c0_37 = arith.constant 0 : index
    %c0_38 = arith.constant 0 : index
    %127 = vector.load %arg7[%c0_37, %c0_38] : memref<1x32xf32, #tpu.memory_space<vmem>>, vector<1x32xf32>
    %128 = vector.broadcast %127 : vector<1x32xf32> to vector<8x32xf32>
    %129 = arith.addf %126, %128 : vector<8x32xf32>
    %130 = arith.truncf %129 : vector<8x32xf32> to vector<8x32xbf16>
    %c0_39 = arith.constant 0 : index
    %c0_40 = arith.constant 0 : index
    %131 = vector.load %arg8[%c0_39, %c0_40] : memref<32x128xbf16, #tpu.memory_space<vmem>>, vector<32x128xbf16>
    %cst_41 = arith.constant dense<0.000000e+00> : vector<8x128xf32>
    %132 = tpu.matmul %130, %131, %cst_41 {dimension_numbers = #tpu.dot_dimension_numbers<[1], [0], [0], [1], [0, 0, 1, 1], [], []>} : vector<8x32xbf16>, vector<32x128xbf16>, vector<8x128xf32> -> vector<8x128xf32>
    %c0_42 = arith.constant 0 : index
    %c0_43 = arith.constant 0 : index
    %133 = vector.load %arg9[%c0_42, %c0_43] : memref<1x128xf32, #tpu.memory_space<vmem>>, vector<1x128xf32>
    %134 = vector.broadcast %133 : vector<1x128xf32> to vector<8x128xf32>
    %135 = arith.addf %132, %134 : vector<8x128xf32>
    %cst_44 = arith.constant 0.000000e+00 : f32
    %136 = vector.broadcast %cst_44 : f32 to vector<8x128xf32>
    %137 = arith.cmpf oge, %135, %136 : vector<8x128xf32>
    %cst_45 = arith.constant 0.00999999977 : f32
    %138 = vector.broadcast %cst_45 : f32 to vector<8x128xf32>
    %139 = arith.mulf %138, %135 : vector<8x128xf32>
    %140 = arith.select %137, %135, %139 : vector<8x128xi1>, vector<8x128xf32>
    %141 = arith.truncf %140 : vector<8x128xf32> to vector<8x128xbf16>
    %c0_46 = arith.constant 0 : index
    %c0_47 = arith.constant 0 : index
    %142 = vector.load %arg10[%c0_46, %c0_47] : memref<128x32xbf16, #tpu.memory_space<vmem>>, vector<128x32xbf16>
    %cst_48 = arith.constant dense<0.000000e+00> : vector<8x32xf32>
    %143 = tpu.matmul %141, %142, %cst_48 {dimension_numbers = #tpu.dot_dimension_numbers<[1], [0], [0], [1], [0, 0, 1, 1], [], []>} : vector<8x128xbf16>, vector<128x32xbf16>, vector<8x32xf32> -> vector<8x32xf32>
    %c0_49 = arith.constant 0 : index
    %c0_50 = arith.constant 0 : index
    %144 = vector.load %arg11[%c0_49, %c0_50] : memref<1x32xf32, #tpu.memory_space<vmem>>, vector<1x32xf32>
    %145 = vector.broadcast %144 : vector<1x32xf32> to vector<8x32xf32>
    %146 = arith.addf %143, %145 : vector<8x32xf32>
    %147 = arith.addf %129, %146 : vector<8x32xf32>
    %cst_51 = arith.constant dense<0.000000e+00> : vector<8xf32>
    %148 = vector.multi_reduction <add>, %147, %cst_51 [1] : vector<8x32xf32> to vector<8xf32>
    %149 = vector.shape_cast %148 : vector<8xf32> to vector<8x1xf32>
    %cst_52 = arith.constant 3.200000e+01 : f32
    %150 = vector.broadcast %cst_52 : f32 to vector<8x1xf32>
    %151 = arith.divf %149, %150 : vector<8x1xf32>
    %152 = vector.broadcast %151 : vector<8x1xf32> to vector<8x32xf32>
    %153 = arith.subf %147, %152 : vector<8x32xf32>
    %154 = arith.mulf %153, %153 : vector<8x32xf32>
    %cst_53 = arith.constant dense<0.000000e+00> : vector<8xf32>
    %155 = vector.multi_reduction <add>, %154, %cst_53 [1] : vector<8x32xf32> to vector<8xf32>
    %156 = vector.shape_cast %155 : vector<8xf32> to vector<8x1xf32>
    %cst_54 = arith.constant 3.200000e+01 : f32
    %157 = vector.broadcast %cst_54 : f32 to vector<8x1xf32>
    %158 = arith.divf %156, %157 : vector<8x1xf32>
    %159 = vector.broadcast %151 : vector<8x1xf32> to vector<8x32xf32>
    %160 = arith.subf %147, %159 : vector<8x32xf32>
    %cst_55 = arith.constant 9.99999974E-6 : f32
    %161 = vector.broadcast %cst_55 : f32 to vector<8x1xf32>
    %162 = arith.addf %158, %161 : vector<8x1xf32>
    %163 = math.rsqrt %162 : vector<8x1xf32>
    %164 = vector.broadcast %163 : vector<8x1xf32> to vector<8x32xf32>
    %165 = arith.mulf %160, %164 : vector<8x32xf32>
    %c0_56 = arith.constant 0 : index
    %c0_57 = arith.constant 0 : index
    %166 = vector.load %arg12[%c0_56, %c0_57] : memref<1x32xf32, #tpu.memory_space<vmem>>, vector<1x32xf32>
    %167 = vector.broadcast %166 : vector<1x32xf32> to vector<8x32xf32>
    %168 = arith.mulf %165, %167 : vector<8x32xf32>
    %c0_58 = arith.constant 0 : index
    %c0_59 = arith.constant 0 : index
    %169 = vector.load %arg13[%c0_58, %c0_59] : memref<1x32xf32, #tpu.memory_space<vmem>>, vector<1x32xf32>
    %170 = vector.broadcast %169 : vector<1x32xf32> to vector<8x32xf32>
    %171 = arith.addf %168, %170 : vector<8x32xf32>
    %c0_60 = arith.constant 0 : index
    %c0_61 = arith.constant 0 : index
    %172 = vector.load %arg14[%c0_60, %c0_61] : memref<8x32xf32, #tpu.memory_space<vmem>>, vector<8x32xf32>
    tpu.vector_store %arg14[%c0_60, %c0_61], %171 {strides = array<i32>} : memref<8x32xf32, #tpu.memory_space<vmem>>, vector<8x32xf32>,
    return
  }
  func.func @transform_0(%arg0: i32) -> (i32, i32) {
    %c0_i32 = arith.constant 0 : i32
    %c0_i32_0 = arith.constant 0 : i32
    return %arg0, %c0_i32 : i32, i32
  }
  func.func @transform_1(%arg0: i32) -> (i32, i32) {
    %c0_i32 = arith.constant 0 : i32
    %c0_i32_0 = arith.constant 0 : i32
    %c0_i32_1 = arith.constant 0 : i32
    return %c0_i32, %c0_i32_0 : i32, i32
  }
  func.func @transform_2(%arg0: i32) -> (i32, i32) {
    %c0_i32 = arith.constant 0 : i32
    %c0_i32_0 = arith.constant 0 : i32
    %c0_i32_1 = arith.constant 0 : i32
    return %c0_i32, %c0_i32_0 : i32, i32
  }
  func.func @transform_3(%arg0: i32) -> (i32, i32) {
    %c0_i32 = arith.constant 0 : i32
    %c0_i32_0 = arith.constant 0 : i32
    %c0_i32_1 = arith.constant 0 : i32
    return %c0_i32, %c0_i32_0 : i32, i32
  }
  func.func @transform_4(%arg0: i32) -> (i32, i32) {
    %c0_i32 = arith.constant 0 : i32
    %c0_i32_0 = arith.constant 0 : i32
    %c0_i32_1 = arith.constant 0 : i32
    return %c0_i32, %c0_i32_0 : i32, i32
  }
  func.func @transform_5(%arg0: i32) -> (i32, i32) {
    %c0_i32 = arith.constant 0 : i32
    %c0_i32_0 = arith.constant 0 : i32
    %c0_i32_1 = arith.constant 0 : i32
    return %c0_i32, %c0_i32_0 : i32, i32
  }
  func.func @transform_6(%arg0: i32) -> (i32, i32) {
    %c0_i32 = arith.constant 0 : i32
    %c0_i32_0 = arith.constant 0 : i32
    %c0_i32_1 = arith.constant 0 : i32
    return %c0_i32, %c0_i32_0 : i32, i32
  }
  func.func @transform_7(%arg0: i32) -> (i32, i32) {
    %c0_i32 = arith.constant 0 : i32
    %c0_i32_0 = arith.constant 0 : i32
    %c0_i32_1 = arith.constant 0 : i32
    return %c0_i32, %c0_i32_0 : i32, i32
  }
  func.func @transform_8(%arg0: i32) -> (i32, i32) {
    %c0_i32 = arith.constant 0 : i32
    %c0_i32_0 = arith.constant 0 : i32
    %c0_i32_1 = arith.constant 0 : i32
    return %c0_i32, %c0_i32_0 : i32, i32
  }
  func.func @transform_9(%arg0: i32) -> (i32, i32) {
    %c0_i32 = arith.constant 0 : i32
    %c0_i32_0 = arith.constant 0 : i32
    %c0_i32_1 = arith.constant 0 : i32
    return %c0_i32, %c0_i32_0 : i32, i32
  }
  func.func @transform_10(%arg0: i32) -> (i32, i32) {
    %c0_i32 = arith.constant 0 : i32
    %c0_i32_0 = arith.constant 0 : i32
    %c0_i32_1 = arith.constant 0 : i32
    return %c0_i32, %c0_i32_0 : i32, i32
  }
  func.func @transform_11(%arg0: i32) -> (i32, i32) {
    %c0_i32 = arith.constant 0 : i32
    %c0_i32_0 = arith.constant 0 : i32
    %c0_i32_1 = arith.constant 0 : i32
    return %c0_i32, %c0_i32_0 : i32, i32
  }
  func.func @transform_12(%arg0: i32) -> (i32, i32) {
    %c0_i32 = arith.constant 0 : i32
    %c0_i32_0 = arith.constant 0 : i32
    %c0_i32_1 = arith.constant 0 : i32
    return %c0_i32, %c0_i32_0 : i32, i32
  }
  func.func @transform_13(%arg0: i32) -> (i32, i32) {
    %c0_i32 = arith.constant 0 : i32
    %c0_i32_0 = arith.constant 0 : i32
    return %arg0, %c0_i32 : i32, i32
  }
}

</mosaic_0001>

<llo_original>
// kernel: tpu_custom_call.1
$region0: #{tpu_custom_call.1}
  #allocation0 [shape = 'u32[]', space=smem, size = 0x4, offset = 0x4, fixed_abs, tag = 'smem constant byte address 0x4 - core index']
  #allocation1 [shape = 'u32[144,128]{1,0:T(1,128)}', space=vmem, size = 0x12000, scoped, tag = 'internal scratch']
  %s0 = inlined_call_operand.vmem [shape: f32[16,32], index: 0, kind: input, shape index: {}]
  %s1 = inlined_call_operand.vmem [shape: bf16[32,96], index: 1, kind: input, shape index: {}]
  %s2 = inlined_call_operand.vmem [shape: f32[1,96], index: 2, kind: input, shape index: {}]
  %s3 = inlined_call_operand.vmem [shape: bf16[32,32], index: 3, kind: input, shape index: {}]
  %s4 = inlined_call_operand.vmem [shape: f32[1,32], index: 4, kind: input, shape index: {}]
  %s5 = inlined_call_operand.vmem [shape: f32[1,32], index: 5, kind: input, shape index: {}]
  %s6 = inlined_call_operand.vmem [shape: f32[1,32], index: 6, kind: input, shape index: {}]
  %s7 = inlined_call_operand.vmem [shape: bf16[32,128], index: 7, kind: input, shape index: {}]
  %s8 = inlined_call_operand.vmem [shape: f32[1,128], index: 8, kind: input, shape index: {}]
  %s9 = inlined_call_operand.vmem [shape: bf16[128,32], index: 9, kind: input, shape index: {}]
  %s10 = inlined_call_operand.vmem [shape: f32[1,32], index: 10, kind: input, shape index: {}]
  %s11 = inlined_call_operand.vmem [shape: f32[1,32], index: 11, kind: input, shape index: {}]
  %s12 = inlined_call_operand.vmem [shape: f32[1,32], index: 12, kind: input, shape index: {}]
  %s13 = inlined_call_operand.hbm [shape: f32[16,32], index: 13, kind: output, shape index: {}]
  %s14 = sld [smem:[#allocation0]]
  $region85: #{tpu_custom_call.1} parent=0
    _
  %s16 = ssub.s32 1, %s14
  %s17 = scalar_select 0, %s16, %s14
  $region1: #{tpu_custom_call.1} parent=0
    #allocation2 [shape = 'u8[8192]{0}', space=vmem, size = 0x2000, scoped, tag = 'output window, operand 0']
    #allocation3 [shape = 's32[2]{0}', space=sflag, size = 0x8, scoped, tag = 'scoped memory for tpu_custom_call.1']
    %18 = vsyncpa [#allocation3], 0
    %s19 = scalar_lea.sflag [#allocation3], 1
    %20 = vsyncpa %s19, 0
    loop: start=0, step=1, limit=4
    $region2: #{tpu_custom_call.1} parent=1 // loop_pre_header
      _
    $region3: #{tpu_custom_call.1} parent=1 // loop_header
      %s22 = sphi 0, %s26
      %p23 = scmp.ge.s32.totalorder %s22, 4
      %s32 = sphi 0, %s34
      %s35 = sphi 0, %s32
      %s36 = sphi 0, %s35
      %s52 = sphi 0, %s36
      %s56 = sphi 0, %s56
      %s58 = sphi 0, %s56
      %s59 = sphi 0, %s58
      %s73 = sphi 0, %s59
      %s77 = sphi 0, %s77
      %s79 = sphi 0, %s77
      %s80 = sphi 0, %s79
      %s94 = sphi 0, %s80
      %s98 = sphi 0, %s98
      %s100 = sphi 0, %s98
      %s101 = sphi 0, %s100
      %s115 = sphi 0, %s101
      %s119 = sphi 0, %s119
      %s121 = sphi 0, %s119
      %s122 = sphi 0, %s121
      %s136 = sphi 0, %s122
      %s140 = sphi 0, %s140
      %s142 = sphi 0, %s140
      %s143 = sphi 0, %s142
      %s157 = sphi 0, %s143
      %s161 = sphi 0, %s161
      %s163 = sphi 0, %s161
      %s164 = sphi 0, %s163
      %s178 = sphi 0, %s164
      %s182 = sphi 0, %s182
      %s184 = sphi 0, %s182
      %s185 = sphi 0, %s184
      %s199 = sphi 0, %s185
      %s203 = sphi 0, %s203
      %s205 = sphi 0, %s203
      %s206 = sphi 0, %s205
      %s220 = sphi 0, %s206
      %s224 = sphi 0, %s224
      %s226 = sphi 0, %s224
      %s227 = sphi 0, %s226
      %s241 = sphi 0, %s227
      %s245 = sphi 0, %s245
      %s247 = sphi 0, %s245
      %s248 = sphi 0, %s247
      %s262 = sphi 0, %s248
      %s266 = sphi 0, %s266
      %s268 = sphi 0, %s266
      %s269 = sphi 0, %s268
      %s283 = sphi 0, %s269
      %s287 = sphi 0, %s287
      %s289 = sphi 0, %s287
      %s290 = sphi 0, %s289
      %s304 = sphi 0, %s290
      %s310 = sphi 0, %s312
      %s313 = sphi 0, %s310
      %s314 = sphi 0, %s313
      %s330 = sphi 0, %s314
    $region4: #{tpu_custom_call.1} parent=1 // loop_header_branch
      %25 = sbr.rel (%p23) target = $region8
    $region5: #{tpu_custom_call.1} parent=1 // loop_body
      %s27 = ssub.s32 %s22, 1
      %s28 = ssub.s32 %s22, 2
      %s29 = sadd.s32 %s22, 1
      %s30 = ssub.s32 %s22, %s29
      %p31 = scmp.eq.s32.totalorder %s30, 0
      %s33 = sadd.s32 %s32, 1
      %s34 = scalar_select %p31, %s32, %s33
      %p37 = pneg %p31
      %p38 = scmp.eq.s32.totalorder %s22, 1
      %p39 = por %p37, %p38
      %p40 = scmp.ne.s32.totalorder %s32, %s35
      %p41 = scmp.eq.s32.totalorder %s22, 0
      %p42 = por %p40, %p41
      %p43 = scmp.ne.s32.totalorder %s32, %s35
      %p44 = scmp.eq.s32.totalorder %s27, 1
      %p45 = por %p43, %p44
      %p46 = scmp.ne.s32.totalorder %s35, %s36
      %p47 = scmp.eq.s32.totalorder %s27, 0
      %p48 = por %p46, %p47
      %p49 = scmp.ne.s32.totalorder %s35, %s36
      %p50 = scmp.eq.s32.totalorder %s28, 1
      %p51 = por %p49, %p50
      %p53 = scmp.ne.s32.totalorder %s36, %s52
      %p54 = scmp.eq.s32.totalorder %s28, 0
      %p55 = por %p53, %p54
      %s57 = sadd.s32 %s56, 1
      %p60 = scmp.eq.s32.totalorder %s22, 1
      %p61 = scmp.ne.s32.totalorder %s56, %s58
      %p62 = scmp.eq.s32.totalorder %s22, 0
      %p63 = por %p61, %p62
      %p64 = scmp.ne.s32.totalorder %s56, %s58
      %p65 = scmp.eq.s32.totalorder %s27, 1
      %p66 = por %p64, %p65
      %p67 = scmp.ne.s32.totalorder %s58, %s59
      %p68 = scmp.eq.s32.totalorder %s27, 0
      %p69 = por %p67, %p68
      %p70 = scmp.ne.s32.totalorder %s58, %s59
      %p71 = scmp.eq.s32.totalorder %s28, 1
      %p72 = por %p70, %p71
      %p74 = scmp.ne.s32.totalorder %s59, %s73
      %p75 = scmp.eq.s32.totalorder %s28, 0
      %p76 = por %p74, %p75
      %s78 = sadd.s32 %s77, 1
      %p81 = scmp.eq.s32.totalorder %s22, 1
      %p82 = scmp.ne.s32.totalorder %s77, %s79
      %p83 = scmp.eq.s32.totalorder %s22, 0
      %p84 = por %p82, %p83
      %p85 = scmp.ne.s32.totalorder %s77, %s79
      %p86 = scmp.eq.s32.totalorder %s27, 1
      %p87 = por %p85, %p86
      %p88 = scmp.ne.s32.totalorder %s79, %s80
      %p89 = scmp.eq.s32.totalorder %s27, 0
      %p90 = por %p88, %p89
      %p91 = scmp.ne.s32.totalorder %s79, %s80
      %p92 = scmp.eq.s32.totalorder %s28, 1
      %p93 = por %p91, %p92
      %p95 = scmp.ne.s32.totalorder %s80, %s94
      %p96 = scmp.eq.s32.totalorder %s28, 0
      %p97 = por %p95, %p96
      %s99 = sadd.s32 %s98, 1
      %p102 = scmp.eq.s32.totalorder %s22, 1
      %p103 = scmp.ne.s32.totalorder %s98, %s100
      %p104 = scmp.eq.s32.totalorder %s22, 0
      %p105 = por %p103, %p104
      %p106 = scmp.ne.s32.totalorder %s98, %s100
      %p107 = scmp.eq.s32.totalorder %s27, 1
      %p108 = por %p106, %p107
      %p109 = scmp.ne.s32.totalorder %s100, %s101
      %p110 = scmp.eq.s32.totalorder %s27, 0
      %p111 = por %p109, %p110
      %p112 = scmp.ne.s32.totalorder %s100, %s101
      %p113 = scmp.eq.s32.totalorder %s28, 1
      %p114 = por %p112, %p113
      %p116 = scmp.ne.s32.totalorder %s101, %s115
      %p117 = scmp.eq.s32.totalorder %s28, 0
      %p118 = por %p116, %p117
      %s120 = sadd.s32 %s119, 1
      %p123 = scmp.eq.s32.totalorder %s22, 1
      %p124 = scmp.ne.s32.totalorder %s119, %s121
      %p125 = scmp.eq.s32.totalorder %s22, 0
      %p126 = por %p124, %p125
      %p127 = scmp.ne.s32.totalorder %s119, %s121
      %p128 = scmp.eq.s32.totalorder %s27, 1
      %p129 = por %p127, %p128
      %p130 = scmp.ne.s32.totalorder %s121, %s122
      %p131 = scmp.eq.s32.totalorder %s27, 0
      %p132 = por %p130, %p131
      %p133 = scmp.ne.s32.totalorder %s121, %s122
      %p134 = scmp.eq.s32.totalorder %s28, 1
      %p135 = por %p133, %p134
      %p137 = scmp.ne.s32.totalorder %s122, %s136
      %p138 = scmp.eq.s32.totalorder %s28, 0
      %p139 = por %p137, %p138
      %s141 = sadd.s32 %s140, 1
      %p144 = scmp.eq.s32.totalorder %s22, 1
      %p145 = scmp.ne.s32.totalorder %s140, %s142
      %p146 = scmp.eq.s32.totalorder %s22, 0
      %p147 = por %p145, %p146
      %p148 = scmp.ne.s32.totalorder %s140, %s142
      %p149 = scmp.eq.s32.totalorder %s27, 1
      %p150 = por %p148, %p149
      %p151 = scmp.ne.s32.totalorder %s142, %s143
      %p152 = scmp.eq.s32.totalorder %s27, 0
      %p153 = por %p151, %p152
      %p154 = scmp.ne.s32.totalorder %s142, %s143
      %p155 = scmp.eq.s32.totalorder %s28, 1
      %p156 = por %p154, %p155
      %p158 = scmp.ne.s32.totalorder %s143, %s157
      %p159 = scmp.eq.s32.totalorder %s28, 0
      %p160 = por %p158, %p159
      %s162 = sadd.s32 %s161, 1
      %p165 = scmp.eq.s32.totalorder %s22, 1
      %p166 = scmp.ne.s32.totalorder %s161, %s163
      %p167 = scmp.eq.s32.totalorder %s22, 0
      %p168 = por %p166, %p167
      %p169 = scmp.ne.s32.totalorder %s161, %s163
      %p170 = scmp.eq.s32.totalorder %s27, 1
      %p171 = por %p169, %p170
      %p172 = scmp.ne.s32.totalorder %s163, %s164
      %p173 = scmp.eq.s32.totalorder %s27, 0
      %p174 = por %p172, %p173
      %p175 = scmp.ne.s32.totalorder %s163, %s164
      %p176 = scmp.eq.s32.totalorder %s28, 1
      %p177 = por %p175, %p176
      %p179 = scmp.ne.s32.totalorder %s164, %s178
      %p180 = scmp.eq.s32.totalorder %s28, 0
      %p181 = por %p179, %p180
      %s183 = sadd.s32 %s182, 1
      %p186 = scmp.eq.s32.totalorder %s22, 1
      %p187 = scmp.ne.s32.totalorder %s182, %s184
      %p188 = scmp.eq.s32.totalorder %s22, 0
      %p189 = por %p187, %p188
      %p190 = scmp.ne.s32.totalorder %s182, %s184
      %p191 = scmp.eq.s32.totalorder %s27, 1
      %p192 = por %p190, %p191
      %p193 = scmp.ne.s32.totalorder %s184, %s185
      %p194 = scmp.eq.s32.totalorder %s27, 0
      %p195 = por %p193, %p194
      %p196 = scmp.ne.s32.totalorder %s184, %s185
      %p197 = scmp.eq.s32.totalorder %s28, 1
      %p198 = por %p196, %p197
      %p200 = scmp.ne.s32.totalorder %s185, %s199
      %p201 = scmp.eq.s32.totalorder %s28, 0
      %p202 = por %p200, %p201
      %s204 = sadd.s32 %s203, 1
      %p207 = scmp.eq.s32.totalorder %s22, 1
      %p208 = scmp.ne.s32.totalorder %s203, %s205
      %p209 = scmp.eq.s32.totalorder %s22, 0
      %p210 = por %p208, %p209
      %p211 = scmp.ne.s32.totalorder %s203, %s205
      %p212 = scmp.eq.s32.totalorder %s27, 1
      %p213 = por %p211, %p212
      %p214 = scmp.ne.s32.totalorder %s205, %s206
      %p215 = scmp.eq.s32.totalorder %s27, 0
      %p216 = por %p214, %p215
      %p217 = scmp.ne.s32.totalorder %s205, %s206
      %p218 = scmp.eq.s32.totalorder %s28, 1
      %p219 = por %p217, %p218
      %p221 = scmp.ne.s32.totalorder %s206, %s220
      %p222 = scmp.eq.s32.totalorder %s28, 0
      %p223 = por %p221, %p222
      %s225 = sadd.s32 %s224, 1
      %p228 = scmp.eq.s32.totalorder %s22, 1
      %p229 = scmp.ne.s32.totalorder %s224, %s226
      %p230 = scmp.eq.s32.totalorder %s22, 0
      %p231 = por %p229, %p230
      %p232 = scmp.ne.s32.totalorder %s224, %s226
      %p233 = scmp.eq.s32.totalorder %s27, 1
      %p234 = por %p232, %p233
      %p235 = scmp.ne.s32.totalorder %s226, %s227
      %p236 = scmp.eq.s32.totalorder %s27, 0
      %p237 = por %p235, %p236
      %p238 = scmp.ne.s32.totalorder %s226, %s227
      %p239 = scmp.eq.s32.totalorder %s28, 1
      %p240 = por %p238, %p239
      %p242 = scmp.ne.s32.totalorder %s227, %s241
      %p243 = scmp.eq.s32.totalorder %s28, 0
      %p244 = por %p242, %p243
      %s246 = sadd.s32 %s245, 1
      %p249 = scmp.eq.s32.totalorder %s22, 1
      %p250 = scmp.ne.s32.totalorder %s245, %s247
      %p251 = scmp.eq.s32.totalorder %s22, 0
      %p252 = por %p250, %p251
      %p253 = scmp.ne.s32.totalorder %s245, %s247
      %p254 = scmp.eq.s32.totalorder %s27, 1
      %p255 = por %p253, %p254
      %p256 = scmp.ne.s32.totalorder %s247, %s248
      %p257 = scmp.eq.s32.totalorder %s27, 0
      %p258 = por %p256, %p257
      %p259 = scmp.ne.s32.totalorder %s247, %s248
      %p260 = scmp.eq.s32.totalorder %s28, 1
      %p261 = por %p259, %p260
      %p263 = scmp.ne.s32.totalorder %s248, %s262
      %p264 = scmp.eq.s32.totalorder %s28, 0
      %p265 = por %p263, %p264
      %s267 = sadd.s32 %s266, 1
      %p270 = scmp.eq.s32.totalorder %s22, 1
      %p271 = scmp.ne.s32.totalorder %s266, %s268
      %p272 = scmp.eq.s32.totalorder %s22, 0
      %p273 = por %p271, %p272
      %p274 = scmp.ne.s32.totalorder %s266, %s268
      %p275 = scmp.eq.s32.totalorder %s27, 1
      %p276 = por %p274, %p275
      %p277 = scmp.ne.s32.totalorder %s268, %s269
      %p278 = scmp.eq.s32.totalorder %s27, 0
      %p279 = por %p277, %p278
      %p280 = scmp.ne.s32.totalorder %s268, %s269
      %p281 = scmp.eq.s32.totalorder %s28, 1
      %p282 = por %p280, %p281
      %p284 = scmp.ne.s32.totalorder %s269, %s283
      %p285 = scmp.eq.s32.totalorder %s28, 0
      %p286 = por %p284, %p285
      %s288 = sadd.s32 %s287, 1
      %p291 = scmp.eq.s32.totalorder %s22, 1
      %p292 = scmp.ne.s32.totalorder %s287, %s289
      %p293 = scmp.eq.s32.totalorder %s22, 0
      %p294 = por %p292, %p293
      %p295 = scmp.ne.s32.totalorder %s287, %s289
      %p296 = scmp.eq.s32.totalorder %s27, 1
      %p297 = por %p295, %p296
      %p298 = scmp.ne.s32.totalorder %s289, %s290
      %p299 = scmp.eq.s32.totalorder %s27, 0
      %p300 = por %p298, %p299
      %p301 = scmp.ne.s32.totalorder %s289, %s290
      %p302 = scmp.eq.s32.totalorder %s28, 1
      %p303 = por %p301, %p302
      %p305 = scmp.ne.s32.totalorder %s290, %s304
      %p306 = scmp.eq.s32.totalorder %s28, 0
      %p307 = por %p305, %p306
      %s308 = ssub.s32 %s22, %s29
      %p309 = scmp.eq.s32.totalorder %s308, 0
      %s311 = sadd.s32 %s310, 1
      %s312 = scalar_select %p309, %s310, %s311
      %p315 = pneg %p309
      %p316 = scmp.eq.s32.totalorder %s22, 1
      %p317 = por %p315, %p316
      %p318 = scmp.ne.s32.totalorder %s310, %s313
      %p319 = scmp.eq.s32.totalorder %s22, 0
      %p320 = por %p318, %p319
      %p321 = scmp.ne.s32.totalorder %s310, %s313
      %p322 = scmp.eq.s32.totalorder %s27, 1
      %p323 = por %p321, %p322
      %p324 = scmp.ne.s32.totalorder %s313, %s314
      %p325 = scmp.eq.s32.totalorder %s27, 0
      %p326 = por %p324, %p325
      %p327 = scmp.ne.s32.totalorder %s313, %s314
      %p328 = scmp.eq.s32.totalorder %s28, 1
      %p329 = por %p327, %p328
      %p331 = scmp.ne.s32.totalorder %s314, %s330
      %p332 = scmp.eq.s32.totalorder %s28, 0
      %p333 = por %p331, %p332
      %p334 = scmp.le.s32.totalorder 1, %s22
      %p335 = scmp.lt.s32.totalorder %s22, 3
      %p336 = pnand %p334, %p335
      %p337 = pneg %p336
      // Predicated region
      $region9: #{tpu_custom_call.1} parent=5 // pred_check
        _
      $region10: #{tpu_custom_call.1} parent=5 // pred_check_branch
        %339 = sbr.rel (%p336) target = $region12
      $region11: #{tpu_custom_call.1} parent=5 // pred_region
        %s340 = ssub.s32 %s22, 1
        // Predicated region
        $region13: #{tpu_custom_call.1} parent=11 // pred_check
          %p341 = pneg %p69
        $region14: #{tpu_custom_call.1} parent=11 // pred_check_branch
          %343 = sbr.rel (%p341) target = $region16
        $region15: #{tpu_custom_call.1} parent=11 // pred_region
          _
        $region16: #{tpu_custom_call.1} parent=11 // pred_fallthru
          _
        // Predicated region
        $region17: #{tpu_custom_call.1} parent=11 // pred_check
          %p344 = pneg %p90
        $region18: #{tpu_custom_call.1} parent=11 // pred_check_branch
          %346 = sbr.rel (%p344) target = $region20
        $region19: #{tpu_custom_call.1} parent=11 // pred_region
          _
        $region20: #{tpu_custom_call.1} parent=11 // pred_fallthru
          _
        // Predicated region
        $region21: #{tpu_custom_call.1} parent=11 // pred_check
          %p347 = pneg %p111
        $region22: #{tpu_custom_call.1} parent=11 // pred_check_branch
          %349 = sbr.rel (%p347) target = $region24
        $region23: #{tpu_custom_call.1} parent=11 // pred_region
          _
        $region24: #{tpu_custom_call.1} parent=11 // pred_fallthru
          _
        // Predicated region
        $region25: #{tpu_custom_call.1} parent=11 // pred_check
          %p350 = pneg %p132
        $region26: #{tpu_custom_call.1} parent=11 // pred_check_branch
          %352 = sbr.rel (%p350) target = $region28
        $region27: #{tpu_custom_call.1} parent=11 // pred_region
          _
        $region28: #{tpu_custom_call.1} parent=11 // pred_fallthru
          _
        // Predicated region
        $region29: #{tpu_custom_call.1} parent=11 // pred_check
          %p353 = pneg %p153
        $region30: #{tpu_custom_call.1} parent=11 // pred_check_branch
          %355 = sbr.rel (%p353) target = $region32
        $region31: #{tpu_custom_call.1} parent=11 // pred_region
          _
        $region32: #{tpu_custom_call.1} parent=11 // pred_fallthru
          _
        // Predicated region
        $region33: #{tpu_custom_call.1} parent=11 // pred_check
          %p356 = pneg %p174
        $region34: #{tpu_custom_call.1} parent=11 // pred_check_branch
          %358 = sbr.rel (%p356) target = $region36
        $region35: #{tpu_custom_call.1} parent=11 // pred_region
          _
        $region36: #{tpu_custom_call.1} parent=11 // pred_fallthru
          _
        // Predicated region
        $region37: #{tpu_custom_call.1} parent=11 // pred_check
          %p359 = pneg %p195
        $region38: #{tpu_custom_call.1} parent=11 // pred_check_branch
          %361 = sbr.rel (%p359) target = $region40
        $region39: #{tpu_custom_call.1} parent=11 // pred_region
          _
        $region40: #{tpu_custom_call.1} parent=11 // pred_fallthru
          _
        // Predicated region
        $region41: #{tpu_custom_call.1} parent=11 // pred_check
          %p362 = pneg %p216
        $region42: #{tpu_custom_call.1} parent=11 // pred_check_branch
          %364 = sbr.rel (%p362) target = $region44
        $region43: #{tpu_custom_call.1} parent=11 // pred_region
          _
        $region44: #{tpu_custom_call.1} parent=11 // pred_fallthru
          _
        // Predicated region
        $region45: #{tpu_custom_call.1} parent=11 // pred_check
          %p365 = pneg %p237
        $region46: #{tpu_custom_call.1} parent=11 // pred_check_branch
          %367 = sbr.rel (%p365) target = $region48
        $region47: #{tpu_custom_call.1} parent=11 // pred_region
          _
        $region48: #{tpu_custom_call.1} parent=11 // pred_fallthru
          _
        // Predicated region
        $region49: #{tpu_custom_call.1} parent=11 // pred_check
          %p368 = pneg %p258
        $region50: #{tpu_custom_call.1} parent=11 // pred_check_branch
          %370 = sbr.rel (%p368) target = $region52
        $region51: #{tpu_custom_call.1} parent=11 // pred_region
          _
        $region52: #{tpu_custom_call.1} parent=11 // pred_fallthru
          _
        // Predicated region
        $region53: #{tpu_custom_call.1} parent=11 // pred_check
          %p371 = pneg %p279
        $region54: #{tpu_custom_call.1} parent=11 // pred_check_branch
          %373 = sbr.rel (%p371) target = $region56
        $region55: #{tpu_custom_call.1} parent=11 // pred_region
          _
        $region56: #{tpu_custom_call.1} parent=11 // pred_fallthru
          _
        // Predicated region
        $region57: #{tpu_custom_call.1} parent=11 // pred_check
          %p374 = pneg %p300
        $region58: #{tpu_custom_call.1} parent=11 // pred_check_branch
          %376 = sbr.rel (%p374) target = $region60
        $region59: #{tpu_custom_call.1} parent=11 // pred_region
          _
        $region60: #{tpu_custom_call.1} parent=11 // pred_fallthru
          _
      $region12: #{tpu_custom_call.1} parent=5 // pred_fallthru
        _
      %p377 = scmp.lt.s32.totalorder %s22, 2
      // Predicated region
      $region61: #{tpu_custom_call.1} parent=5 // pred_check
        %p378 = pneg %p377
      $region62: #{tpu_custom_call.1} parent=5 // pred_check_branch
        %380 = sbr.rel (%p378) target = $region64
      $region63: #{tpu_custom_call.1} parent=5 // pred_region
        // Predicated region
        $region65: #{tpu_custom_call.1} parent=63 // pred_check
          %p381 = pneg %p42
        $region66: #{tpu_custom_call.1} parent=63 // pred_check_branch
          %383 = sbr.rel (%p381) target = $region68
        $region67: #{tpu_custom_call.1} parent=63 // pred_region
          %p384 = scmp.lt.s32.totalorder %s22, 1
          %s385 = scalar_select %p384, %s22, 1
          %s386 = smul.addr %s385, 8
          %s387 = scalar_lea.vmem %s0, %s386
        $region68: #{tpu_custom_call.1} parent=63 // pred_fallthru
          _
      $region64: #{tpu_custom_call.1} parent=5 // pred_fallthru
        _
      %p388 = scmp.le.s32.totalorder 1, %s22
      %p389 = scmp.lt.s32.totalorder %s22, 3
      %p390 = pnand %p388, %p389
      %p391 = pneg %p390
      // Predicated region
      $region69: #{tpu_custom_call.1} parent=5 // pred_check
        _
      $region70: #{tpu_custom_call.1} parent=5 // pred_check_branch
        %393 = sbr.rel (%p390) target = $region72
      $region71: #{tpu_custom_call.1} parent=5 // pred_region
        %s394 = ssub.s32 %s22, 1
        %p395 = scmp.lt.s32.totalorder %s27, 1
        %s396 = scalar_select %p395, %s27, 1
        %s397 = smul.addr %s396, 8
        %s398 = scalar_lea.vmem %s0, %s397
        %p399 = pneg %p48
        %p400 = pneg %p45
        %p401 = pneg %p69
        %p402 = pneg %p66
        %p403 = pneg %p90
        %p404 = pneg %p87
        %p405 = pneg %p111
        %p406 = pneg %p108
        %p407 = pneg %p132
        %p408 = pneg %p129
        %p409 = pneg %p153
        %p410 = pneg %p150
        %p411 = pneg %p174
        %p412 = pneg %p171
        %p413 = pneg %p195
        %p414 = pneg %p192
        %p415 = pneg %p216
        %p416 = pneg %p213
        %p417 = pneg %p237
        %p418 = pneg %p234
        %p419 = pneg %p258
        %p420 = pneg %p255
        %p421 = pneg %p279
        %p422 = pneg %p276
        %p423 = pneg %p300
        %p424 = pneg %p297
        %p425 = pneg %p326
        %p426 = pneg %p323
        %s427 = sand.u32 %s313, 1
        %s428 = scalar_lea.sflag [#allocation3], %s427
        %s429 = sand.u32 %s313, 1
        %s430 = smul.addr %s429, 8
        %s431 = scalar_lea.vmem [#allocation2], %s430
        %p432 = scmp.lt.s32.totalorder %s27, 1
        %s433 = scalar_select %p432, %s27, 1
        %s434 = smul.addr %s433, 8
        %s435 = scalar_lea.vmem %s0, %s434
        %v437 = vld [vmem:[%s435] sm:$0xff]
        %v438 = vpack.c.bf16 %v437, %v437
        %v439 = vld [vmem:[%s1] sm:$0xf]
        %v440 = vld [vmem:[%s1 + $0x4] sm:$0xf]
        %v441 = vld [vmem:[%s1 + $0x8] sm:$0xf]
        %v442 = vld [vmem:[%s1 + $0xc] sm:$0xf]
        %v443 = vld [vmem:[%s2] sm:$0x1]
        %v445 = vlaneseq
        %v446 = vshrl.u32 %v445, 7
        %v447 = vsub.s32 0, %v446
        %v448 = vrot.slane %v443, %v447
        %v454 = vunpack.c.l.b16 %v439
        %v455 = vunpack.c.l.b16 %v440
        %v456 = vunpack.c.l.b16 %v441
        %v457 = vunpack.c.l.b16 %v442
        %v458 = vpack.c.b16 %v455, %v454
        %v459 = vpack.c.b16 %v457, %v456
        %vm462 = vcmask 261120
        %v464 = vsel %vm462, %v438, 0
        %466 = vmatprep.subr.bf16.mxu0 0
        %467 = vmatpush1.bf16.msra.mxu0 0
        %468 = vmatprep.subr.bf16.mxu0 0
        %469 = vmatpush1.bf16.msra.mxu0 0
        %470 = vmatprep.subr.bf16.mxu0 0
        %471 = vmatpush1.bf16.msra.mxu0 0
        %472 = vmatprep.subr.bf16.mxu0 0
        %473 = vmatpush1.bf16.msra.mxu0 0
        %474 = vmatprep.subr.bf16.mxu0 0
        %475 = vmatpush1.bf16.msra.mxu0 0
        %476 = vmatprep.subr.bf16.mxu0 0
        %477 = vmatpush1.bf16.msra.mxu0 0
        %478 = vmatprep.subr.bf16.mxu0 0
        %479 = vmatpush1.bf16.msra.mxu0 %v459
        %480 = vmatprep.subr.bf16.mxu0 0
        %481 = vmatpush1.bf16.msra.mxu0 %v458
        %482 = vmatprep.subr.bf16.mxu0 0
        %483 = vmatpush2.bf16.msra.mxu0 0
        %484 = vmatprep.subr.bf16.mxu0 0
        %485 = vmatpush2.bf16.msra.mxu0 0
        %486 = vmatprep.subr.bf16.mxu0 0
        %487 = vmatpush2.bf16.msra.mxu0 0
        %488 = vmatprep.subr.bf16.mxu0 0
        %489 = vmatpush2.bf16.msra.mxu0 0
        %490 = vmatprep.subr.bf16.mxu0 0
        %491 = vmatpush2.bf16.msra.mxu0 0
        %492 = vmatprep.subr.bf16.mxu0 0
        %493 = vmatpush2.bf16.msra.mxu0 0
        %494 = vmatprep.subr.bf16.mxu0 0
        %495 = vmatpush2.bf16.msra.mxu0 0
        %496 = vmatprep.subr.bf16.mxu0 0
        %497 = vmatpush2.bf16.msra.mxu0 0
        %498 = vmatprep.mubr.bf16.mxu0 0
        %499 = vmatmul.mubr.bf16.gmra.mxu0 %v464
        %v500 = vpop.f32.mrf.mxu0
        %v501 = vadd.f32 %v448, %v500
        %v502 = vpop.f32.mrf.mxu0
        %v503 = vpop.f32.mrf.mxu0
        %v504 = vpop.f32.mrf.mxu0
        %505 = vdwg.mxu0
        %v506 = vpack.c.bf16 %v501, %v501
        %v507 = vld [vmem:[%s3] sm:$0xf]
        %v508 = vld [vmem:[%s3 + $0x4] sm:$0xf]
        %v509 = vld [vmem:[%s3 + $0x8] sm:$0xf]
        %v510 = vld [vmem:[%s3 + $0xc] sm:$0xf]
        %512 = vrot.lane.b32.xlu0 %v506, 96
        %v513 = vpop.permute.xlu0 %512
        %vm514 = vcmask 64512
        %v516 = vsel %vm514, %v506, 0
        %v519 = vsel %vm514, %v513, 0
        %521 = vmatprep.subr.bf16.mxu0 0
        %522 = vmatpush1.bf16.xpose.msra.mxu0 0
        %523 = vmatprep.subr.bf16.mxu0 0
        %524 = vmatpush1.bf16.xpose.msra.mxu0 0
        %525 = vmatprep.subr.bf16.mxu0 0
        %526 = vmatpush1.bf16.xpose.msra.mxu0 0
        %527 = vmatprep.subr.bf16.mxu0 0
        %528 = vmatpush1.bf16.xpose.msra.mxu0 0
        %529 = vmatprep.subr.bf16.mxu0 0
        %530 = vmatpush1.bf16.xpose.msra.mxu0 0
        %531 = vmatprep.subr.bf16.mxu0 0
        %532 = vmatpush1.bf16.xpose.msra.mxu0 0
        %533 = vmatprep.subr.bf16.mxu0 0
        %534 = vmatpush1.bf16.xpose.msra.mxu0 0
        %535 = vmatprep.subr.bf16.mxu0 0
        %536 = vmatpush1.bf16.xpose.msra.mxu0 %v519
        %537 = vmatprep.subr.bf16.mxu0 0
        %538 = vmatpush2.bf16.xpose.msra.mxu0 0
        %539 = vmatprep.subr.bf16.mxu0 0
        %540 = vmatpush2.bf16.xpose.msra.mxu0 0
        %541 = vmatprep.subr.bf16.mxu0 0
        %542 = vmatpush2.bf16.xpose.msra.mxu0 0
        %543 = vmatprep.subr.bf16.mxu0 0
        %544 = vmatpush2.bf16.xpose.msra.mxu0 0
        %545 = vmatprep.subr.bf16.mxu0 0
        %546 = vmatpush2.bf16.xpose.msra.mxu0 0
        %547 = vmatprep.subr.bf16.mxu0 0
        %548 = vmatpush2.bf16.xpose.msra.mxu0 0
        %549 = vmatprep.subr.bf16.mxu0 0
        %550 = vmatpush2.bf16.xpose.msra.mxu0 0
        %551 = vmatprep.subr.bf16.mxu0 0
        %552 = vmatpush2.bf16.xpose.msra.mxu0 0
        %553 = vmatprep.mubr.bf16.mxu0 0
        %554 = vmatmul.mubr.bf16.gmra.mxu0 %v516
        %v555 = vpop.f32.mrf.mxu0
        %v556 = vadd.f32 0.0, %v555
        %v557 = vpop.f32.mrf.mxu0
        %v558 = vpop.f32.mrf.mxu0
        %v559 = vpop.f32.mrf.mxu0
        %560 = vdwg.mxu0
        %v561 = vsel %vm514, %v556, -inf
        %562 = vmax.xlane.f32.xlu0 %v561
        %v563 = vpop.xlane.xlu0 %562
        %v564 = vsub.f32 %v556, %v563
        %v565 = vmul.f32 %v564, 1.442695
        %v566 = vpow.pop %v565
        %v567 = vsel %vm514, %v566, 0.0
        %568 = vadd.xlane.f32.xlu0 %v567
        %v569 = vpop.xlane.xlu0 %568
        %v570 = vrcp.pop %v569
        %v571 = vmul.f32 %v566, %v570
        %v572 = vpack.c.bf16 %v571, %v571
        %573 = vrot.lane.b32.xlu0 %v506, 64
        %v574 = vpop.permute.xlu0 %573
        %v576 = vsel %vm514, %v572, 0
        %vm578 = vcmask 1043456
        %v580 = vsel %vm578, %v574, 0
        %582 = vmatprep.subr.bf16.mxu0 0
        %583 = vmatpush1.bf16.msra.mxu0 0
        %584 = vmatprep.subr.bf16.mxu0 0
        %585 = vmatpush1.bf16.msra.mxu0 0
        %586 = vmatprep.subr.bf16.mxu0 0
        %587 = vmatpush1.bf16.msra.mxu0 0
        %588 = vmatprep.subr.bf16.mxu0 0
        %589 = vmatpush1.bf16.msra.mxu0 0
        %590 = vmatprep.subr.bf16.mxu0 0
        %591 = vmatpush1.bf16.msra.mxu0 0
        %592 = vmatprep.subr.bf16.mxu0 0
        %593 = vmatpush1.bf16.msra.mxu0 0
        %594 = vmatprep.subr.bf16.mxu0 0
        %595 = vmatpush1.bf16.msra.mxu0 0
        %596 = vmatprep.subr.bf16.mxu0 0
        %597 = vmatpush1.bf16.msra.mxu0 %v580
        %598 = vmatprep.subr.bf16.mxu0 0
        %599 = vmatpush2.bf16.msra.mxu0 0
        %600 = vmatprep.subr.bf16.mxu0 0
        %601 = vmatpush2.bf16.msra.mxu0 0
        %602 = vmatprep.subr.bf16.mxu0 0
        %603 = vmatpush2.bf16.msra.mxu0 0
        %604 = vmatprep.subr.bf16.mxu0 0
        %605 = vmatpush2.bf16.msra.mxu0 0
        %606 = vmatprep.subr.bf16.mxu0 0
        %607 = vmatpush2.bf16.msra.mxu0 0
        %608 = vmatprep.subr.bf16.mxu0 0
        %609 = vmatpush2.bf16.msra.mxu0 0
        %610 = vmatprep.subr.bf16.mxu0 0
        %611 = vmatpush2.bf16.msra.mxu0 0
        %612 = vmatprep.subr.bf16.mxu0 0
        %613 = vmatpush2.bf16.msra.mxu0 0
        %614 = vmatprep.mubr.bf16.mxu0 0
        %615 = vmatmul.mubr.bf16.gmra.mxu0 %v576
        %v616 = vpop.f32.mrf.mxu0
        %v617 = vadd.f32 0.0, %v616
        %v618 = vpop.f32.mrf.mxu0
        %v619 = vpop.f32.mrf.mxu0
        %v620 = vpop.f32.mrf.mxu0
        %621 = vdwg.mxu0
        %v622 = vpack.c.bf16 %v617, %v617
        %623 = vrot.lane.b32.xlu0 %v506, 120
        %v624 = vpop.permute.xlu0 %623
        %625 = vrot.lane.b32.xlu0 %v506, 88
        %v626 = vpop.permute.xlu0 %625
        %v628 = vsel %vm514, %v624, 0
        %v631 = vsel %vm514, %v626, 0
        %633 = vmatprep.subr.bf16.mxu0 0
        %634 = vmatpush1.bf16.xpose.msra.mxu0 0
        %635 = vmatprep.subr.bf16.mxu0 0
        %636 = vmatpush1.bf16.xpose.msra.mxu0 0
        %637 = vmatprep.subr.bf16.mxu0 0
        %638 = vmatpush1.bf16.xpose.msra.mxu0 0
        %639 = vmatprep.subr.bf16.mxu0 0
        %640 = vmatpush1.bf16.xpose.msra.mxu0 0
        %641 = vmatprep.subr.bf16.mxu0 0
        %642 = vmatpush1.bf16.xpose.msra.mxu0 0
        %643 = vmatprep.subr.bf16.mxu0 0
        %644 = vmatpush1.bf16.xpose.msra.mxu0 0
        %645 = vmatprep.subr.bf16.mxu0 0
        %646 = vmatpush1.bf16.xpose.msra.mxu0 0
        %647 = vmatprep.subr.bf16.mxu0 0
        %648 = vmatpush1.bf16.xpose.msra.mxu0 %v631
        %649 = vmatprep.subr.bf16.mxu0 0
        %650 = vmatpush2.bf16.xpose.msra.mxu0 0
        %651 = vmatprep.subr.bf16.mxu0 0
        %652 = vmatpush2.bf16.xpose.msra.mxu0 0
        %653 = vmatprep.subr.bf16.mxu0 0
        %654 = vmatpush2.bf16.xpose.msra.mxu0 0
        %655 = vmatprep.subr.bf16.mxu0 0
        %656 = vmatpush2.bf16.xpose.msra.mxu0 0
        %657 = vmatprep.subr.bf16.mxu0 0
        %658 = vmatpush2.bf16.xpose.msra.mxu0 0
        %659 = vmatprep.subr.bf16.mxu0 0
        %660 = vmatpush2.bf16.xpose.msra.mxu0 0
        %661 = vmatprep.subr.bf16.mxu0 0
        %662 = vmatpush2.bf16.xpose.msra.mxu0 0
        %663 = vmatprep.subr.bf16.mxu0 0
        %664 = vmatpush2.bf16.xpose.msra.mxu0 0
        %665 = vmatprep.mubr.bf16.mxu0 0
        %666 = vmatmul.mubr.bf16.gmra.mxu0 %v628
        %v667 = vpop.f32.mrf.mxu0
        %v668 = vadd.f32 0.0, %v667
        %v669 = vpop.f32.mrf.mxu0
        %v670 = vpop.f32.mrf.mxu0
        %v671 = vpop.f32.mrf.mxu0
        %672 = vdwg.mxu0
        %v673 = vsel %vm514, %v668, -inf
        %674 = vmax.xlane.f32.xlu0 %v673
        %v675 = vpop.xlane.xlu0 %674
        %v676 = vsub.f32 %v668, %v675
        %v677 = vmul.f32 %v676, 1.442695
        %v678 = vpow.pop %v677
        %v679 = vsel %vm514, %v678, 0.0
        %680 = vadd.xlane.f32.xlu0 %v679
        %v681 = vpop.xlane.xlu0 %680
        %v682 = vrcp.pop %v681
        %v683 = vmul.f32 %v678, %v682
        %v684 = vpack.c.bf16 %v683, %v683
        %685 = vrot.lane.b32.xlu0 %v506, 56
        %v686 = vpop.permute.xlu0 %685
        %v688 = vsel %vm514, %v684, 0
        %v691 = vsel %vm578, %v686, 0
        %693 = vmatprep.subr.bf16.mxu0 0
        %694 = vmatpush1.bf16.msra.mxu0 0
        %695 = vmatprep.subr.bf16.mxu0 0
        %696 = vmatpush1.bf16.msra.mxu0 0
        %697 = vmatprep.subr.bf16.mxu0 0
        %698 = vmatpush1.bf16.msra.mxu0 0
        %699 = vmatprep.subr.bf16.mxu0 0
        %700 = vmatpush1.bf16.msra.mxu0 0
        %701 = vmatprep.subr.bf16.mxu0 0
        %702 = vmatpush1.bf16.msra.mxu0 0
        %703 = vmatprep.subr.bf16.mxu0 0
        %704 = vmatpush1.bf16.msra.mxu0 0
        %705 = vmatprep.subr.bf16.mxu0 0
        %706 = vmatpush1.bf16.msra.mxu0 0
        %707 = vmatprep.subr.bf16.mxu0 0
        %708 = vmatpush1.bf16.msra.mxu0 %v691
        %709 = vmatprep.subr.bf16.mxu0 0
        %710 = vmatpush2.bf16.msra.mxu0 0
        %711 = vmatprep.subr.bf16.mxu0 0
        %712 = vmatpush2.bf16.msra.mxu0 0
        %713 = vmatprep.subr.bf16.mxu0 0
        %714 = vmatpush2.bf16.msra.mxu0 0
        %715 = vmatprep.subr.bf16.mxu0 0
        %716 = vmatpush2.bf16.msra.mxu0 0
        %717 = vmatprep.subr.bf16.mxu0 0
        %718 = vmatpush2.bf16.msra.mxu0 0
        %719 = vmatprep.subr.bf16.mxu0 0
        %720 = vmatpush2.bf16.msra.mxu0 0
        %721 = vmatprep.subr.bf16.mxu0 0
        %722 = vmatpush2.bf16.msra.mxu0 0
        %723 = vmatprep.subr.bf16.mxu0 0
        %724 = vmatpush2.bf16.msra.mxu0 0
        %725 = vmatprep.mubr.bf16.mxu0 0
        %726 = vmatmul.mubr.bf16.gmra.mxu0 %v688
        %v727 = vpop.f32.mrf.mxu0
        %v728 = vadd.f32 0.0, %v727
        %v729 = vpop.f32.mrf.mxu0
        %v730 = vpop.f32.mrf.mxu0
        %v731 = vpop.f32.mrf.mxu0
        %732 = vdwg.mxu0
        %v733 = vpack.c.bf16 %v728, %v728
        %v735 = vsel %vm514, %v733, 0
        %v738 = vsel %vm578, %v508, 0
        %740 = vmatprep.subr.bf16.mxu0 0
        %741 = vmatpush1.bf16.msra.mxu0 0
        %742 = vmatprep.subr.bf16.mxu0 0
        %743 = vmatpush1.bf16.msra.mxu0 0
        %744 = vmatprep.subr.bf16.mxu0 0
        %745 = vmatpush1.bf16.msra.mxu0 0
        %746 = vmatprep.subr.bf16.mxu0 0
        %747 = vmatpush1.bf16.msra.mxu0 0
        %748 = vmatprep.subr.bf16.mxu0 0
        %749 = vmatpush1.bf16.msra.mxu0 0
        %750 = vmatprep.subr.bf16.mxu0 0
        %751 = vmatpush1.bf16.msra.mxu0 0
        %752 = vmatprep.subr.bf16.mxu0 0
        %753 = vmatpush1.bf16.msra.mxu0 0
        %754 = vmatprep.subr.bf16.mxu0 0
        %755 = vmatpush1.bf16.msra.mxu0 %v738
        %756 = vmatprep.subr.bf16.mxu0 0
        %757 = vmatpush2.bf16.msra.mxu0 0
        %758 = vmatprep.subr.bf16.mxu0 0
        %759 = vmatpush2.bf16.msra.mxu0 0
        %760 = vmatprep.subr.bf16.mxu0 0
        %761 = vmatpush2.bf16.msra.mxu0 0
        %762 = vmatprep.subr.bf16.mxu0 0
        %763 = vmatpush2.bf16.msra.mxu0 0
        %764 = vmatprep.subr.bf16.mxu0 0
        %765 = vmatpush2.bf16.msra.mxu0 0
        %766 = vmatprep.subr.bf16.mxu0 0
        %767 = vmatpush2.bf16.msra.mxu0 0
        %768 = vmatprep.subr.bf16.mxu0 0
        %769 = vmatpush2.bf16.msra.mxu0 0
        %770 = vmatprep.subr.bf16.mxu0 0
        %771 = vmatpush2.bf16.msra.mxu0 0
        %772 = vmatprep.mubr.bf16.mxu0 0
        %773 = vmatmul.mubr.bf16.gmra.mxu0 %v735
        %v774 = vpop.f32.mrf.mxu0
        %v775 = vadd.f32 0.0, %v774
        %v776 = vpop.f32.mrf.mxu0
        %v777 = vpop.f32.mrf.mxu0
        %v778 = vpop.f32.mrf.mxu0
        %779 = vdwg.mxu0
        %v781 = vsel %vm514, %v622, 0
        %v784 = vsel %vm578, %v507, 0
        %786 = vmatprep.subr.bf16.mxu0 0
        %787 = vmatpush1.bf16.msra.mxu0 0
        %788 = vmatprep.subr.bf16.mxu0 0
        %789 = vmatpush1.bf16.msra.mxu0 0
        %790 = vmatprep.subr.bf16.mxu0 0
        %791 = vmatpush1.bf16.msra.mxu0 0
        %792 = vmatprep.subr.bf16.mxu0 0
        %793 = vmatpush1.bf16.msra.mxu0 0
        %794 = vmatprep.subr.bf16.mxu0 0
        %795 = vmatpush1.bf16.msra.mxu0 0
        %796 = vmatprep.subr.bf16.mxu0 0
        %797 = vmatpush1.bf16.msra.mxu0 0
        %798 = vmatprep.subr.bf16.mxu0 0
        %799 = vmatpush1.bf16.msra.mxu0 0
        %800 = vmatprep.subr.bf16.mxu0 0
        %801 = vmatpush1.bf16.msra.mxu0 %v784
        %802 = vmatprep.subr.bf16.mxu0 0
        %803 = vmatpush2.bf16.msra.mxu0 0
        %804 = vmatprep.subr.bf16.mxu0 0
        %805 = vmatpush2.bf16.msra.mxu0 0
        %806 = vmatprep.subr.bf16.mxu0 0
        %807 = vmatpush2.bf16.msra.mxu0 0
        %808 = vmatprep.subr.bf16.mxu0 0
        %809 = vmatpush2.bf16.msra.mxu0 0
        %810 = vmatprep.subr.bf16.mxu0 0
        %811 = vmatpush2.bf16.msra.mxu0 0
        %812 = vmatprep.subr.bf16.mxu0 0
        %813 = vmatpush2.bf16.msra.mxu0 0
        %814 = vmatprep.subr.bf16.mxu0 0
        %815 = vmatpush2.bf16.msra.mxu0 0
        %816 = vmatprep.subr.bf16.mxu0 0
        %817 = vmatpush2.bf16.msra.mxu0 0
        %818 = vmatprep.mubr.bf16.mxu0 0
        %819 = vmatmul.mubr.bf16.gmra.mxu0 %v781
        %v820 = vpop.f32.mrf.mxu0
        %v821 = vadd.f32 %v775, %v820
        %v822 = vpop.f32.mrf.mxu0
        %v823 = vpop.f32.mrf.mxu0
        %v824 = vpop.f32.mrf.mxu0
        %825 = vdwg.mxu0
        %826 = vrot.lane.b32.xlu0 %v506, 112
        %v827 = vpop.permute.xlu0 %826
        %828 = vrot.lane.b32.xlu0 %v506, 80
        %v829 = vpop.permute.xlu0 %828
        %v831 = vsel %vm514, %v827, 0
        %v834 = vsel %vm514, %v829, 0
        %836 = vmatprep.subr.bf16.mxu0 0
        %837 = vmatpush1.bf16.xpose.msra.mxu0 0
        %838 = vmatprep.subr.bf16.mxu0 0
        %839 = vmatpush1.bf16.xpose.msra.mxu0 0
        %840 = vmatprep.subr.bf16.mxu0 0
        %841 = vmatpush1.bf16.xpose.msra.mxu0 0
        %842 = vmatprep.subr.bf16.mxu0 0
        %843 = vmatpush1.bf16.xpose.msra.mxu0 0
        %844 = vmatprep.subr.bf16.mxu0 0
        %845 = vmatpush1.bf16.xpose.msra.mxu0 0
        %846 = vmatprep.subr.bf16.mxu0 0
        %847 = vmatpush1.bf16.xpose.msra.mxu0 0
        %848 = vmatprep.subr.bf16.mxu0 0
        %849 = vmatpush1.bf16.xpose.msra.mxu0 0
        %850 = vmatprep.subr.bf16.mxu0 0
        %851 = vmatpush1.bf16.xpose.msra.mxu0 %v834
        %852 = vmatprep.subr.bf16.mxu0 0
        %853 = vmatpush2.bf16.xpose.msra.mxu0 0
        %854 = vmatprep.subr.bf16.mxu0 0
        %855 = vmatpush2.bf16.xpose.msra.mxu0 0
        %856 = vmatprep.subr.bf16.mxu0 0
        %857 = vmatpush2.bf16.xpose.msra.mxu0 0
        %858 = vmatprep.subr.bf16.mxu0 0
        %859 = vmatpush2.bf16.xpose.msra.mxu0 0
        %860 = vmatprep.subr.bf16.mxu0 0
        %861 = vmatpush2.bf16.xpose.msra.mxu0 0
        %862 = vmatprep.subr.bf16.mxu0 0
        %863 = vmatpush2.bf16.xpose.msra.mxu0 0
        %864 = vmatprep.subr.bf16.mxu0 0
        %865 = vmatpush2.bf16.xpose.msra.mxu0 0
        %866 = vmatprep.subr.bf16.mxu0 0
        %867 = vmatpush2.bf16.xpose.msra.mxu0 0
        %868 = vmatprep.mubr.bf16.mxu0 0
        %869 = vmatmul.mubr.bf16.gmra.mxu0 %v831
        %v870 = vpop.f32.mrf.mxu0
        %v871 = vadd.f32 0.0, %v870
        %v872 = vpop.f32.mrf.mxu0
        %v873 = vpop.f32.mrf.mxu0
        %v874 = vpop.f32.mrf.mxu0
        %875 = vdwg.mxu0
        %v876 = vsel %vm514, %v871, -inf
        %877 = vmax.xlane.f32.xlu0 %v876
        %v878 = vpop.xlane.xlu0 %877
        %v879 = vsub.f32 %v871, %v878
        %v880 = vmul.f32 %v879, 1.442695
        %v881 = vpow.pop %v880
        %v882 = vsel %vm514, %v881, 0.0
        %883 = vadd.xlane.f32.xlu0 %v882
        %v884 = vpop.xlane.xlu0 %883
        %v885 = vrcp.pop %v884
        %v886 = vmul.f32 %v881, %v885
        %v887 = vpack.c.bf16 %v886, %v886
        %888 = vrot.lane.b32.xlu0 %v506, 48
        %v889 = vpop.permute.xlu0 %888
        %v891 = vsel %vm514, %v887, 0
        %v894 = vsel %vm578, %v889, 0
        %896 = vmatprep.subr.bf16.mxu0 0
        %897 = vmatpush1.bf16.msra.mxu0 0
        %898 = vmatprep.subr.bf16.mxu0 0
        %899 = vmatpush1.bf16.msra.mxu0 0
        %900 = vmatprep.subr.bf16.mxu0 0
        %901 = vmatpush1.bf16.msra.mxu0 0
        %902 = vmatprep.subr.bf16.mxu0 0
        %903 = vmatpush1.bf16.msra.mxu0 0
        %904 = vmatprep.subr.bf16.mxu0 0
        %905 = vmatpush1.bf16.msra.mxu0 0
        %906 = vmatprep.subr.bf16.mxu0 0
        %907 = vmatpush1.bf16.msra.mxu0 0
        %908 = vmatprep.subr.bf16.mxu0 0
        %909 = vmatpush1.bf16.msra.mxu0 0
        %910 = vmatprep.subr.bf16.mxu0 0
        %911 = vmatpush1.bf16.msra.mxu0 %v894
        %912 = vmatprep.subr.bf16.mxu0 0
        %913 = vmatpush2.bf16.msra.mxu0 0
        %914 = vmatprep.subr.bf16.mxu0 0
        %915 = vmatpush2.bf16.msra.mxu0 0
        %916 = vmatprep.subr.bf16.mxu0 0
        %917 = vmatpush2.bf16.msra.mxu0 0
        %918 = vmatprep.subr.bf16.mxu0 0
        %919 = vmatpush2.bf16.msra.mxu0 0
        %920 = vmatprep.subr.bf16.mxu0 0
        %921 = vmatpush2.bf16.msra.mxu0 0
        %922 = vmatprep.subr.bf16.mxu0 0
        %923 = vmatpush2.bf16.msra.mxu0 0
        %924 = vmatprep.subr.bf16.mxu0 0
        %925 = vmatpush2.bf16.msra.mxu0 0
        %926 = vmatprep.subr.bf16.mxu0 0
        %927 = vmatpush2.bf16.msra.mxu0 0
        %928 = vmatprep.mubr.bf16.mxu0 0
        %929 = vmatmul.mubr.bf16.gmra.mxu0 %v891
        %v930 = vpop.f32.mrf.mxu0
        %v931 = vadd.f32 0.0, %v930
        %v932 = vpop.f32.mrf.mxu0
        %v933 = vpop.f32.mrf.mxu0
        %v934 = vpop.f32.mrf.mxu0
        %935 = vdwg.mxu0
        %v936 = vpack.c.bf16 %v931, %v931
        %v938 = vsel %vm514, %v936, 0
        %v941 = vsel %vm578, %v509, 0
        %943 = vmatprep.subr.bf16.mxu0 0
        %944 = vmatpush1.bf16.msra.mxu0 0
        %945 = vmatprep.subr.bf16.mxu0 0
        %946 = vmatpush1.bf16.msra.mxu0 0
        %947 = vmatprep.subr.bf16.mxu0 0
        %948 = vmatpush1.bf16.msra.mxu0 0
        %949 = vmatprep.subr.bf16.mxu0 0
        %950 = vmatpush1.bf16.msra.mxu0 0
        %951 = vmatprep.subr.bf16.mxu0 0
        %952 = vmatpush1.bf16.msra.mxu0 0
        %953 = vmatprep.subr.bf16.mxu0 0
        %954 = vmatpush1.bf16.msra.mxu0 0
        %955 = vmatprep.subr.bf16.mxu0 0
        %956 = vmatpush1.bf16.msra.mxu0 0
        %957 = vmatprep.subr.bf16.mxu0 0
        %958 = vmatpush1.bf16.msra.mxu0 %v941
        %959 = vmatprep.subr.bf16.mxu0 0
        %960 = vmatpush2.bf16.msra.mxu0 0
        %961 = vmatprep.subr.bf16.mxu0 0
        %962 = vmatpush2.bf16.msra.mxu0 0
        %963 = vmatprep.subr.bf16.mxu0 0
        %964 = vmatpush2.bf16.msra.mxu0 0
        %965 = vmatprep.subr.bf16.mxu0 0
        %966 = vmatpush2.bf16.msra.mxu0 0
        %967 = vmatprep.subr.bf16.mxu0 0
        %968 = vmatpush2.bf16.msra.mxu0 0
        %969 = vmatprep.subr.bf16.mxu0 0
        %970 = vmatpush2.bf16.msra.mxu0 0
        %971 = vmatprep.subr.bf16.mxu0 0
        %972 = vmatpush2.bf16.msra.mxu0 0
        %973 = vmatprep.subr.bf16.mxu0 0
        %974 = vmatpush2.bf16.msra.mxu0 0
        %975 = vmatprep.mubr.bf16.mxu0 0
        %976 = vmatmul.mubr.bf16.gmra.mxu0 %v938
        %v977 = vpop.f32.mrf.mxu0
        %v978 = vadd.f32 0.0, %v977
        %v979 = vpop.f32.mrf.mxu0
        %v980 = vpop.f32.mrf.mxu0
        %v981 = vpop.f32.mrf.mxu0
        %982 = vdwg.mxu0
        %v983 = vadd.f32 %v821, %v978
        %984 = vrot.lane.b32.xlu0 %v506, 104
        %v985 = vpop.permute.xlu0 %984
        %986 = vrot.lane.b32.xlu0 %v506, 72
        %v987 = vpop.permute.xlu0 %986
        %v989 = vsel %vm514, %v985, 0
        %v992 = vsel %vm514, %v987, 0
        %994 = vmatprep.subr.bf16.mxu0 0
        %995 = vmatpush1.bf16.xpose.msra.mxu0 0
        %996 = vmatprep.subr.bf16.mxu0 0
        %997 = vmatpush1.bf16.xpose.msra.mxu0 0
        %998 = vmatprep.subr.bf16.mxu0 0
        %999 = vmatpush1.bf16.xpose.msra.mxu0 0
        %1000 = vmatprep.subr.bf16.mxu0 0
        %1001 = vmatpush1.bf16.xpose.msra.mxu0 0
        %1002 = vmatprep.subr.bf16.mxu0 0
        %1003 = vmatpush1.bf16.xpose.msra.mxu0 0
        %1004 = vmatprep.subr.bf16.mxu0 0
        %1005 = vmatpush1.bf16.xpose.msra.mxu0 0
        %1006 = vmatprep.subr.bf16.mxu0 0
        %1007 = vmatpush1.bf16.xpose.msra.mxu0 0
        %1008 = vmatprep.subr.bf16.mxu0 0
        %1009 = vmatpush1.bf16.xpose.msra.mxu0 %v992
        %1010 = vmatprep.subr.bf16.mxu0 0
        %1011 = vmatpush2.bf16.xpose.msra.mxu0 0
        %1012 = vmatprep.subr.bf16.mxu0 0
        %1013 = vmatpush2.bf16.xpose.msra.mxu0 0
        %1014 = vmatprep.subr.bf16.mxu0 0
        %1015 = vmatpush2.bf16.xpose.msra.mxu0 0
        %1016 = vmatprep.subr.bf16.mxu0 0
        %1017 = vmatpush2.bf16.xpose.msra.mxu0 0
        %1018 = vmatprep.subr.bf16.mxu0 0
        %1019 = vmatpush2.bf16.xpose.msra.mxu0 0
        %1020 = vmatprep.subr.bf16.mxu0 0
        %1021 = vmatpush2.bf16.xpose.msra.mxu0 0
        %1022 = vmatprep.subr.bf16.mxu0 0
        %1023 = vmatpush2.bf16.xpose.msra.mxu0 0
        %1024 = vmatprep.subr.bf16.mxu0 0
        %1025 = vmatpush2.bf16.xpose.msra.mxu0 0
        %1026 = vmatprep.mubr.bf16.mxu0 0
        %1027 = vmatmul.mubr.bf16.gmra.mxu0 %v989
        %v1028 = vpop.f32.mrf.mxu0
        %v1029 = vadd.f32 0.0, %v1028
        %v1030 = vpop.f32.mrf.mxu0
        %v1031 = vpop.f32.mrf.mxu0
        %v1032 = vpop.f32.mrf.mxu0
        %1033 = vdwg.mxu0
        %v1034 = vsel %vm514, %v1029, -inf
        %1035 = vmax.xlane.f32.xlu0 %v1034
        %v1036 = vpop.xlane.xlu0 %1035
        %v1037 = vsub.f32 %v1029, %v1036
        %v1038 = vmul.f32 %v1037, 1.442695
        %v1039 = vpow.pop %v1038
        %v1040 = vsel %vm514, %v1039, 0.0
        %1041 = vadd.xlane.f32.xlu0 %v1040
        %v1042 = vpop.xlane.xlu0 %1041
        %v1043 = vrcp.pop %v1042
        %v1044 = vmul.f32 %v1039, %v1043
        %v1045 = vpack.c.bf16 %v1044, %v1044
        %1046 = vrot.lane.b32.xlu0 %v506, 40
        %v1047 = vpop.permute.xlu0 %1046
        %v1049 = vsel %vm514, %v1045, 0
        %v1052 = vsel %vm578, %v1047, 0
        %1054 = vmatprep.subr.bf16.mxu0 0
        %1055 = vmatpush1.bf16.msra.mxu0 0
        %1056 = vmatprep.subr.bf16.mxu0 0
        %1057 = vmatpush1.bf16.msra.mxu0 0
        %1058 = vmatprep.subr.bf16.mxu0 0
        %1059 = vmatpush1.bf16.msra.mxu0 0
        %1060 = vmatprep.subr.bf16.mxu0 0
        %1061 = vmatpush1.bf16.msra.mxu0 0
        %1062 = vmatprep.subr.bf16.mxu0 0
        %1063 = vmatpush1.bf16.msra.mxu0 0
        %1064 = vmatprep.subr.bf16.mxu0 0
        %1065 = vmatpush1.bf16.msra.mxu0 0
        %1066 = vmatprep.subr.bf16.mxu0 0
        %1067 = vmatpush1.bf16.msra.mxu0 0
        %1068 = vmatprep.subr.bf16.mxu0 0
        %1069 = vmatpush1.bf16.msra.mxu0 %v1052
        %1070 = vmatprep.subr.bf16.mxu0 0
        %1071 = vmatpush2.bf16.msra.mxu0 0
        %1072 = vmatprep.subr.bf16.mxu0 0
        %1073 = vmatpush2.bf16.msra.mxu0 0
        %1074 = vmatprep.subr.bf16.mxu0 0
        %1075 = vmatpush2.bf16.msra.mxu0 0
        %1076 = vmatprep.subr.bf16.mxu0 0
        %1077 = vmatpush2.bf16.msra.mxu0 0
        %1078 = vmatprep.subr.bf16.mxu0 0
        %1079 = vmatpush2.bf16.msra.mxu0 0
        %1080 = vmatprep.subr.bf16.mxu0 0
        %1081 = vmatpush2.bf16.msra.mxu0 0
        %1082 = vmatprep.subr.bf16.mxu0 0
        %1083 = vmatpush2.bf16.msra.mxu0 0
        %1084 = vmatprep.subr.bf16.mxu0 0
        %1085 = vmatpush2.bf16.msra.mxu0 0
        %1086 = vmatprep.mubr.bf16.mxu0 0
        %1087 = vmatmul.mubr.bf16.gmra.mxu0 %v1049
        %v1088 = vpop.f32.mrf.mxu0
        %v1089 = vadd.f32 0.0, %v1088
        %v1090 = vpop.f32.mrf.mxu0
        %v1091 = vpop.f32.mrf.mxu0
        %v1092 = vpop.f32.mrf.mxu0
        %1093 = vdwg.mxu0
        %v1094 = vpack.c.bf16 %v1089, %v1089
        %v1096 = vsel %vm514, %v1094, 0
        %v1099 = vsel %vm578, %v510, 0
        %1101 = vmatprep.subr.bf16.mxu0 0
        %1102 = vmatpush1.bf16.msra.mxu0 0
        %1103 = vmatprep.subr.bf16.mxu0 0
        %1104 = vmatpush1.bf16.msra.mxu0 0
        %1105 = vmatprep.subr.bf16.mxu0 0
        %1106 = vmatpush1.bf16.msra.mxu0 0
        %1107 = vmatprep.subr.bf16.mxu0 0
        %1108 = vmatpush1.bf16.msra.mxu0 0
        %1109 = vmatprep.subr.bf16.mxu0 0
        %1110 = vmatpush1.bf16.msra.mxu0 0
        %1111 = vmatprep.subr.bf16.mxu0 0
        %1112 = vmatpush1.bf16.msra.mxu0 0
        %1113 = vmatprep.subr.bf16.mxu0 0
        %1114 = vmatpush1.bf16.msra.mxu0 0
        %1115 = vmatprep.subr.bf16.mxu0 0
        %1116 = vmatpush1.bf16.msra.mxu0 %v1099
        %1117 = vmatprep.subr.bf16.mxu0 0
        %1118 = vmatpush2.bf16.msra.mxu0 0
        %1119 = vmatprep.subr.bf16.mxu0 0
        %1120 = vmatpush2.bf16.msra.mxu0 0
        %1121 = vmatprep.subr.bf16.mxu0 0
        %1122 = vmatpush2.bf16.msra.mxu0 0
        %1123 = vmatprep.subr.bf16.mxu0 0
        %1124 = vmatpush2.bf16.msra.mxu0 0
        %1125 = vmatprep.subr.bf16.mxu0 0
        %1126 = vmatpush2.bf16.msra.mxu0 0
        %1127 = vmatprep.subr.bf16.mxu0 0
        %1128 = vmatpush2.bf16.msra.mxu0 0
        %1129 = vmatprep.subr.bf16.mxu0 0
        %1130 = vmatpush2.bf16.msra.mxu0 0
        %1131 = vmatprep.subr.bf16.mxu0 0
        %1132 = vmatpush2.bf16.msra.mxu0 0
        %1133 = vmatprep.mubr.bf16.mxu0 0
        %1134 = vmatmul.mubr.bf16.gmra.mxu0 %v1096
        %v1135 = vpop.f32.mrf.mxu0
        %v1136 = vadd.f32 0.0, %v1135
        %v1137 = vpop.f32.mrf.mxu0
        %v1138 = vpop.f32.mrf.mxu0
        %v1139 = vpop.f32.mrf.mxu0
        %1140 = vdwg.mxu0
        %v1141 = vadd.f32 %v983, %v1136
        %v1142 = vld [vmem:[%s4] sm:$0x1]
        %v1144 = vlaneseq
        %v1145 = vshrl.u32 %v1144, 7
        %v1146 = vsub.s32 0, %v1145
        %v1147 = vrot.slane %v1142, %v1146
        %v1149 = vadd.f32 %v1141, %v1147
        %v1150 = vadd.f32 %v437, %v1149
        %v1151 = vsel %vm462, %v1150, 0.0
        %1152 = vadd.xlane.f32.xlu0 %v1151
        %v1153 = vpop.xlane.xlu0 %1152
        %v1154 = vrcp.pop 32.0
        %v1155 = vmul.f32 %v1153, %v1154
        %v1156 = vsub.f32 %v1150, %v1155
        %v1157 = vmul.f32 %v1156, %v1156
        %v1158 = vsel %vm462, %v1157, 0.0
        %1159 = vadd.xlane.f32.xlu0 %v1158
        %v1160 = vpop.xlane.xlu0 %1159
        %v1161 = vmul.f32 %v1160, %v1154
        %v1162 = vadd.f32 %v1161, 1e-05
        %v1163 = vrsqrt.pop %v1162
        %v1164 = vmul.f32 %v1156, %v1163
        %v1165 = vld [vmem:[%s5] sm:$0x1]
        %v1167 = vlaneseq
        %v1168 = vshrl.u32 %v1167, 7
        %v1169 = vsub.s32 0, %v1168
        %v1170 = vrot.slane %v1165, %v1169
        %v1172 = vmul.f32 %v1164, %v1170
        %v1173 = vld [vmem:[%s6] sm:$0x1]
        %v1175 = vlaneseq
        %v1176 = vshrl.u32 %v1175, 7
        %v1177 = vsub.s32 0, %v1176
        %v1178 = vrot.slane %v1173, %v1177
        %v1180 = vadd.f32 %v1172, %v1178
        %v1181 = vpack.c.bf16 %v1180, %v1180
        %v1182 = vld [vmem:[%s7] sm:$0xf]
        %v1183 = vld [vmem:[%s7 + $0x4] sm:$0xf]
        %v1184 = vld [vmem:[%s7 + $0x8] sm:$0xf]
        %v1185 = vld [vmem:[%s7 + $0xc] sm:$0xf]
        %v1186 = vld [vmem:[%s8] sm:$0x1]
        %v1188 = vlaneseq
        %v1189 = vshrl.u32 %v1188, 7
        %v1190 = vsub.s32 0, %v1189
        %v1191 = vrot.slane %v1186, %v1190
        %v1197 = vunpack.c.l.b16 %v1182
        %v1198 = vunpack.c.l.b16 %v1183
        %v1199 = vunpack.c.l.b16 %v1184
        %v1200 = vunpack.c.l.b16 %v1185
        %v1201 = vpack.c.b16 %v1198, %v1197
        %v1202 = vpack.c.b16 %v1200, %v1199
        %v1206 = vsel %vm462, %v1181, 0
        %1208 = vmatprep.subr.bf16.mxu0 0
        %1209 = vmatpush1.bf16.msra.mxu0 0
        %1210 = vmatprep.subr.bf16.mxu0 0
        %1211 = vmatpush1.bf16.msra.mxu0 0
        %1212 = vmatprep.subr.bf16.mxu0 0
        %1213 = vmatpush1.bf16.msra.mxu0 0
        %1214 = vmatprep.subr.bf16.mxu0 0
        %1215 = vmatpush1.bf16.msra.mxu0 0
        %1216 = vmatprep.subr.bf16.mxu0 0
        %1217 = vmatpush1.bf16.msra.mxu0 0
        %1218 = vmatprep.subr.bf16.mxu0 0
        %1219 = vmatpush1.bf16.msra.mxu0 0
        %1220 = vmatprep.subr.bf16.mxu0 0
        %1221 = vmatpush1.bf16.msra.mxu0 %v1202
        %1222 = vmatprep.subr.bf16.mxu0 0
        %1223 = vmatpush1.bf16.msra.mxu0 %v1201
        %1224 = vmatprep.subr.bf16.mxu0 0
        %1225 = vmatpush2.bf16.msra.mxu0 0
        %1226 = vmatprep.subr.bf16.mxu0 0
        %1227 = vmatpush2.bf16.msra.mxu0 0
        %1228 = vmatprep.subr.bf16.mxu0 0
        %1229 = vmatpush2.bf16.msra.mxu0 0
        %1230 = vmatprep.subr.bf16.mxu0 0
        %1231 = vmatpush2.bf16.msra.mxu0 0
        %1232 = vmatprep.subr.bf16.mxu0 0
        %1233 = vmatpush2.bf16.msra.mxu0 0
        %1234 = vmatprep.subr.bf16.mxu0 0
        %1235 = vmatpush2.bf16.msra.mxu0 0
        %1236 = vmatprep.subr.bf16.mxu0 0
        %1237 = vmatpush2.bf16.msra.mxu0 0
        %1238 = vmatprep.subr.bf16.mxu0 0
        %1239 = vmatpush2.bf16.msra.mxu0 0
        %1240 = vmatprep.mubr.bf16.mxu0 0
        %1241 = vmatmul.mubr.bf16.gmra.mxu0 %v1206
        %v1242 = vpop.f32.mrf.mxu0
        %v1243 = vadd.f32 %v1191, %v1242
        %v1244 = vpop.f32.mrf.mxu0
        %v1245 = vpop.f32.mrf.mxu0
        %v1246 = vpop.f32.mrf.mxu0
        %1247 = vdwg.mxu0
        %vm1248 = vcmp.ge.f32.partialorder %v1243, 0.0
        %v1249 = vmul.f32 %v1243, 0.01
        %v1250 = vsel %vm1248, %v1243, %v1249
        %v1251 = vpack.c.bf16 %v1250, %v1250
        %v1252 = vld [vmem:[%s9] sm:$0xf]
        %v1253 = vld [vmem:[%s9 + $0x4] sm:$0xf]
        %v1254 = vld [vmem:[%s9 + $0x8] sm:$0xf]
        %v1255 = vld [vmem:[%s9 + $0xc] sm:$0xf]
        %v1256 = vld [vmem:[%s9 + $0x10] sm:$0xf]
        %v1257 = vld [vmem:[%s9 + $0x14] sm:$0xf]
        %v1258 = vld [vmem:[%s9 + $0x18] sm:$0xf]
        %v1259 = vld [vmem:[%s9 + $0x1c] sm:$0xf]
        %v1260 = vld [vmem:[%s9 + $0x20] sm:$0xf]
        %v1261 = vld [vmem:[%s9 + $0x24] sm:$0xf]
        %v1262 = vld [vmem:[%s9 + $0x28] sm:$0xf]
        %v1263 = vld [vmem:[%s9 + $0x2c] sm:$0xf]
        %v1264 = vld [vmem:[%s9 + $0x30] sm:$0xf]
        %v1265 = vld [vmem:[%s9 + $0x34] sm:$0xf]
        %v1266 = vld [vmem:[%s9 + $0x38] sm:$0xf]
        %v1267 = vld [vmem:[%s9 + $0x3c] sm:$0xf]
        %v1268 = vld [vmem:[%s10] sm:$0x1]
        %v1270 = vlaneseq
        %v1271 = vshrl.u32 %v1270, 7
        %v1272 = vsub.s32 0, %v1271
        %v1273 = vrot.slane %v1268, %v1272
        %v1291 = vunpack.c.l.b16 %v1252
        %v1292 = vunpack.c.l.b16 %v1253
        %v1293 = vunpack.c.l.b16 %v1254
        %v1294 = vunpack.c.l.b16 %v1255
        %v1295 = vunpack.c.l.b16 %v1256
        %v1296 = vunpack.c.l.b16 %v1257
        %v1297 = vunpack.c.l.b16 %v1258
        %v1298 = vunpack.c.l.b16 %v1259
        %v1299 = vunpack.c.l.b16 %v1260
        %v1300 = vunpack.c.l.b16 %v1261
        %v1301 = vunpack.c.l.b16 %v1262
        %v1302 = vunpack.c.l.b16 %v1263
        %v1303 = vunpack.c.l.b16 %v1264
        %v1304 = vunpack.c.l.b16 %v1265
        %v1305 = vunpack.c.l.b16 %v1266
        %v1306 = vunpack.c.l.b16 %v1267
        %v1307 = vpack.c.b16 %v1292, %v1291
        %v1308 = vpack.c.b16 %v1294, %v1293
        %v1309 = vpack.c.b16 %v1296, %v1295
        %v1310 = vpack.c.b16 %v1298, %v1297
        %v1311 = vpack.c.b16 %v1300, %v1299
        %v1312 = vpack.c.b16 %v1302, %v1301
        %v1313 = vpack.c.b16 %v1304, %v1303
        %v1314 = vpack.c.b16 %v1306, %v1305
        %1323 = vmatprep.subr.bf16.mxu0 0
        %1324 = vmatpush1.bf16.msra.mxu0 %v1314
        %1325 = vmatprep.subr.bf16.mxu0 0
        %1326 = vmatpush1.bf16.msra.mxu0 %v1313
        %1327 = vmatprep.subr.bf16.mxu0 0
        %1328 = vmatpush1.bf16.msra.mxu0 %v1312
        %1329 = vmatprep.subr.bf16.mxu0 0
        %1330 = vmatpush1.bf16.msra.mxu0 %v1311
        %1331 = vmatprep.subr.bf16.mxu0 0
        %1332 = vmatpush1.bf16.msra.mxu0 %v1310
        %1333 = vmatprep.subr.bf16.mxu0 0
        %1334 = vmatpush1.bf16.msra.mxu0 %v1309
        %1335 = vmatprep.subr.bf16.mxu0 0
        %1336 = vmatpush1.bf16.msra.mxu0 %v1308
        %1337 = vmatprep.subr.bf16.mxu0 0
        %1338 = vmatpush1.bf16.msra.mxu0 %v1307
        %1339 = vmatprep.subr.bf16.mxu0 0
        %1340 = vmatpush2.bf16.msra.mxu0 0
        %1341 = vmatprep.subr.bf16.mxu0 0
        %1342 = vmatpush2.bf16.msra.mxu0 0
        %1343 = vmatprep.subr.bf16.mxu0 0
        %1344 = vmatpush2.bf16.msra.mxu0 0
        %1345 = vmatprep.subr.bf16.mxu0 0
        %1346 = vmatpush2.bf16.msra.mxu0 0
        %1347 = vmatprep.subr.bf16.mxu0 0
        %1348 = vmatpush2.bf16.msra.mxu0 0
        %1349 = vmatprep.subr.bf16.mxu0 0
        %1350 = vmatpush2.bf16.msra.mxu0 0
        %1351 = vmatprep.subr.bf16.mxu0 0
        %1352 = vmatpush2.bf16.msra.mxu0 0
        %1353 = vmatprep.subr.bf16.mxu0 0
        %1354 = vmatpush2.bf16.msra.mxu0 0
        %1355 = vmatprep.mubr.bf16.mxu0 0
        %1356 = vmatmul.mubr.bf16.gmra.mxu0 %v1251
        %v1357 = vpop.f32.mrf.mxu0
        %v1358 = vadd.f32 %v1273, %v1357
        %v1359 = vpop.f32.mrf.mxu0
        %v1360 = vpop.f32.mrf.mxu0
        %v1361 = vpop.f32.mrf.mxu0
        %1362 = vdwg.mxu0
        %v1363 = vadd.f32 %v1180, %v1358
        %v1364 = vsel %vm462, %v1363, 0.0
        %1365 = vadd.xlane.f32.xlu0 %v1364
        %v1366 = vpop.xlane.xlu0 %1365
        %v1367 = vmul.f32 %v1366, %v1154
        %v1368 = vsub.f32 %v1363, %v1367
        %v1369 = vmul.f32 %v1368, %v1368
        %v1370 = vsel %vm462, %v1369, 0.0
        %1371 = vadd.xlane.f32.xlu0 %v1370
        %v1372 = vpop.xlane.xlu0 %1371
        %v1373 = vmul.f32 %v1372, %v1154
        %v1374 = vadd.f32 %v1373, 1e-05
        %v1375 = vrsqrt.pop %v1374
        %v1376 = vmul.f32 %v1368, %v1375
        %v1377 = vld [vmem:[%s11] sm:$0x1]
        %v1379 = vlaneseq
        %v1380 = vshrl.u32 %v1379, 7
        %v1381 = vsub.s32 0, %v1380
        %v1382 = vrot.slane %v1377, %v1381
        %v1384 = vmul.f32 %v1376, %v1382
        %v1385 = vld [vmem:[%s12] sm:$0x1]
        %v1387 = vlaneseq
        %v1388 = vshrl.u32 %v1387, 7
        %v1389 = vsub.s32 0, %v1388
        %v1390 = vrot.slane %v1385, %v1389
        %v1392 = vadd.f32 %v1384, %v1390
        %1393 = vst.msk [vmem:[%s431] sm:$0xff] %vm462, %v1392
        %s1394 = sand.u32 %s313, 1
        %s1395 = scalar_lea.sflag [#allocation3], %s1394
        %s1396 = sand.u32 %s313, 1
        %s1397 = smul.addr %s1396, 8
        %s1398 = scalar_lea.vmem [#allocation2], %s1397
        // Predicated region
        $region73: #{tpu_custom_call.1} parent=71 // pred_check
          %p1399 = pneg %p323
        $region74: #{tpu_custom_call.1} parent=71 // pred_check_branch
          %1401 = sbr.rel (%p1399) target = $region76
        $region75: #{tpu_custom_call.1} parent=71 // pred_region
          %s1403 = ssub.s32 128, 128
          %1404 = vsyncadd %s1395, %s1403
          %s1405 = smul.addr %s27, 128
          %s1406 = scalar_lea.hbm %s13, %s1405
          %s1408 = sshll.u32 %s1398, 4
          %s1409 = int_to_ptr.vmem [resolvable:$true] %s1408
          %1411 = dma.vmem_to_hbm [thread:$0]  %s1409, 128, %s1406, %s1395
        $region76: #{tpu_custom_call.1} parent=71 // pred_fallthru
          _
      $region72: #{tpu_custom_call.1} parent=5 // pred_fallthru
        _
      %p1412 = scmp.le.s32.totalorder 2, %s22
      // Predicated region
      $region77: #{tpu_custom_call.1} parent=5 // pred_check
        %p1413 = pneg %p1412
      $region78: #{tpu_custom_call.1} parent=5 // pred_check_branch
        %1415 = sbr.rel (%p1413) target = $region80
      $region79: #{tpu_custom_call.1} parent=5 // pred_region
        %s1416 = ssub.s32 %s22, 2
        // Predicated region
        $region81: #{tpu_custom_call.1} parent=79 // pred_check
          %p1417 = pneg %p329
        $region82: #{tpu_custom_call.1} parent=79 // pred_check_branch
          %1419 = sbr.rel (%p1417) target = $region84
        $region83: #{tpu_custom_call.1} parent=79 // pred_region
          %s1420 = sand.u32 %s314, 1
          %s1421 = scalar_lea.sflag [#allocation3], %s1420
          %s1422 = sand.u32 %s314, 1
          %s1423 = smul.addr %s1422, 8
          %s1424 = scalar_lea.vmem [#allocation2], %s1423
          %1425 = dma.done %s1421, 128
        $region84: #{tpu_custom_call.1} parent=79 // pred_fallthru
          _
      $region80: #{tpu_custom_call.1} parent=5 // pred_fallthru
        _
    $region6: #{tpu_custom_call.1} parent=1 // loop_footer
      %s26 = sadd.s32 1, %s22
    $region7: #{tpu_custom_call.1} parent=1 // loop_footer_branch
      %21 = sbr.rel target = $region3
    $region8: #{tpu_custom_call.1} parent=1 // loop_exit
      _
    %1426 = vsyncpa [#allocation3], 1
    %s1427 = scalar_lea.sflag [#allocation3], 1
    %1428 = vsyncpa %s1427, 1

// kernel: tpu_custom_call.1
$region0: #{tpu_custom_call.1}
  #allocation0 [shape = 'u32[]', space=smem, size = 0x4, offset = 0x4, fixed_abs, tag = 'smem constant byte address 0x4 - core index']
  #allocation1 [shape = 'u32[144,128]{1,0:T(1,128)}', space=vmem, size = 0x12000, scoped, tag = 'internal scratch']
  %s0 = inlined_call_operand.vmem [shape: f32[16,32], index: 0, kind: input, shape index: {}]
  %s1 = inlined_call_operand.vmem [shape: bf16[32,96], index: 1, kind: input, shape index: {}]
  %s2 = inlined_call_operand.vmem [shape: f32[1,96], index: 2, kind: input, shape index: {}]
  %s3 = inlined_call_operand.vmem [shape: bf16[32,32], index: 3, kind: input, shape index: {}]
  %s4 = inlined_call_operand.vmem [shape: f32[1,32], index: 4, kind: input, shape index: {}]
  %s5 = inlined_call_operand.vmem [shape: f32[1,32], index: 5, kind: input, shape index: {}]
  %s6 = inlined_call_operand.vmem [shape: f32[1,32], index: 6, kind: input, shape index: {}]
  %s7 = inlined_call_operand.vmem [shape: bf16[32,128], index: 7, kind: input, shape index: {}]
  %s8 = inlined_call_operand.vmem [shape: f32[1,128], index: 8, kind: input, shape index: {}]
  %s9 = inlined_call_operand.vmem [shape: bf16[128,32], index: 9, kind: input, shape index: {}]
  %s10 = inlined_call_operand.vmem [shape: f32[1,32], index: 10, kind: input, shape index: {}]
  %s11 = inlined_call_operand.vmem [shape: f32[1,32], index: 11, kind: input, shape index: {}]
  %s12 = inlined_call_operand.vmem [shape: f32[1,32], index: 12, kind: input, shape index: {}]
  %s13 = inlined_call_operand.hbm [shape: f32[16,32], index: 13, kind: output, shape index: {}]
  %s14 = sld [smem:[#allocation0]]
  $region85: #{tpu_custom_call.1} parent=0
    _
  %s16 = ssub.s32 1, %s14
  %s17 = scalar_select 0, %s16, %s14
  $region1: #{tpu_custom_call.1} parent=0
    #allocation2 [shape = 'u8[8192]{0}', space=vmem, size = 0x2000, scoped, tag = 'output window, operand 0']
    #allocation3 [shape = 's32[2]{0}', space=sflag, size = 0x8, scoped, tag = 'scoped memory for tpu_custom_call.1']
    %18 = vsyncpa [#allocation3], 0
    %s19 = scalar_lea.sflag [#allocation3], 1
    %20 = vsyncpa %s19, 0
    loop: start=0, step=1, limit=4
    $region2: #{tpu_custom_call.1} parent=1 // loop_pre_header
      _
    $region3: #{tpu_custom_call.1} parent=1 // loop_header
      %s22 = sphi 0, %s26
      %p23 = scmp.ge.s32.totalorder %s22, 4
      %s32 = sphi 0, %s34
      %s35 = sphi 0, %s32
      %s36 = sphi 0, %s35
      %s52 = sphi 0, %s36
      %s56 = sphi 0, %s56
      %s58 = sphi 0, %s56
      %s59 = sphi 0, %s58
      %s73 = sphi 0, %s59
      %s77 = sphi 0, %s77
      %s79 = sphi 0, %s77
      %s80 = sphi 0, %s79
      %s94 = sphi 0, %s80
      %s98 = sphi 0, %s98
      %s100 = sphi 0, %s98
      %s101 = sphi 0, %s100
      %s115 = sphi 0, %s101
      %s119 = sphi 0, %s119
      %s121 = sphi 0, %s119
      %s122 = sphi 0, %s121
      %s136 = sphi 0, %s122
      %s140 = sphi 0, %s140
      %s142 = sphi 0, %s140
      %s143 = sphi 0, %s142
      %s157 = sphi 0, %s143
      %s161 = sphi 0, %s161
      %s163 = sphi 0, %s161
      %s164 = sphi 0, %s163
      %s178 = sphi 0, %s164
      %s182 = sphi 0, %s182
      %s184 = sphi 0, %s182
      %s185 = sphi 0, %s184
      %s199 = sphi 0, %s185
      %s203 = sphi 0, %s203
      %s205 = sphi 0, %s203
      %s206 = sphi 0, %s205
      %s220 = sphi 0, %s206
      %s224 = sphi 0, %s224
      %s226 = sphi 0, %s224
      %s227 = sphi 0, %s226
      %s241 = sphi 0, %s227
      %s245 = sphi 0, %s245
      %s247 = sphi 0, %s245
      %s248 = sphi 0, %s247
      %s262 = sphi 0, %s248
      %s266 = sphi 0, %s266
      %s268 = sphi 0, %s266
      %s269 = sphi 0, %s268
      %s283 = sphi 0, %s269
      %s287 = sphi 0, %s287
      %s289 = sphi 0, %s287
      %s290 = sphi 0, %s289
      %s304 = sphi 0, %s290
      %s310 = sphi 0, %s312
      %s313 = sphi 0, %s310
      %s314 = sphi 0, %s313
      %s330 = sphi 0, %s314
    $region4: #{tpu_custom_call.1} parent=1 // loop_header_branch
      %25 = sbr.rel (%p23) target = $region8
    $region5: #{tpu_custom_call.1} parent=1 // loop_body
      %s27 = ssub.s32 %s22, 1
      %s28 = ssub.s32 %s22, 2
      %s29 = sadd.s32 %s22, 1
      %s30 = ssub.s32 %s22, %s29
      %p31 = scmp.eq.s32.totalorder %s30, 0
      %s33 = sadd.s32 %s32, 1
      %s34 = scalar_select %p31, %s32, %s33
      %p37 = pneg %p31
      %p38 = scmp.eq.s32.totalorder %s22, 1
      %p39 = por %p37, %p38
      %p40 = scmp.ne.s32.totalorder %s32, %s35
      %p41 = scmp.eq.s32.totalorder %s22, 0
      %p42 = por %p40, %p41
      %p43 = scmp.ne.s32.totalorder %s32, %s35
      %p44 = scmp.eq.s32.totalorder %s27, 1
      %p45 = por %p43, %p44
      %p46 = scmp.ne.s32.totalorder %s35, %s36
      %p47 = scmp.eq.s32.totalorder %s27, 0
      %p48 = por %p46, %p47
      %p49 = scmp.ne.s32.totalorder %s35, %s36
      %p50 = scmp.eq.s32.totalorder %s28, 1
      %p51 = por %p49, %p50
      %p53 = scmp.ne.s32.totalorder %s36, %s52
      %p54 = scmp.eq.s32.totalorder %s28, 0
      %p55 = por %p53, %p54
      %s57 = sadd.s32 %s56, 1
      %p60 = scmp.eq.s32.totalorder %s22, 1
      %p61 = scmp.ne.s32.totalorder %s56, %s58
      %p62 = scmp.eq.s32.totalorder %s22, 0
      %p63 = por %p61, %p62
      %p64 = scmp.ne.s32.totalorder %s56, %s58
      %p65 = scmp.eq.s32.totalorder %s27, 1
      %p66 = por %p64, %p65
      %p67 = scmp.ne.s32.totalorder %s58, %s59
      %p68 = scmp.eq.s32.totalorder %s27, 0
      %p69 = por %p67, %p68
      %p70 = scmp.ne.s32.totalorder %s58, %s59
      %p71 = scmp.eq.s32.totalorder %s28, 1
      %p72 = por %p70, %p71
      %p74 = scmp.ne.s32.totalorder %s59, %s73
      %p75 = scmp.eq.s32.totalorder %s28, 0
      %p76 = por %p74, %p75
      %s78 = sadd.s32 %s77, 1
      %p81 = scmp.eq.s32.totalorder %s22, 1
      %p82 = scmp.ne.s32.totalorder %s77, %s79
      %p83 = scmp.eq.s32.totalorder %s22, 0
      %p84 = por %p82, %p83
      %p85 = scmp.ne.s32.totalorder %s77, %s79
      %p86 = scmp.eq.s32.totalorder %s27, 1
      %p87 = por %p85, %p86
      %p88 = scmp.ne.s32.totalorder %s79, %s80
      %p89 = scmp.eq.s32.totalorder %s27, 0
      %p90 = por %p88, %p89
      %p91 = scmp.ne.s32.totalorder %s79, %s80
      %p92 = scmp.eq.s32.totalorder %s28, 1
      %p93 = por %p91, %p92
      %p95 = scmp.ne.s32.totalorder %s80, %s94
      %p96 = scmp.eq.s32.totalorder %s28, 0
      %p97 = por %p95, %p96
      %s99 = sadd.s32 %s98, 1
      %p102 = scmp.eq.s32.totalorder %s22, 1
      %p103 = scmp.ne.s32.totalorder %s98, %s100
      %p104 = scmp.eq.s32.totalorder %s22, 0
      %p105 = por %p103, %p104
      %p106 = scmp.ne.s32.totalorder %s98, %s100
      %p107 = scmp.eq.s32.totalorder %s27, 1
      %p108 = por %p106, %p107
      %p109 = scmp.ne.s32.totalorder %s100, %s101
      %p110 = scmp.eq.s32.totalorder %s27, 0
      %p111 = por %p109, %p110
      %p112 = scmp.ne.s32.totalorder %s100, %s101
      %p113 = scmp.eq.s32.totalorder %s28, 1
      %p114 = por %p112, %p113
      %p116 = scmp.ne.s32.totalorder %s101, %s115
      %p117 = scmp.eq.s32.totalorder %s28, 0
      %p118 = por %p116, %p117
      %s120 = sadd.s32 %s119, 1
      %p123 = scmp.eq.s32.totalorder %s22, 1
      %p124 = scmp.ne.s32.totalorder %s119, %s121
      %p125 = scmp.eq.s32.totalorder %s22, 0
      %p126 = por %p124, %p125
      %p127 = scmp.ne.s32.totalorder %s119, %s121
      %p128 = scmp.eq.s32.totalorder %s27, 1
      %p129 = por %p127, %p128
      %p130 = scmp.ne.s32.totalorder %s121, %s122
      %p131 = scmp.eq.s32.totalorder %s27, 0
      %p132 = por %p130, %p131
      %p133 = scmp.ne.s32.totalorder %s121, %s122
      %p134 = scmp.eq.s32.totalorder %s28, 1
      %p135 = por %p133, %p134
      %p137 = scmp.ne.s32.totalorder %s122, %s136
      %p138 = scmp.eq.s32.totalorder %s28, 0
      %p139 = por %p137, %p138
      %s141 = sadd.s32 %s140, 1
      %p144 = scmp.eq.s32.totalorder %s22, 1
      %p145 = scmp.ne.s32.totalorder %s140, %s142
      %p146 = scmp.eq.s32.totalorder %s22, 0
      %p147 = por %p145, %p146
      %p148 = scmp.ne.s32.totalorder %s140, %s142
      %p149 = scmp.eq.s32.totalorder %s27, 1
      %p150 = por %p148, %p149
      %p151 = scmp.ne.s32.totalorder %s142, %s143
      %p152 = scmp.eq.s32.totalorder %s27, 0
      %p153 = por %p151, %p152
      %p154 = scmp.ne.s32.totalorder %s142, %s143
      %p155 = scmp.eq.s32.totalorder %s28, 1
      %p156 = por %p154, %p155
      %p158 = scmp.ne.s32.totalorder %s143, %s157
      %p159 = scmp.eq.s32.totalorder %s28, 0
      %p160 = por %p158, %p159
      %s162 = sadd.s32 %s161, 1
      %p165 = scmp.eq.s32.totalorder %s22, 1
      %p166 = scmp.ne.s32.totalorder %s161, %s163
      %p167 = scmp.eq.s32.totalorder %s22, 0
      %p168 = por %p166, %p167
      %p169 = scmp.ne.s32.totalorder %s161, %s163
      %p170 = scmp.eq.s32.totalorder %s27, 1
      %p171 = por %p169, %p170
      %p172 = scmp.ne.s32.totalorder %s163, %s164
      %p173 = scmp.eq.s32.totalorder %s27, 0
      %p174 = por %p172, %p173
      %p175 = scmp.ne.s32.totalorder %s163, %s164
      %p176 = scmp.eq.s32.totalorder %s28, 1
      %p177 = por %p175, %p176
      %p179 = scmp.ne.s32.totalorder %s164, %s178
      %p180 = scmp.eq.s32.totalorder %s28, 0
      %p181 = por %p179, %p180
      %s183 = sadd.s32 %s182, 1
      %p186 = scmp.eq.s32.totalorder %s22, 1
      %p187 = scmp.ne.s32.totalorder %s182, %s184
      %p188 = scmp.eq.s32.totalorder %s22, 0
      %p189 = por %p187, %p188
      %p190 = scmp.ne.s32.totalorder %s182, %s184
      %p191 = scmp.eq.s32.totalorder %s27, 1
      %p192 = por %p190, %p191
      %p193 = scmp.ne.s32.totalorder %s184, %s185
      %p194 = scmp.eq.s32.totalorder %s27, 0
      %p195 = por %p193, %p194
      %p196 = scmp.ne.s32.totalorder %s184, %s185
      %p197 = scmp.eq.s32.totalorder %s28, 1
      %p198 = por %p196, %p197
      %p200 = scmp.ne.s32.totalorder %s185, %s199
      %p201 = scmp.eq.s32.totalorder %s28, 0
      %p202 = por %p200, %p201
      %s204 = sadd.s32 %s203, 1
      %p207 = scmp.eq.s32.totalorder %s22, 1
      %p208 = scmp.ne.s32.totalorder %s203, %s205
      %p209 = scmp.eq.s32.totalorder %s22, 0
      %p210 = por %p208, %p209
      %p211 = scmp.ne.s32.totalorder %s203, %s205
      %p212 = scmp.eq.s32.totalorder %s27, 1
      %p213 = por %p211, %p212
      %p214 = scmp.ne.s32.totalorder %s205, %s206
      %p215 = scmp.eq.s32.totalorder %s27, 0
      %p216 = por %p214, %p215
      %p217 = scmp.ne.s32.totalorder %s205, %s206
      %p218 = scmp.eq.s32.totalorder %s28, 1
      %p219 = por %p217, %p218
      %p221 = scmp.ne.s32.totalorder %s206, %s220
      %p222 = scmp.eq.s32.totalorder %s28, 0
      %p223 = por %p221, %p222
      %s225 = sadd.s32 %s224, 1
      %p228 = scmp.eq.s32.totalorder %s22, 1
      %p229 = scmp.ne.s32.totalorder %s224, %s226
      %p230 = scmp.eq.s32.totalorder %s22, 0
      %p231 = por %p229, %p230
      %p232 = scmp.ne.s32.totalorder %s224, %s226
      %p233 = scmp.eq.s32.totalorder %s27, 1
      %p234 = por %p232, %p233
      %p235 = scmp.ne.s32.totalorder %s226, %s227
      %p236 = scmp.eq.s32.totalorder %s27, 0
      %p237 = por %p235, %p236
      %p238 = scmp.ne.s32.totalorder %s226, %s227
      %p239 = scmp.eq.s32.totalorder %s28, 1
      %p240 = por %p238, %p239
      %p242 = scmp.ne.s32.totalorder %s227, %s241
      %p243 = scmp.eq.s32.totalorder %s28, 0
      %p244 = por %p242, %p243
      %s246 = sadd.s32 %s245, 1
      %p249 = scmp.eq.s32.totalorder %s22, 1
      %p250 = scmp.ne.s32.totalorder %s245, %s247
      %p251 = scmp.eq.s32.totalorder %s22, 0
      %p252 = por %p250, %p251
      %p253 = scmp.ne.s32.totalorder %s245, %s247
      %p254 = scmp.eq.s32.totalorder %s27, 1
      %p255 = por %p253, %p254
      %p256 = scmp.ne.s32.totalorder %s247, %s248
      %p257 = scmp.eq.s32.totalorder %s27, 0
      %p258 = por %p256, %p257
      %p259 = scmp.ne.s32.totalorder %s247, %s248
      %p260 = scmp.eq.s32.totalorder %s28, 1
      %p261 = por %p259, %p260
      %p263 = scmp.ne.s32.totalorder %s248, %s262
      %p264 = scmp.eq.s32.totalorder %s28, 0
      %p265 = por %p263, %p264
      %s267 = sadd.s32 %s266, 1
      %p270 = scmp.eq.s32.totalorder %s22, 1
      %p271 = scmp.ne.s32.totalorder %s266, %s268
      %p272 = scmp.eq.s32.totalorder %s22, 0
      %p273 = por %p271, %p272
      %p274 = scmp.ne.s32.totalorder %s266, %s268
      %p275 = scmp.eq.s32.totalorder %s27, 1
      %p276 = por %p274, %p275
      %p277 = scmp.ne.s32.totalorder %s268, %s269
      %p278 = scmp.eq.s32.totalorder %s27, 0
      %p279 = por %p277, %p278
      %p280 = scmp.ne.s32.totalorder %s268, %s269
      %p281 = scmp.eq.s32.totalorder %s28, 1
      %p282 = por %p280, %p281
      %p284 = scmp.ne.s32.totalorder %s269, %s283
      %p285 = scmp.eq.s32.totalorder %s28, 0
      %p286 = por %p284, %p285
      %s288 = sadd.s32 %s287, 1
      %p291 = scmp.eq.s32.totalorder %s22, 1
      %p292 = scmp.ne.s32.totalorder %s287, %s289
      %p293 = scmp.eq.s32.totalorder %s22, 0
      %p294 = por %p292, %p293
      %p295 = scmp.ne.s32.totalorder %s287, %s289
      %p296 = scmp.eq.s32.totalorder %s27, 1
      %p297 = por %p295, %p296
      %p298 = scmp.ne.s32.totalorder %s289, %s290
      %p299 = scmp.eq.s32.totalorder %s27, 0
      %p300 = por %p298, %p299
      %p301 = scmp.ne.s32.totalorder %s289, %s290
      %p302 = scmp.eq.s32.totalorder %s28, 1
      %p303 = por %p301, %p302
      %p305 = scmp.ne.s32.totalorder %s290, %s304
      %p306 = scmp.eq.s32.totalorder %s28, 0
      %p307 = por %p305, %p306
      %s308 = ssub.s32 %s22, %s29
      %p309 = scmp.eq.s32.totalorder %s308, 0
      %s311 = sadd.s32 %s310, 1
      %s312 = scalar_select %p309, %s310, %s311
      %p315 = pneg %p309
      %p316 = scmp.eq.s32.totalorder %s22, 1
      %p317 = por %p315, %p316
      %p318 = scmp.ne.s32.totalorder %s310, %s313
      %p319 = scmp.eq.s32.totalorder %s22, 0
      %p320 = por %p318, %p319
      %p321 = scmp.ne.s32.totalorder %s310, %s313
      %p322 = scmp.eq.s32.totalorder %s27, 1
      %p323 = por %p321, %p322
      %p324 = scmp.ne.s32.totalorder %s313, %s314
      %p325 = scmp.eq.s32.totalorder %s27, 0
      %p326 = por %p324, %p325
      %p327 = scmp.ne.s32.totalorder %s313, %s314
      %p328 = scmp.eq.s32.totalorder %s28, 1
      %p329 = por %p327, %p328
      %p331 = scmp.ne.s32.totalorder %s314, %s330
      %p332 = scmp.eq.s32.totalorder %s28, 0
      %p333 = por %p331, %p332
      %p334 = scmp.le.s32.totalorder 1, %s22
      %p335 = scmp.lt.s32.totalorder %s22, 3
      %p336 = pnand %p334, %p335
      %p337 = pneg %p336
      // Predicated region
      $region9: #{tpu_custom_call.1} parent=5 // pred_check
        _
      $region10: #{tpu_custom_call.1} parent=5 // pred_check_branch
        %339 = sbr.rel (%p336) target = $region12
      $region11: #{tpu_custom_call.1} parent=5 // pred_region
        %s340 = ssub.s32 %s22, 1
        // Predicated region
        $region13: #{tpu_custom_call.1} parent=11 // pred_check
          %p341 = pneg %p69
        $region14: #{tpu_custom_call.1} parent=11 // pred_check_branch
          %343 = sbr.rel (%p341) target = $region16
        $region15: #{tpu_custom_call.1} parent=11 // pred_region
          _
        $region16: #{tpu_custom_call.1} parent=11 // pred_fallthru
          _
        // Predicated region
        $region17: #{tpu_custom_call.1} parent=11 // pred_check
          %p344 = pneg %p90
        $region18: #{tpu_custom_call.1} parent=11 // pred_check_branch
          %346 = sbr.rel (%p344) target = $region20
        $region19: #{tpu_custom_call.1} parent=11 // pred_region
          _
        $region20: #{tpu_custom_call.1} parent=11 // pred_fallthru
          _
        // Predicated region
        $region21: #{tpu_custom_call.1} parent=11 // pred_check
          %p347 = pneg %p111
        $region22: #{tpu_custom_call.1} parent=11 // pred_check_branch
          %349 = sbr.rel (%p347) target = $region24
        $region23: #{tpu_custom_call.1} parent=11 // pred_region
          _
        $region24: #{tpu_custom_call.1} parent=11 // pred_fallthru
          _
        // Predicated region
        $region25: #{tpu_custom_call.1} parent=11 // pred_check
          %p350 = pneg %p132
        $region26: #{tpu_custom_call.1} parent=11 // pred_check_branch
          %352 = sbr.rel (%p350) target = $region28
        $region27: #{tpu_custom_call.1} parent=11 // pred_region
          _
        $region28: #{tpu_custom_call.1} parent=11 // pred_fallthru
          _
        // Predicated region
        $region29: #{tpu_custom_call.1} parent=11 // pred_check
          %p353 = pneg %p153
        $region30: #{tpu_custom_call.1} parent=11 // pred_check_branch
          %355 = sbr.rel (%p353) target = $region32
        $region31: #{tpu_custom_call.1} parent=11 // pred_region
          _
        $region32: #{tpu_custom_call.1} parent=11 // pred_fallthru
          _
        // Predicated region
        $region33: #{tpu_custom_call.1} parent=11 // pred_check
          %p356 = pneg %p174
        $region34: #{tpu_custom_call.1} parent=11 // pred_check_branch
          %358 = sbr.rel (%p356) target = $region36
        $region35: #{tpu_custom_call.1} parent=11 // pred_region
          _
        $region36: #{tpu_custom_call.1} parent=11 // pred_fallthru
          _
        // Predicated region
        $region37: #{tpu_custom_call.1} parent=11 // pred_check
          %p359 = pneg %p195
        $region38: #{tpu_custom_call.1} parent=11 // pred_check_branch
          %361 = sbr.rel (%p359) target = $region40
        $region39: #{tpu_custom_call.1} parent=11 // pred_region
          _
        $region40: #{tpu_custom_call.1} parent=11 // pred_fallthru
          _
        // Predicated region
        $region41: #{tpu_custom_call.1} parent=11 // pred_check
          %p362 = pneg %p216
        $region42: #{tpu_custom_call.1} parent=11 // pred_check_branch
          %364 = sbr.rel (%p362) target = $region44
        $region43: #{tpu_custom_call.1} parent=11 // pred_region
          _
        $region44: #{tpu_custom_call.1} parent=11 // pred_fallthru
          _
        // Predicated region
        $region45: #{tpu_custom_call.1} parent=11 // pred_check
          %p365 = pneg %p237
        $region46: #{tpu_custom_call.1} parent=11 // pred_check_branch
          %367 = sbr.rel (%p365) target = $region48
        $region47: #{tpu_custom_call.1} parent=11 // pred_region
          _
        $region48: #{tpu_custom_call.1} parent=11 // pred_fallthru
          _
        // Predicated region
        $region49: #{tpu_custom_call.1} parent=11 // pred_check
          %p368 = pneg %p258
        $region50: #{tpu_custom_call.1} parent=11 // pred_check_branch
          %370 = sbr.rel (%p368) target = $region52
        $region51: #{tpu_custom_call.1} parent=11 // pred_region
          _
        $region52: #{tpu_custom_call.1} parent=11 // pred_fallthru
          _
        // Predicated region
        $region53: #{tpu_custom_call.1} parent=11 // pred_check
          %p371 = pneg %p279
        $region54: #{tpu_custom_call.1} parent=11 // pred_check_branch
          %373 = sbr.rel (%p371) target = $region56
        $region55: #{tpu_custom_call.1} parent=11 // pred_region
          _
        $region56: #{tpu_custom_call.1} parent=11 // pred_fallthru
          _
        // Predicated region
        $region57: #{tpu_custom_call.1} parent=11 // pred_check
          %p374 = pneg %p300
        $region58: #{tpu_custom_call.1} parent=11 // pred_check_branch
          %376 = sbr.rel (%p374) target = $region60
        $region59: #{tpu_custom_call.1} parent=11 // pred_region
          _
        $region60: #{tpu_custom_call.1} parent=11 // pred_fallthru
          _
      $region12: #{tpu_custom_call.1} parent=5 // pred_fallthru
        _
      %p377 = scmp.lt.s32.totalorder %s22, 2
      // Predicated region
      $region61: #{tpu_custom_call.1} parent=5 // pred_check
        %p378 = pneg %p377
      $region62: #{tpu_custom_call.1} parent=5 // pred_check_branch
        %380 = sbr.rel (%p378) target = $region64
      $region63: #{tpu_custom_call.1} parent=5 // pred_region
        // Predicated region
        $region65: #{tpu_custom_call.1} parent=63 // pred_check
          %p381 = pneg %p42
        $region66: #{tpu_custom_call.1} parent=63 // pred_check_branch
          %383 = sbr.rel (%p381) target = $region68
        $region67: #{tpu_custom_call.1} parent=63 // pred_region
          %p384 = scmp.lt.s32.totalorder %s22, 1
          %s385 = scalar_select %p384, %s22, 1
          %s386 = smul.addr %s385, 8
          %s387 = scalar_lea.vmem %s0, %s386
        $region68: #{tpu_custom_call.1} parent=63 // pred_fallthru
          _
      $region64: #{tpu_custom_call.1} parent=5 // pred_fallthru
        _
      %p388 = scmp.le.s32.totalorder 1, %s22
      %p389 = scmp.lt.s32.totalorder %s22, 3
      %p390 = pnand %p388, %p389
      %p391 = pneg %p390
      // Predicated region
      $region69: #{tpu_custom_call.1} parent=5 // pred_check
        _
      $region70: #{tpu_custom_call.1} parent=5 // pred_check_branch
        %393 = sbr.rel (%p390) target = $region72
      $region71: #{tpu_custom_call.1} parent=5 // pred_region
        %s394 = ssub.s32 %s22, 1
        %p395 = scmp.lt.s32.totalorder %s27, 1
        %s396 = scalar_select %p395, %s27, 1
        %s397 = smul.addr %s396, 8
        %s398 = scalar_lea.vmem %s0, %s397
        %p399 = pneg %p48
        %p400 = pneg %p45
        %p401 = pneg %p69
        %p402 = pneg %p66
        %p403 = pneg %p90
        %p404 = pneg %p87
        %p405 = pneg %p111
        %p406 = pneg %p108
        %p407 = pneg %p132
        %p408 = pneg %p129
        %p409 = pneg %p153
        %p410 = pneg %p150
        %p411 = pneg %p174
        %p412 = pneg %p171
        %p413 = pneg %p195
        %p414 = pneg %p192
        %p415 = pneg %p216
        %p416 = pneg %p213
        %p417 = pneg %p237
        %p418 = pneg %p234
        %p419 = pneg %p258
        %p420 = pneg %p255
        %p421 = pneg %p279
        %p422 = pneg %p276
        %p423 = pneg %p300
        %p424 = pneg %p297
        %p425 = pneg %p326
        %p426 = pneg %p323
        %s427 = sand.u32 %s313, 1
        %s428 = scalar_lea.sflag [#allocation3], %s427
        %s429 = sand.u32 %s313, 1
        %s430 = smul.addr %s429, 8
        %s431 = scalar_lea.vmem [#allocation2], %s430
        %p432 = scmp.lt.s32.totalorder %s27, 1
        %s433 = scalar_select %p432, %s27, 1
        %s434 = smul.addr %s433, 8
        %s435 = scalar_lea.vmem %s0, %s434
        %v437 = vld [vmem:[%s435] sm:$0xff]
        %v438 = vpack.c.bf16 %v437, %v437
        %v439 = vld [vmem:[%s1] sm:$0xf]
        %v440 = vld [vmem:[%s1 + $0x4] sm:$0xf]
        %v441 = vld [vmem:[%s1 + $0x8] sm:$0xf]
        %v442 = vld [vmem:[%s1 + $0xc] sm:$0xf]
        %v443 = vld [vmem:[%s2] sm:$0x1]
        %v445 = vlaneseq
        %v446 = vshrl.u32 %v445, 7
        %v447 = vsub.s32 0, %v446
        %v448 = vrot.slane %v443, %v447
        %v454 = vunpack.c.l.b16 %v439
        %v455 = vunpack.c.l.b16 %v440
        %v456 = vunpack.c.l.b16 %v441
        %v457 = vunpack.c.l.b16 %v442
        %v458 = vpack.c.b16 %v455, %v454
        %v459 = vpack.c.b16 %v457, %v456
        %vm462 = vcmask 261120
        %v464 = vsel %vm462, %v438, 0
        %466 = vmatprep.subr.bf16.mxu0 0
        %467 = vmatpush1.bf16.msra.mxu0 0
        %468 = vmatprep.subr.bf16.mxu0 0
        %469 = vmatpush1.bf16.msra.mxu0 0
        %470 = vmatprep.subr.bf16.mxu0 0
        %471 = vmatpush1.bf16.msra.mxu0 0
        %472 = vmatprep.subr.bf16.mxu0 0
        %473 = vmatpush1.bf16.msra.mxu0 0
        %474 = vmatprep.subr.bf16.mxu0 0
        %475 = vmatpush1.bf16.msra.mxu0 0
        %476 = vmatprep.subr.bf16.mxu0 0
        %477 = vmatpush1.bf16.msra.mxu0 0
        %478 = vmatprep.subr.bf16.mxu0 0
        %479 = vmatpush1.bf16.msra.mxu0 %v459
        %480 = vmatprep.subr.bf16.mxu0 0
        %481 = vmatpush1.bf16.msra.mxu0 %v458
        %482 = vmatprep.subr.bf16.mxu0 0
        %483 = vmatpush2.bf16.msra.mxu0 0
        %484 = vmatprep.subr.bf16.mxu0 0
        %485 = vmatpush2.bf16.msra.mxu0 0
        %486 = vmatprep.subr.bf16.mxu0 0
        %487 = vmatpush2.bf16.msra.mxu0 0
        %488 = vmatprep.subr.bf16.mxu0 0
        %489 = vmatpush2.bf16.msra.mxu0 0
        %490 = vmatprep.subr.bf16.mxu0 0
        %491 = vmatpush2.bf16.msra.mxu0 0
        %492 = vmatprep.subr.bf16.mxu0 0
        %493 = vmatpush2.bf16.msra.mxu0 0
        %494 = vmatprep.subr.bf16.mxu0 0
        %495 = vmatpush2.bf16.msra.mxu0 0
        %496 = vmatprep.subr.bf16.mxu0 0
        %497 = vmatpush2.bf16.msra.mxu0 0
        %498 = vmatprep.mubr.bf16.mxu0 0
        %499 = vmatmul.mubr.bf16.gmra.mxu0 %v464
        %v500 = vpop.f32.mrf.mxu0
        %v501 = vadd.f32 %v448, %v500
        %v502 = vpop.f32.mrf.mxu0
        %v503 = vpop.f32.mrf.mxu0
        %v504 = vpop.f32.mrf.mxu0
        %505 = vdwg.mxu0
        %v506 = vpack.c.bf16 %v501, %v501
        %v507 = vld [vmem:[%s3] sm:$0xf]
        %v508 = vld [vmem:[%s3 + $0x4] sm:$0xf]
        %v509 = vld [vmem:[%s3 + $0x8] sm:$0xf]
        %v510 = vld [vmem:[%s3 + $0xc] sm:$0xf]
        %512 = vrot.lane.b32.xlu0 %v506, 96
        %v513 = vpop.permute.xlu0 %512
        %vm514 = vcmask 64512
        %v516 = vsel %vm514, %v506, 0
        %v519 = vsel %vm514, %v513, 0
        %521 = vmatprep.subr.bf16.mxu0 0
        %522 = vmatpush1.bf16.xpose.msra.mxu0 0
        %523 = vmatprep.subr.bf16.mxu0 0
        %524 = vmatpush1.bf16.xpose.msra.mxu0 0
        %525 = vmatprep.subr.bf16.mxu0 0
        %526 = vmatpush1.bf16.xpose.msra.mxu0 0
        %527 = vmatprep.subr.bf16.mxu0 0
        %528 = vmatpush1.bf16.xpose.msra.mxu0 0
        %529 = vmatprep.subr.bf16.mxu0 0
        %530 = vmatpush1.bf16.xpose.msra.mxu0 0
        %531 = vmatprep.subr.bf16.mxu0 0
        %532 = vmatpush1.bf16.xpose.msra.mxu0 0
        %533 = vmatprep.subr.bf16.mxu0 0
        %534 = vmatpush1.bf16.xpose.msra.mxu0 0
        %535 = vmatprep.subr.bf16.mxu0 0
        %536 = vmatpush1.bf16.xpose.msra.mxu0 %v519
        %537 = vmatprep.subr.bf16.mxu0 0
        %538 = vmatpush2.bf16.xpose.msra.mxu0 0
        %539 = vmatprep.subr.bf16.mxu0 0
        %540 = vmatpush2.bf16.xpose.msra.mxu0 0
        %541 = vmatprep.subr.bf16.mxu0 0
        %542 = vmatpush2.bf16.xpose.msra.mxu0 0
        %543 = vmatprep.subr.bf16.mxu0 0
        %544 = vmatpush2.bf16.xpose.msra.mxu0 0
        %545 = vmatprep.subr.bf16.mxu0 0
        %546 = vmatpush2.bf16.xpose.msra.mxu0 0
        %547 = vmatprep.subr.bf16.mxu0 0
        %548 = vmatpush2.bf16.xpose.msra.mxu0 0
        %549 = vmatprep.subr.bf16.mxu0 0
        %550 = vmatpush2.bf16.xpose.msra.mxu0 0
        %551 = vmatprep.subr.bf16.mxu0 0
        %552 = vmatpush2.bf16.xpose.msra.mxu0 0
        %553 = vmatprep.mubr.bf16.mxu0 0
        %554 = vmatmul.mubr.bf16.gmra.mxu0 %v516
        %v555 = vpop.f32.mrf.mxu0
        %v556 = vadd.f32 0.0, %v555
        %v557 = vpop.f32.mrf.mxu0
        %v558 = vpop.f32.mrf.mxu0
        %v559 = vpop.f32.mrf.mxu0
        %560 = vdwg.mxu0
        %v561 = vsel %vm514, %v556, -inf
        %562 = vmax.xlane.f32.xlu0 %v561
        %v563 = vpop.xlane.xlu0 %562
        %v564 = vsub.f32 %v556, %v563
        %v565 = vmul.f32 %v564, 1.442695
        %v566 = vpow.pop %v565
        %v567 = vsel %vm514, %v566, 0.0
        %568 = vadd.xlane.f32.xlu0 %v567
        %v569 = vpop.xlane.xlu0 %568
        %v570 = vrcp.pop %v569
        %v571 = vmul.f32 %v566, %v570
        %v572 = vpack.c.bf16 %v571, %v571
        %573 = vrot.lane.b32.xlu0 %v506, 64
        %v574 = vpop.permute.xlu0 %573
        %v576 = vsel %vm514, %v572, 0
        %vm578 = vcmask 1043456
        %v580 = vsel %vm578, %v574, 0
        %582 = vmatprep.subr.bf16.mxu0 0
        %583 = vmatpush1.bf16.msra.mxu0 0
        %584 = vmatprep.subr.bf16.mxu0 0
        %585 = vmatpush1.bf16.msra.mxu0 0
        %586 = vmatprep.subr.bf16.mxu0 0
        %587 = vmatpush1.bf16.msra.mxu0 0
        %588 = vmatprep.subr.bf16.mxu0 0
        %589 = vmatpush1.bf16.msra.mxu0 0
        %590 = vmatprep.subr.bf16.mxu0 0
        %591 = vmatpush1.bf16.msra.mxu0 0
        %592 = vmatprep.subr.bf16.mxu0 0
        %593 = vmatpush1.bf16.msra.mxu0 0
        %594 = vmatprep.subr.bf16.mxu0 0
        %595 = vmatpush1.bf16.msra.mxu0 0
        %596 = vmatprep.subr.bf16.mxu0 0
        %597 = vmatpush1.bf16.msra.mxu0 %v580
        %598 = vmatprep.subr.bf16.mxu0 0
        %599 = vmatpush2.bf16.msra.mxu0 0
        %600 = vmatprep.subr.bf16.mxu0 0
        %601 = vmatpush2.bf16.msra.mxu0 0
        %602 = vmatprep.subr.bf16.mxu0 0
        %603 = vmatpush2.bf16.msra.mxu0 0
        %604 = vmatprep.subr.bf16.mxu0 0
        %605 = vmatpush2.bf16.msra.mxu0 0
        %606 = vmatprep.subr.bf16.mxu0 0
        %607 = vmatpush2.bf16.msra.mxu0 0
        %608 = vmatprep.subr.bf16.mxu0 0
        %609 = vmatpush2.bf16.msra.mxu0 0
        %610 = vmatprep.subr.bf16.mxu0 0
        %611 = vmatpush2.bf16.msra.mxu0 0
        %612 = vmatprep.subr.bf16.mxu0 0
        %613 = vmatpush2.bf16.msra.mxu0 0
        %614 = vmatprep.mubr.bf16.mxu0 0
        %615 = vmatmul.mubr.bf16.gmra.mxu0 %v576
        %v616 = vpop.f32.mrf.mxu0
        %v617 = vadd.f32 0.0, %v616
        %v618 = vpop.f32.mrf.mxu0
        %v619 = vpop.f32.mrf.mxu0
        %v620 = vpop.f32.mrf.mxu0
        %621 = vdwg.mxu0
        %v622 = vpack.c.bf16 %v617, %v617
        %623 = vrot.lane.b32.xlu0 %v506, 120
        %v624 = vpop.permute.xlu0 %623
        %625 = vrot.lane.b32.xlu0 %v506, 88
        %v626 = vpop.permute.xlu0 %625
        %v628 = vsel %vm514, %v624, 0
        %v631 = vsel %vm514, %v626, 0
        %633 = vmatprep.subr.bf16.mxu0 0
        %634 = vmatpush1.bf16.xpose.msra.mxu0 0
        %635 = vmatprep.subr.bf16.mxu0 0
        %636 = vmatpush1.bf16.xpose.msra.mxu0 0
        %637 = vmatprep.subr.bf16.mxu0 0
        %638 = vmatpush1.bf16.xpose.msra.mxu0 0
        %639 = vmatprep.subr.bf16.mxu0 0
        %640 = vmatpush1.bf16.xpose.msra.mxu0 0
        %641 = vmatprep.subr.bf16.mxu0 0
        %642 = vmatpush1.bf16.xpose.msra.mxu0 0
        %643 = vmatprep.subr.bf16.mxu0 0
        %644 = vmatpush1.bf16.xpose.msra.mxu0 0
        %645 = vmatprep.subr.bf16.mxu0 0
        %646 = vmatpush1.bf16.xpose.msra.mxu0 0
        %647 = vmatprep.subr.bf16.mxu0 0
        %648 = vmatpush1.bf16.xpose.msra.mxu0 %v631
        %649 = vmatprep.subr.bf16.mxu0 0
        %650 = vmatpush2.bf16.xpose.msra.mxu0 0
        %651 = vmatprep.subr.bf16.mxu0 0
        %652 = vmatpush2.bf16.xpose.msra.mxu0 0
        %653 = vmatprep.subr.bf16.mxu0 0
        %654 = vmatpush2.bf16.xpose.msra.mxu0 0
        %655 = vmatprep.subr.bf16.mxu0 0
        %656 = vmatpush2.bf16.xpose.msra.mxu0 0
        %657 = vmatprep.subr.bf16.mxu0 0
        %658 = vmatpush2.bf16.xpose.msra.mxu0 0
        %659 = vmatprep.subr.bf16.mxu0 0
        %660 = vmatpush2.bf16.xpose.msra.mxu0 0
        %661 = vmatprep.subr.bf16.mxu0 0
        %662 = vmatpush2.bf16.xpose.msra.mxu0 0
        %663 = vmatprep.subr.bf16.mxu0 0
        %664 = vmatpush2.bf16.xpose.msra.mxu0 0
        %665 = vmatprep.mubr.bf16.mxu0 0
        %666 = vmatmul.mubr.bf16.gmra.mxu0 %v628
        %v667 = vpop.f32.mrf.mxu0
        %v668 = vadd.f32 0.0, %v667
        %v669 = vpop.f32.mrf.mxu0
        %v670 = vpop.f32.mrf.mxu0
        %v671 = vpop.f32.mrf.mxu0
        %672 = vdwg.mxu0
        %v673 = vsel %vm514, %v668, -inf
        %674 = vmax.xlane.f32.xlu0 %v673
        %v675 = vpop.xlane.xlu0 %674
        %v676 = vsub.f32 %v668, %v675
        %v677 = vmul.f32 %v676, 1.442695
        %v678 = vpow.pop %v677
        %v679 = vsel %vm514, %v678, 0.0
        %680 = vadd.xlane.f32.xlu0 %v679
        %v681 = vpop.xlane.xlu0 %680
        %v682 = vrcp.pop %v681
        %v683 = vmul.f32 %v678, %v682
        %v684 = vpack.c.bf16 %v683, %v683
        %685 = vrot.lane.b32.xlu0 %v506, 56
        %v686 = vpop.permute.xlu0 %685
        %v688 = vsel %vm514, %v684, 0
        %v691 = vsel %vm578, %v686, 0
        %693 = vmatprep.subr.bf16.mxu0 0
        %694 = vmatpush1.bf16.msra.mxu0 0
        %695 = vmatprep.subr.bf16.mxu0 0
        %696 = vmatpush1.bf16.msra.mxu0 0
        %697 = vmatprep.subr.bf16.mxu0 0
        %698 = vmatpush1.bf16.msra.mxu0 0
        %699 = vmatprep.subr.bf16.mxu0 0
        %700 = vmatpush1.bf16.msra.mxu0 0
        %701 = vmatprep.subr.bf16.mxu0 0
        %702 = vmatpush1.bf16.msra.mxu0 0
        %703 = vmatprep.subr.bf16.mxu0 0
        %704 = vmatpush1.bf16.msra.mxu0 0
        %705 = vmatprep.subr.bf16.mxu0 0
        %706 = vmatpush1.bf16.msra.mxu0 0
        %707 = vmatprep.subr.bf16.mxu0 0
        %708 = vmatpush1.bf16.msra.mxu0 %v691
        %709 = vmatprep.subr.bf16.mxu0 0
        %710 = vmatpush2.bf16.msra.mxu0 0
        %711 = vmatprep.subr.bf16.mxu0 0
        %712 = vmatpush2.bf16.msra.mxu0 0
        %713 = vmatprep.subr.bf16.mxu0 0
        %714 = vmatpush2.bf16.msra.mxu0 0
        %715 = vmatprep.subr.bf16.mxu0 0
        %716 = vmatpush2.bf16.msra.mxu0 0
        %717 = vmatprep.subr.bf16.mxu0 0
        %718 = vmatpush2.bf16.msra.mxu0 0
        %719 = vmatprep.subr.bf16.mxu0 0
        %720 = vmatpush2.bf16.msra.mxu0 0
        %721 = vmatprep.subr.bf16.mxu0 0
        %722 = vmatpush2.bf16.msra.mxu0 0
        %723 = vmatprep.subr.bf16.mxu0 0
        %724 = vmatpush2.bf16.msra.mxu0 0
        %725 = vmatprep.mubr.bf16.mxu0 0
        %726 = vmatmul.mubr.bf16.gmra.mxu0 %v688
        %v727 = vpop.f32.mrf.mxu0
        %v728 = vadd.f32 0.0, %v727
        %v729 = vpop.f32.mrf.mxu0
        %v730 = vpop.f32.mrf.mxu0
        %v731 = vpop.f32.mrf.mxu0
        %732 = vdwg.mxu0
        %v733 = vpack.c.bf16 %v728, %v728
        %v735 = vsel %vm514, %v733, 0
        %v738 = vsel %vm578, %v508, 0
        %740 = vmatprep.subr.bf16.mxu0 0
        %741 = vmatpush1.bf16.msra.mxu0 0
        %742 = vmatprep.subr.bf16.mxu0 0
        %743 = vmatpush1.bf16.msra.mxu0 0
        %744 = vmatprep.subr.bf16.mxu0 0
        %745 = vmatpush1.bf16.msra.mxu0 0
        %746 = vmatprep.subr.bf16.mxu0 0
        %747 = vmatpush1.bf16.msra.mxu0 0
        %748 = vmatprep.subr.bf16.mxu0 0
        %749 = vmatpush1.bf16.msra.mxu0 0
        %750 = vmatprep.subr.bf16.mxu0 0
        %751 = vmatpush1.bf16.msra.mxu0 0
        %752 = vmatprep.subr.bf16.mxu0 0
        %753 = vmatpush1.bf16.msra.mxu0 0
        %754 = vmatprep.subr.bf16.mxu0 0
        %755 = vmatpush1.bf16.msra.mxu0 %v738
        %756 = vmatprep.subr.bf16.mxu0 0
        %757 = vmatpush2.bf16.msra.mxu0 0
        %758 = vmatprep.subr.bf16.mxu0 0
        %759 = vmatpush2.bf16.msra.mxu0 0
        %760 = vmatprep.subr.bf16.mxu0 0
        %761 = vmatpush2.bf16.msra.mxu0 0
        %762 = vmatprep.subr.bf16.mxu0 0
        %763 = vmatpush2.bf16.msra.mxu0 0
        %764 = vmatprep.subr.bf16.mxu0 0
        %765 = vmatpush2.bf16.msra.mxu0 0
        %766 = vmatprep.subr.bf16.mxu0 0
        %767 = vmatpush2.bf16.msra.mxu0 0
        %768 = vmatprep.subr.bf16.mxu0 0
        %769 = vmatpush2.bf16.msra.mxu0 0
        %770 = vmatprep.subr.bf16.mxu0 0
        %771 = vmatpush2.bf16.msra.mxu0 0
        %772 = vmatprep.mubr.bf16.mxu0 0
        %773 = vmatmul.mubr.bf16.gmra.mxu0 %v735
        %v774 = vpop.f32.mrf.mxu0
        %v775 = vadd.f32 0.0, %v774
        %v776 = vpop.f32.mrf.mxu0
        %v777 = vpop.f32.mrf.mxu0
        %v778 = vpop.f32.mrf.mxu0
        %779 = vdwg.mxu0
        %v781 = vsel %vm514, %v622, 0
        %v784 = vsel %vm578, %v507, 0
        %786 = vmatprep.subr.bf16.mxu0 0
        %787 = vmatpush1.bf16.msra.mxu0 0
        %788 = vmatprep.subr.bf16.mxu0 0
        %789 = vmatpush1.bf16.msra.mxu0 0
        %790 = vmatprep.subr.bf16.mxu0 0
        %791 = vmatpush1.bf16.msra.mxu0 0
        %792 = vmatprep.subr.bf16.mxu0 0
        %793 = vmatpush1.bf16.msra.mxu0 0
        %794 = vmatprep.subr.bf16.mxu0 0
        %795 = vmatpush1.bf16.msra.mxu0 0
        %796 = vmatprep.subr.bf16.mxu0 0
        %797 = vmatpush1.bf16.msra.mxu0 0
        %798 = vmatprep.subr.bf16.mxu0 0
        %799 = vmatpush1.bf16.msra.mxu0 0
        %800 = vmatprep.subr.bf16.mxu0 0
        %801 = vmatpush1.bf16.msra.mxu0 %v784
        %802 = vmatprep.subr.bf16.mxu0 0
        %803 = vmatpush2.bf16.msra.mxu0 0
        %804 = vmatprep.subr.bf16.mxu0 0
        %805 = vmatpush2.bf16.msra.mxu0 0
        %806 = vmatprep.subr.bf16.mxu0 0
        %807 = vmatpush2.bf16.msra.mxu0 0
        %808 = vmatprep.subr.bf16.mxu0 0
        %809 = vmatpush2.bf16.msra.mxu0 0
        %810 = vmatprep.subr.bf16.mxu0 0
        %811 = vmatpush2.bf16.msra.mxu0 0
        %812 = vmatprep.subr.bf16.mxu0 0
        %813 = vmatpush2.bf16.msra.mxu0 0
        %814 = vmatprep.subr.bf16.mxu0 0
        %815 = vmatpush2.bf16.msra.mxu0 0
        %816 = vmatprep.subr.bf16.mxu0 0
        %817 = vmatpush2.bf16.msra.mxu0 0
        %818 = vmatprep.mubr.bf16.mxu0 0
        %819 = vmatmul.mubr.bf16.gmra.mxu0 %v781
        %v820 = vpop.f32.mrf.mxu0
        %v821 = vadd.f32 %v775, %v820
        %v822 = vpop.f32.mrf.mxu0
        %v823 = vpop.f32.mrf.mxu0
        %v824 = vpop.f32.mrf.mxu0
        %825 = vdwg.mxu0
        %826 = vrot.lane.b32.xlu0 %v506, 112
        %v827 = vpop.permute.xlu0 %826
        %828 = vrot.lane.b32.xlu0 %v506, 80
        %v829 = vpop.permute.xlu0 %828
        %v831 = vsel %vm514, %v827, 0
        %v834 = vsel %vm514, %v829, 0
        %836 = vmatprep.subr.bf16.mxu0 0
        %837 = vmatpush1.bf16.xpose.msra.mxu0 0
        %838 = vmatprep.subr.bf16.mxu0 0
        %839 = vmatpush1.bf16.xpose.msra.mxu0 0
        %840 = vmatprep.subr.bf16.mxu0 0
        %841 = vmatpush1.bf16.xpose.msra.mxu0 0
        %842 = vmatprep.subr.bf16.mxu0 0
        %843 = vmatpush1.bf16.xpose.msra.mxu0 0
        %844 = vmatprep.subr.bf16.mxu0 0
        %845 = vmatpush1.bf16.xpose.msra.mxu0 0
        %846 = vmatprep.subr.bf16.mxu0 0
        %847 = vmatpush1.bf16.xpose.msra.mxu0 0
        %848 = vmatprep.subr.bf16.mxu0 0
        %849 = vmatpush1.bf16.xpose.msra.mxu0 0
        %850 = vmatprep.subr.bf16.mxu0 0
        %851 = vmatpush1.bf16.xpose.msra.mxu0 %v834
        %852 = vmatprep.subr.bf16.mxu0 0
        %853 = vmatpush2.bf16.xpose.msra.mxu0 0
        %854 = vmatprep.subr.bf16.mxu0 0
        %855 = vmatpush2.bf16.xpose.msra.mxu0 0
        %856 = vmatprep.subr.bf16.mxu0 0
        %857 = vmatpush2.bf16.xpose.msra.mxu0 0
        %858 = vmatprep.subr.bf16.mxu0 0
        %859 = vmatpush2.bf16.xpose.msra.mxu0 0
        %860 = vmatprep.subr.bf16.mxu0 0
        %861 = vmatpush2.bf16.xpose.msra.mxu0 0
        %862 = vmatprep.subr.bf16.mxu0 0
        %863 = vmatpush2.bf16.xpose.msra.mxu0 0
        %864 = vmatprep.subr.bf16.mxu0 0
        %865 = vmatpush2.bf16.xpose.msra.mxu0 0
        %866 = vmatprep.subr.bf16.mxu0 0
        %867 = vmatpush2.bf16.xpose.msra.mxu0 0
        %868 = vmatprep.mubr.bf16.mxu0 0
        %869 = vmatmul.mubr.bf16.gmra.mxu0 %v831
        %v870 = vpop.f32.mrf.mxu0
        %v871 = vadd.f32 0.0, %v870
        %v872 = vpop.f32.mrf.mxu0
        %v873 = vpop.f32.mrf.mxu0
        %v874 = vpop.f32.mrf.mxu0
        %875 = vdwg.mxu0
        %v876 = vsel %vm514, %v871, -inf
        %877 = vmax.xlane.f32.xlu0 %v876
        %v878 = vpop.xlane.xlu0 %877
        %v879 = vsub.f32 %v871, %v878
        %v880 = vmul.f32 %v879, 1.442695
        %v881 = vpow.pop %v880
        %v882 = vsel %vm514, %v881, 0.0
        %883 = vadd.xlane.f32.xlu0 %v882
        %v884 = vpop.xlane.xlu0 %883
        %v885 = vrcp.pop %v884
        %v886 = vmul.f32 %v881, %v885
        %v887 = vpack.c.bf16 %v886, %v886
        %888 = vrot.lane.b32.xlu0 %v506, 48
        %v889 = vpop.permute.xlu0 %888
        %v891 = vsel %vm514, %v887, 0
        %v894 = vsel %vm578, %v889, 0
        %896 = vmatprep.subr.bf16.mxu0 0
        %897 = vmatpush1.bf16.msra.mxu0 0
        %898 = vmatprep.subr.bf16.mxu0 0
        %899 = vmatpush1.bf16.msra.mxu0 0
        %900 = vmatprep.subr.bf16.mxu0 0
        %901 = vmatpush1.bf16.msra.mxu0 0
        %902 = vmatprep.subr.bf16.mxu0 0
        %903 = vmatpush1.bf16.msra.mxu0 0
        %904 = vmatprep.subr.bf16.mxu0 0
        %905 = vmatpush1.bf16.msra.mxu0 0
        %906 = vmatprep.subr.bf16.mxu0 0
        %907 = vmatpush1.bf16.msra.mxu0 0
        %908 = vmatprep.subr.bf16.mxu0 0
        %909 = vmatpush1.bf16.msra.mxu0 0
        %910 = vmatprep.subr.bf16.mxu0 0
        %911 = vmatpush1.bf16.msra.mxu0 %v894
        %912 = vmatprep.subr.bf16.mxu0 0
        %913 = vmatpush2.bf16.msra.mxu0 0
        %914 = vmatprep.subr.bf16.mxu0 0
        %915 = vmatpush2.bf16.msra.mxu0 0
        %916 = vmatprep.subr.bf16.mxu0 0
        %917 = vmatpush2.bf16.msra.mxu0 0
        %918 = vmatprep.subr.bf16.mxu0 0
        %919 = vmatpush2.bf16.msra.mxu0 0
        %920 = vmatprep.subr.bf16.mxu0 0
        %921 = vmatpush2.bf16.msra.mxu0 0
        %922 = vmatprep.subr.bf16.mxu0 0
        %923 = vmatpush2.bf16.msra.mxu0 0
        %924 = vmatprep.subr.bf16.mxu0 0
        %925 = vmatpush2.bf16.msra.mxu0 0
        %926 = vmatprep.subr.bf16.mxu0 0
        %927 = vmatpush2.bf16.msra.mxu0 0
        %928 = vmatprep.mubr.bf16.mxu0 0
        %929 = vmatmul.mubr.bf16.gmra.mxu0 %v891
        %v930 = vpop.f32.mrf.mxu0
        %v931 = vadd.f32 0.0, %v930
        %v932 = vpop.f32.mrf.mxu0
        %v933 = vpop.f32.mrf.mxu0
        %v934 = vpop.f32.mrf.mxu0
        %935 = vdwg.mxu0
        %v936 = vpack.c.bf16 %v931, %v931
        %v938 = vsel %vm514, %v936, 0
        %v941 = vsel %vm578, %v509, 0
        %943 = vmatprep.subr.bf16.mxu0 0
        %944 = vmatpush1.bf16.msra.mxu0 0
        %945 = vmatprep.subr.bf16.mxu0 0
        %946 = vmatpush1.bf16.msra.mxu0 0
        %947 = vmatprep.subr.bf16.mxu0 0
        %948 = vmatpush1.bf16.msra.mxu0 0
        %949 = vmatprep.subr.bf16.mxu0 0
        %950 = vmatpush1.bf16.msra.mxu0 0
        %951 = vmatprep.subr.bf16.mxu0 0
        %952 = vmatpush1.bf16.msra.mxu0 0
        %953 = vmatprep.subr.bf16.mxu0 0
        %954 = vmatpush1.bf16.msra.mxu0 0
        %955 = vmatprep.subr.bf16.mxu0 0
        %956 = vmatpush1.bf16.msra.mxu0 0
        %957 = vmatprep.subr.bf16.mxu0 0
        %958 = vmatpush1.bf16.msra.mxu0 %v941
        %959 = vmatprep.subr.bf16.mxu0 0
        %960 = vmatpush2.bf16.msra.mxu0 0
        %961 = vmatprep.subr.bf16.mxu0 0
        %962 = vmatpush2.bf16.msra.mxu0 0
        %963 = vmatprep.subr.bf16.mxu0 0
        %964 = vmatpush2.bf16.msra.mxu0 0
        %965 = vmatprep.subr.bf16.mxu0 0
        %966 = vmatpush2.bf16.msra.mxu0 0
        %967 = vmatprep.subr.bf16.mxu0 0
        %968 = vmatpush2.bf16.msra.mxu0 0
        %969 = vmatprep.subr.bf16.mxu0 0
        %970 = vmatpush2.bf16.msra.mxu0 0
        %971 = vmatprep.subr.bf16.mxu0 0
        %972 = vmatpush2.bf16.msra.mxu0 0
        %973 = vmatprep.subr.bf16.mxu0 0
        %974 = vmatpush2.bf16.msra.mxu0 0
        %975 = vmatprep.mubr.bf16.mxu0 0
        %976 = vmatmul.mubr.bf16.gmra.mxu0 %v938
        %v977 = vpop.f32.mrf.mxu0
        %v978 = vadd.f32 0.0, %v977
        %v979 = vpop.f32.mrf.mxu0
        %v980 = vpop.f32.mrf.mxu0
        %v981 = vpop.f32.mrf.mxu0
        %982 = vdwg.mxu0
        %v983 = vadd.f32 %v821, %v978
        %984 = vrot.lane.b32.xlu0 %v506, 104
        %v985 = vpop.permute.xlu0 %984
        %986 = vrot.lane.b32.xlu0 %v506, 72
        %v987 = vpop.permute.xlu0 %986
        %v989 = vsel %vm514, %v985, 0
        %v992 = vsel %vm514, %v987, 0
        %994 = vmatprep.subr.bf16.mxu0 0
        %995 = vmatpush1.bf16.xpose.msra.mxu0 0
        %996 = vmatprep.subr.bf16.mxu0 0
        %997 = vmatpush1.bf16.xpose.msra.mxu0 0
        %998 = vmatprep.subr.bf16.mxu0 0
        %999 = vmatpush1.bf16.xpose.msra.mxu0 0
        %1000 = vmatprep.subr.bf16.mxu0 0
        %1001 = vmatpush1.bf16.xpose.msra.mxu0 0
        %1002 = vmatprep.subr.bf16.mxu0 0
        %1003 = vmatpush1.bf16.xpose.msra.mxu0 0
        %1004 = vmatprep.subr.bf16.mxu0 0
        %1005 = vmatpush1.bf16.xpose.msra.mxu0 0
        %1006 = vmatprep.subr.bf16.mxu0 0
        %1007 = vmatpush1.bf16.xpose.msra.mxu0 0
        %1008 = vmatprep.subr.bf16.mxu0 0
        %1009 = vmatpush1.bf16.xpose.msra.mxu0 %v992
        %1010 = vmatprep.subr.bf16.mxu0 0
        %1011 = vmatpush2.bf16.xpose.msra.mxu0 0
        %1012 = vmatprep.subr.bf16.mxu0 0
        %1013 = vmatpush2.bf16.xpose.msra.mxu0 0
        %1014 = vmatprep.subr.bf16.mxu0 0
        %1015 = vmatpush2.bf16.xpose.msra.mxu0 0
        %1016 = vmatprep.subr.bf16.mxu0 0
        %1017 = vmatpush2.bf16.xpose.msra.mxu0 0
        %1018 = vmatprep.subr.bf16.mxu0 0
        %1019 = vmatpush2.bf16.xpose.msra.mxu0 0
        %1020 = vmatprep.subr.bf16.mxu0 0
        %1021 = vmatpush2.bf16.xpose.msra.mxu0 0
        %1022 = vmatprep.subr.bf16.mxu0 0
        %1023 = vmatpush2.bf16.xpose.msra.mxu0 0
        %1024 = vmatprep.subr.bf16.mxu0 0
        %1025 = vmatpush2.bf16.xpose.msra.mxu0 0
        %1026 = vmatprep.mubr.bf16.mxu0 0
        %1027 = vmatmul.mubr.bf16.gmra.mxu0 %v989
        %v1028 = vpop.f32.mrf.mxu0
        %v1029 = vadd.f32 0.0, %v1028
        %v1030 = vpop.f32.mrf.mxu0
        %v1031 = vpop.f32.mrf.mxu0
        %v1032 = vpop.f32.mrf.mxu0
        %1033 = vdwg.mxu0
        %v1034 = vsel %vm514, %v1029, -inf
        %1035 = vmax.xlane.f32.xlu0 %v1034
        %v1036 = vpop.xlane.xlu0 %1035
        %v1037 = vsub.f32 %v1029, %v1036
        %v1038 = vmul.f32 %v1037, 1.442695
        %v1039 = vpow.pop %v1038
        %v1040 = vsel %vm514, %v1039, 0.0
        %1041 = vadd.xlane.f32.xlu0 %v1040
        %v1042 = vpop.xlane.xlu0 %1041
        %v1043 = vrcp.pop %v1042
        %v1044 = vmul.f32 %v1039, %v1043
        %v1045 = vpack.c.bf16 %v1044, %v1044
        %1046 = vrot.lane.b32.xlu0 %v506, 40
        %v1047 = vpop.permute.xlu0 %1046
        %v1049 = vsel %vm514, %v1045, 0
        %v1052 = vsel %vm578, %v1047, 0
        %1054 = vmatprep.subr.bf16.mxu0 0
        %1055 = vmatpush1.bf16.msra.mxu0 0
        %1056 = vmatprep.subr.bf16.mxu0 0
        %1057 = vmatpush1.bf16.msra.mxu0 0
        %1058 = vmatprep.subr.bf16.mxu0 0
        %1059 = vmatpush1.bf16.msra.mxu0 0
        %1060 = vmatprep.subr.bf16.mxu0 0
        %1061 = vmatpush1.bf16.msra.mxu0 0
        %1062 = vmatprep.subr.bf16.mxu0 0
        %1063 = vmatpush1.bf16.msra.mxu0 0
        %1064 = vmatprep.subr.bf16.mxu0 0
        %1065 = vmatpush1.bf16.msra.mxu0 0
        %1066 = vmatprep.subr.bf16.mxu0 0
        %1067 = vmatpush1.bf16.msra.mxu0 0
        %1068 = vmatprep.subr.bf16.mxu0 0
        %1069 = vmatpush1.bf16.msra.mxu0 %v1052
        %1070 = vmatprep.subr.bf16.mxu0 0
        %1071 = vmatpush2.bf16.msra.mxu0 0
        %1072 = vmatprep.subr.bf16.mxu0 0
        %1073 = vmatpush2.bf16.msra.mxu0 0
        %1074 = vmatprep.subr.bf16.mxu0 0
        %1075 = vmatpush2.bf16.msra.mxu0 0
        %1076 = vmatprep.subr.bf16.mxu0 0
        %1077 = vmatpush2.bf16.msra.mxu0 0
        %1078 = vmatprep.subr.bf16.mxu0 0
        %1079 = vmatpush2.bf16.msra.mxu0 0
        %1080 = vmatprep.subr.bf16.mxu0 0
        %1081 = vmatpush2.bf16.msra.mxu0 0
        %1082 = vmatprep.subr.bf16.mxu0 0
        %1083 = vmatpush2.bf16.msra.mxu0 0
        %1084 = vmatprep.subr.bf16.mxu0 0
        %1085 = vmatpush2.bf16.msra.mxu0 0
        %1086 = vmatprep.mubr.bf16.mxu0 0
        %1087 = vmatmul.mubr.bf16.gmra.mxu0 %v1049
        %v1088 = vpop.f32.mrf.mxu0
        %v1089 = vadd.f32 0.0, %v1088
        %v1090 = vpop.f32.mrf.mxu0
        %v1091 = vpop.f32.mrf.mxu0
        %v1092 = vpop.f32.mrf.mxu0
        %1093 = vdwg.mxu0
        %v1094 = vpack.c.bf16 %v1089, %v1089
        %v1096 = vsel %vm514, %v1094, 0
        %v1099 = vsel %vm578, %v510, 0
        %1101 = vmatprep.subr.bf16.mxu0 0
        %1102 = vmatpush1.bf16.msra.mxu0 0
        %1103 = vmatprep.subr.bf16.mxu0 0
        %1104 = vmatpush1.bf16.msra.mxu0 0
        %1105 = vmatprep.subr.bf16.mxu0 0
        %1106 = vmatpush1.bf16.msra.mxu0 0
        %1107 = vmatprep.subr.bf16.mxu0 0
        %1108 = vmatpush1.bf16.msra.mxu0 0
        %1109 = vmatprep.subr.bf16.mxu0 0
        %1110 = vmatpush1.bf16.msra.mxu0 0
        %1111 = vmatprep.subr.bf16.mxu0 0
        %1112 = vmatpush1.bf16.msra.mxu0 0
        %1113 = vmatprep.subr.bf16.mxu0 0
        %1114 = vmatpush1.bf16.msra.mxu0 0
        %1115 = vmatprep.subr.bf16.mxu0 0
        %1116 = vmatpush1.bf16.msra.mxu0 %v1099
        %1117 = vmatprep.subr.bf16.mxu0 0
        %1118 = vmatpush2.bf16.msra.mxu0 0
        %1119 = vmatprep.subr.bf16.mxu0 0
        %1120 = vmatpush2.bf16.msra.mxu0 0
        %1121 = vmatprep.subr.bf16.mxu0 0
        %1122 = vmatpush2.bf16.msra.mxu0 0
        %1123 = vmatprep.subr.bf16.mxu0 0
        %1124 = vmatpush2.bf16.msra.mxu0 0
        %1125 = vmatprep.subr.bf16.mxu0 0
        %1126 = vmatpush2.bf16.msra.mxu0 0
        %1127 = vmatprep.subr.bf16.mxu0 0
        %1128 = vmatpush2.bf16.msra.mxu0 0
        %1129 = vmatprep.subr.bf16.mxu0 0
        %1130 = vmatpush2.bf16.msra.mxu0 0
        %1131 = vmatprep.subr.bf16.mxu0 0
        %1132 = vmatpush2.bf16.msra.mxu0 0
        %1133 = vmatprep.mubr.bf16.mxu0 0
        %1134 = vmatmul.mubr.bf16.gmra.mxu0 %v1096
        %v1135 = vpop.f32.mrf.mxu0
        %v1136 = vadd.f32 0.0, %v1135
        %v1137 = vpop.f32.mrf.mxu0
        %v1138 = vpop.f32.mrf.mxu0
        %v1139 = vpop.f32.mrf.mxu0
        %1140 = vdwg.mxu0
        %v1141 = vadd.f32 %v983, %v1136
        %v1142 = vld [vmem:[%s4] sm:$0x1]
        %v1144 = vlaneseq
        %v1145 = vshrl.u32 %v1144, 7
        %v1146 = vsub.s32 0, %v1145
        %v1147 = vrot.slane %v1142, %v1146
        %v1149 = vadd.f32 %v1141, %v1147
        %v1150 = vadd.f32 %v437, %v1149
        %v1151 = vsel %vm462, %v1150, 0.0
        %1152 = vadd.xlane.f32.xlu0 %v1151
        %v1153 = vpop.xlane.xlu0 %1152
        %v1154 = vrcp.pop 32.0
        %v1155 = vmul.f32 %v1153, %v1154
        %v1156 = vsub.f32 %v1150, %v1155
        %v1157 = vmul.f32 %v1156, %v1156
        %v1158 = vsel %vm462, %v1157, 0.0
        %1159 = vadd.xlane.f32.xlu0 %v1158
        %v1160 = vpop.xlane.xlu0 %1159
        %v1161 = vmul.f32 %v1160, %v1154
        %v1162 = vadd.f32 %v1161, 1e-05
        %v1163 = vrsqrt.pop %v1162
        %v1164 = vmul.f32 %v1156, %v1163
        %v1165 = vld [vmem:[%s5] sm:$0x1]
        %v1167 = vlaneseq
        %v1168 = vshrl.u32 %v1167, 7
        %v1169 = vsub.s32 0, %v1168
        %v1170 = vrot.slane %v1165, %v1169
        %v1172 = vmul.f32 %v1164, %v1170
        %v1173 = vld [vmem:[%s6] sm:$0x1]
        %v1175 = vlaneseq
        %v1176 = vshrl.u32 %v1175, 7
        %v1177 = vsub.s32 0, %v1176
        %v1178 = vrot.slane %v1173, %v1177
        %v1180 = vadd.f32 %v1172, %v1178
        %v1181 = vpack.c.bf16 %v1180, %v1180
        %v1182 = vld [vmem:[%s7] sm:$0xf]
        %v1183 = vld [vmem:[%s7 + $0x4] sm:$0xf]
        %v1184 = vld [vmem:[%s7 + $0x8] sm:$0xf]
        %v1185 = vld [vmem:[%s7 + $0xc] sm:$0xf]
        %v1186 = vld [vmem:[%s8] sm:$0x1]
        %v1188 = vlaneseq
        %v1189 = vshrl.u32 %v1188, 7
        %v1190 = vsub.s32 0, %v1189
        %v1191 = vrot.slane %v1186, %v1190
        %v1197 = vunpack.c.l.b16 %v1182
        %v1198 = vunpack.c.l.b16 %v1183
        %v1199 = vunpack.c.l.b16 %v1184
        %v1200 = vunpack.c.l.b16 %v1185
        %v1201 = vpack.c.b16 %v1198, %v1197
        %v1202 = vpack.c.b16 %v1200, %v1199
        %v1206 = vsel %vm462, %v1181, 0
        %1208 = vmatprep.subr.bf16.mxu0 0
        %1209 = vmatpush1.bf16.msra.mxu0 0
        %1210 = vmatprep.subr.bf16.mxu0 0
        %1211 = vmatpush1.bf16.msra.mxu0 0
        %1212 = vmatprep.subr.bf16.mxu0 0
        %1213 = vmatpush1.bf16.msra.mxu0 0
        %1214 = vmatprep.subr.bf16.mxu0 0
        %1215 = vmatpush1.bf16.msra.mxu0 0
        %1216 = vmatprep.subr.bf16.mxu0 0
        %1217 = vmatpush1.bf16.msra.mxu0 0
        %1218 = vmatprep.subr.bf16.mxu0 0
        %1219 = vmatpush1.bf16.msra.mxu0 0
        %1220 = vmatprep.subr.bf16.mxu0 0
        %1221 = vmatpush1.bf16.msra.mxu0 %v1202
        %1222 = vmatprep.subr.bf16.mxu0 0
        %1223 = vmatpush1.bf16.msra.mxu0 %v1201
        %1224 = vmatprep.subr.bf16.mxu0 0
        %1225 = vmatpush2.bf16.msra.mxu0 0
        %1226 = vmatprep.subr.bf16.mxu0 0
        %1227 = vmatpush2.bf16.msra.mxu0 0
        %1228 = vmatprep.subr.bf16.mxu0 0
        %1229 = vmatpush2.bf16.msra.mxu0 0
        %1230 = vmatprep.subr.bf16.mxu0 0
        %1231 = vmatpush2.bf16.msra.mxu0 0
        %1232 = vmatprep.subr.bf16.mxu0 0
        %1233 = vmatpush2.bf16.msra.mxu0 0
        %1234 = vmatprep.subr.bf16.mxu0 0
        %1235 = vmatpush2.bf16.msra.mxu0 0
        %1236 = vmatprep.subr.bf16.mxu0 0
        %1237 = vmatpush2.bf16.msra.mxu0 0
        %1238 = vmatprep.subr.bf16.mxu0 0
        %1239 = vmatpush2.bf16.msra.mxu0 0
        %1240 = vmatprep.mubr.bf16.mxu0 0
        %1241 = vmatmul.mubr.bf16.gmra.mxu0 %v1206
        %v1242 = vpop.f32.mrf.mxu0
        %v1243 = vadd.f32 %v1191, %v1242
        %v1244 = vpop.f32.mrf.mxu0
        %v1245 = vpop.f32.mrf.mxu0
        %v1246 = vpop.f32.mrf.mxu0
        %1247 = vdwg.mxu0
        %vm1248 = vcmp.ge.f32.partialorder %v1243, 0.0
        %v1249 = vmul.f32 %v1243, 0.01
        %v1250 = vsel %vm1248, %v1243, %v1249
        %v1251 = vpack.c.bf16 %v1250, %v1250
        %v1252 = vld [vmem:[%s9] sm:$0xf]
        %v1253 = vld [vmem:[%s9 + $0x4] sm:$0xf]
        %v1254 = vld [vmem:[%s9 + $0x8] sm:$0xf]
        %v1255 = vld [vmem:[%s9 + $0xc] sm:$0xf]
        %v1256 = vld [vmem:[%s9 + $0x10] sm:$0xf]
        %v1257 = vld [vmem:[%s9 + $0x14] sm:$0xf]
        %v1258 = vld [vmem:[%s9 + $0x18] sm:$0xf]
        %v1259 = vld [vmem:[%s9 + $0x1c] sm:$0xf]
        %v1260 = vld [vmem:[%s9 + $0x20] sm:$0xf]
        %v1261 = vld [vmem:[%s9 + $0x24] sm:$0xf]
        %v1262 = vld [vmem:[%s9 + $0x28] sm:$0xf]
        %v1263 = vld [vmem:[%s9 + $0x2c] sm:$0xf]
        %v1264 = vld [vmem:[%s9 + $0x30] sm:$0xf]
        %v1265 = vld [vmem:[%s9 + $0x34] sm:$0xf]
        %v1266 = vld [vmem:[%s9 + $0x38] sm:$0xf]
        %v1267 = vld [vmem:[%s9 + $0x3c] sm:$0xf]
        %v1268 = vld [vmem:[%s10] sm:$0x1]
        %v1270 = vlaneseq
        %v1271 = vshrl.u32 %v1270, 7
        %v1272 = vsub.s32 0, %v1271
        %v1273 = vrot.slane %v1268, %v1272
        %v1291 = vunpack.c.l.b16 %v1252
        %v1292 = vunpack.c.l.b16 %v1253
        %v1293 = vunpack.c.l.b16 %v1254
        %v1294 = vunpack.c.l.b16 %v1255
        %v1295 = vunpack.c.l.b16 %v1256
        %v1296 = vunpack.c.l.b16 %v1257
        %v1297 = vunpack.c.l.b16 %v1258
        %v1298 = vunpack.c.l.b16 %v1259
        %v1299 = vunpack.c.l.b16 %v1260
        %v1300 = vunpack.c.l.b16 %v1261
        %v1301 = vunpack.c.l.b16 %v1262
        %v1302 = vunpack.c.l.b16 %v1263
        %v1303 = vunpack.c.l.b16 %v1264
        %v1304 = vunpack.c.l.b16 %v1265
        %v1305 = vunpack.c.l.b16 %v1266
        %v1306 = vunpack.c.l.b16 %v1267
        %v1307 = vpack.c.b16 %v1292, %v1291
        %v1308 = vpack.c.b16 %v1294, %v1293
        %v1309 = vpack.c.b16 %v1296, %v1295
        %v1310 = vpack.c.b16 %v1298, %v1297
        %v1311 = vpack.c.b16 %v1300, %v1299
        %v1312 = vpack.c.b16 %v1302, %v1301
        %v1313 = vpack.c.b16 %v1304, %v1303
        %v1314 = vpack.c.b16 %v1306, %v1305
        %1323 = vmatprep.subr.bf16.mxu0 0
        %1324 = vmatpush1.bf16.msra.mxu0 %v1314
        %1325 = vmatprep.subr.bf16.mxu0 0
        %1326 = vmatpush1.bf16.msra.mxu0 %v1313
        %1327 = vmatprep.subr.bf16.mxu0 0
        %1328 = vmatpush1.bf16.msra.mxu0 %v1312
        %1329 = vmatprep.subr.bf16.mxu0 0
        %1330 = vmatpush1.bf16.msra.mxu0 %v1311
        %1331 = vmatprep.subr.bf16.mxu0 0
        %1332 = vmatpush1.bf16.msra.mxu0 %v1310
        %1333 = vmatprep.subr.bf16.mxu0 0
        %1334 = vmatpush1.bf16.msra.mxu0 %v1309
        %1335 = vmatprep.subr.bf16.mxu0 0
        %1336 = vmatpush1.bf16.msra.mxu0 %v1308
        %1337 = vmatprep.subr.bf16.mxu0 0
        %1338 = vmatpush1.bf16.msra.mxu0 %v1307
        %1339 = vmatprep.subr.bf16.mxu0 0
        %1340 = vmatpush2.bf16.msra.mxu0 0
        %1341 = vmatprep.subr.bf16.mxu0 0
        %1342 = vmatpush2.bf16.msra.mxu0 0
        %1343 = vmatprep.subr.bf16.mxu0 0
        %1344 = vmatpush2.bf16.msra.mxu0 0
        %1345 = vmatprep.subr.bf16.mxu0 0
        %1346 = vmatpush2.bf16.msra.mxu0 0
        %1347 = vmatprep.subr.bf16.mxu0 0
        %1348 = vmatpush2.bf16.msra.mxu0 0
        %1349 = vmatprep.subr.bf16.mxu0 0
        %1350 = vmatpush2.bf16.msra.mxu0 0
        %1351 = vmatprep.subr.bf16.mxu0 0
        %1352 = vmatpush2.bf16.msra.mxu0 0
        %1353 = vmatprep.subr.bf16.mxu0 0
        %1354 = vmatpush2.bf16.msra.mxu0 0
        %1355 = vmatprep.mubr.bf16.mxu0 0
        %1356 = vmatmul.mubr.bf16.gmra.mxu0 %v1251
        %v1357 = vpop.f32.mrf.mxu0
        %v1358 = vadd.f32 %v1273, %v1357
        %v1359 = vpop.f32.mrf.mxu0
        %v1360 = vpop.f32.mrf.mxu0
        %v1361 = vpop.f32.mrf.mxu0
        %1362 = vdwg.mxu0
        %v1363 = vadd.f32 %v1180, %v1358
        %v1364 = vsel %vm462, %v1363, 0.0
        %1365 = vadd.xlane.f32.xlu0 %v1364
        %v1366 = vpop.xlane.xlu0 %1365
        %v1367 = vmul.f32 %v1366, %v1154
        %v1368 = vsub.f32 %v1363, %v1367
        %v1369 = vmul.f32 %v1368, %v1368
        %v1370 = vsel %vm462, %v1369, 0.0
        %1371 = vadd.xlane.f32.xlu0 %v1370
        %v1372 = vpop.xlane.xlu0 %1371
        %v1373 = vmul.f32 %v1372, %v1154
        %v1374 = vadd.f32 %v1373, 1e-05
        %v1375 = vrsqrt.pop %v1374
        %v1376 = vmul.f32 %v1368, %v1375
        %v1377 = vld [vmem:[%s11] sm:$0x1]
        %v1379 = vlaneseq
        %v1380 = vshrl.u32 %v1379, 7
        %v1381 = vsub.s32 0, %v1380
        %v1382 = vrot.slane %v1377, %v1381
        %v1384 = vmul.f32 %v1376, %v1382
        %v1385 = vld [vmem:[%s12] sm:$0x1]
        %v1387 = vlaneseq
        %v1388 = vshrl.u32 %v1387, 7
        %v1389 = vsub.s32 0, %v1388
        %v1390 = vrot.slane %v1385, %v1389
        %v1392 = vadd.f32 %v1384, %v1390
        %1393 = vst.msk [vmem:[%s431] sm:$0xff] %vm462, %v1392
        %s1394 = sand.u32 %s313, 1
        %s1395 = scalar_lea.sflag [#allocation3], %s1394
        %s1396 = sand.u32 %s313, 1
        %s1397 = smul.addr %s1396, 8
        %s1398 = scalar_lea.vmem [#allocation2], %s1397
        // Predicated region
        $region73: #{tpu_custom_call.1} parent=71 // pred_check
          %p1399 = pneg %p323
        $region74: #{tpu_custom_call.1} parent=71 // pred_check_branch
          %1401 = sbr.rel (%p1399) target = $region76
        $region75: #{tpu_custom_call.1} parent=71 // pred_region
          %s1403 = ssub.s32 128, 128
          %1404 = vsyncadd %s1395, %s1403
          %s1405 = smul.addr %s27, 128
          %s1406 = scalar_lea.hbm %s13, %s1405
          %s1408 = sshll.u32 %s1398, 4
          %s1409 = int_to_ptr.vmem [resolvable:$true] %s1408
          %1411 = dma.vmem_to_hbm [thread:$0]  %s1409, 128, %s1406, %s1395
        $region76: #{tpu_custom_call.1} parent=71 // pred_fallthru
          _
      $region72: #{tpu_custom_call.1} parent=5 // pred_fallthru
        _
      %p1412 = scmp.le.s32.totalorder 2, %s22
      // Predicated region
      $region77: #{tpu_custom_call.1} parent=5 // pred_check
        %p1413 = pneg %p1412
      $region78: #{tpu_custom_call.1} parent=5 // pred_check_branch
        %1415 = sbr.rel (%p1413) target = $region80
      $region79: #{tpu_custom_call.1} parent=5 // pred_region
        %s1416 = ssub.s32 %s22, 2
        // Predicated region
        $region81: #{tpu_custom_call.1} parent=79 // pred_check
          %p1417 = pneg %p329
        $region82: #{tpu_custom_call.1} parent=79 // pred_check_branch
          %1419 = sbr.rel (%p1417) target = $region84
        $region83: #{tpu_custom_call.1} parent=79 // pred_region
          %s1420 = sand.u32 %s314, 1
          %s1421 = scalar_lea.sflag [#allocation3], %s1420
          %s1422 = sand.u32 %s314, 1
          %s1423 = smul.addr %s1422, 8
          %s1424 = scalar_lea.vmem [#allocation2], %s1423
          %1425 = dma.done %s1421, 128
        $region84: #{tpu_custom_call.1} parent=79 // pred_fallthru
          _
      $region80: #{tpu_custom_call.1} parent=5 // pred_fallthru
        _
    $region6: #{tpu_custom_call.1} parent=1 // loop_footer
      %s26 = sadd.s32 1, %s22
    $region7: #{tpu_custom_call.1} parent=1 // loop_footer_branch
      %21 = sbr.rel target = $region3
    $region8: #{tpu_custom_call.1} parent=1 // loop_exit
      _
    %1426 = vsyncpa [#allocation3], 1
    %s1427 = scalar_lea.sflag [#allocation3], 1
    %1428 = vsyncpa %s1427, 1

</llo_original>
